<compile_context>
chip_gen: v5e
topology: v5e:2x2
jax: 0.10.0
libtpu: 0.0.40
codegen_flags: <defaults>
</compile_context>

<pallas_src>
import jax
import jax.numpy as jnp
import numpy as np
from jax.experimental import pallas as pl
from jax.experimental.pallas import tpu as pltpu

# ---------------- small synthetic config (stands in for cfg.TRAIN.*) -----------
B          = 2       # batch
N_IN       = 64      # input points per partial cloud
LEN_GLOBAL = 128     # cfg.TRAIN.LEN_GLOBAL
NUM_COARSE = 16      # cfg.TRAIN.NUM_COARSE
GRID_SIZE  = 2       # cfg.TRAIN.GRID_SIZE
GRID_SCALE = 0.05    # cfg.TRAIN.GRID_SCALE
N_FINE     = NUM_COARSE * GRID_SIZE * GRID_SIZE
FOLD_H     = 256     # hidden width of the folding MLP
LANES      = 128     # lane-dense padded output width

# TODO(synk): training-side members of PCN (Adam optimizer, StepLR scheduler,
# ChamferDistance loss, backward/optimize_parameters) have no forward-pass
# Pallas equivalent and are intentionally not implemented.

KP_ORDER = ("w1", "b1", "w2", "b2", "w3a", "w3b", "b3", "w4", "b4",
            "wf1", "bf1", "wf2", "bf2", "wf3p", "bf3p",
            "mask", "wp_tiled", "wgl", "grid_bias", "wc2", "bc2",
            "wc3p", "bc3p", "sel_pad")


# ============================ fused forward kernel =============================
def pcn_fused_kernel(
    x_ref,
    w1_ref, b1_ref, w2_ref, b2_ref, w3a_ref, w3b_ref, b3_ref, w4_ref, b4_ref,
    wf1_ref, bf1_ref, wf2_ref, bf2_ref, wf3_ref, bf3_ref,
    mask_ref, wpt_ref, wgl_ref, gbias_ref, wc2_ref, bc2_ref, wc3_ref, bc3_ref,
    sel_ref,
    coarse_ref, fine_ref,
):
    f32 = jnp.float32
    x = x_ref[0]                                                   # (N_IN, 3) f32

    # ---------------- encoder -------------------------------------------------
    # first Conv1d(3->128): K=3 contraction done on the VPU as broadcast mults
    w1 = w1_ref[...]                                               # (3, 128) f32
    f = (x[:, 0:1] * w1[0:1, :] + x[:, 1:2] * w1[1:2, :]
         + x[:, 2:3] * w1[2:3, :] + b1_ref[...])
    f = jnp.maximum(f, 0.0)                                        # (N_IN, 128)
    f = jnp.dot(f, w2_ref[...].astype(f32),
                preferred_element_type=f32) + b2_ref[...]          # (N_IN, 256)
    g1 = jnp.max(f, axis=0, keepdims=True)                         # (1, 256)
    # concat([f, broadcast(g1)]) @ W3  ==  f @ W3a + g1 @ W3b  (broadcast add)
    h = jnp.maximum(
        jnp.dot(f, w3a_ref[...].astype(f32), preferred_element_type=f32)
        + jnp.dot(g1, w3b_ref[...].astype(f32), preferred_element_type=f32)
        + b3_ref[...], 0.0)                                        # (N_IN, 512)
    h = jnp.dot(h, w4_ref[...].astype(f32),
                preferred_element_type=f32) + b4_ref[...]          # (N_IN, LG)
    g = jnp.max(h, axis=0, keepdims=True)                          # (1, LG)

    # ---------------- coarse decoder ------------------------------------------
    d1 = jnp.maximum(jnp.dot(g, wf1_ref[...].astype(f32),
                             preferred_element_type=f32) + bf1_ref[...], 0.0)
    d2 = jnp.maximum(jnp.dot(d1, wf2_ref[...].astype(f32),
                             preferred_element_type=f32) + bf2_ref[...], 0.0)
    # lane-dense coarse row: lanes [0, 48) hold NUM_COARSE*3 coords, rest zero
    v = jnp.dot(d2, wf3_ref[...].astype(f32),
                preferred_element_type=f32) + bf3_ref[...]         # (1, 128)
    coarse_ref[0] = v

    # ---------------- fine (folding) decoder ----------------------------------
    # in-kernel GRID_SIZE^2 repeat of coarse: broadcast the coarse row over the
    # fine points and mask each row down to its own center's 3 coords ("mb").
    mb = jnp.broadcast_to(v, (N_FINE, LANES)) * mask_ref[...]      # (N_FINE, 128)
    # first folding layer: center term + global term + precomputed grid bias
    h1 = (jnp.dot(mb, wpt_ref[...].astype(f32), preferred_element_type=f32)
          + jnp.dot(g, wgl_ref[...].astype(f32), preferred_element_type=f32)
          + gbias_ref[...])                                        # (N_FINE, H)
    h1 = jnp.maximum(h1, 0.0)
    h2 = jnp.maximum(jnp.dot(h1, wc2_ref[...].astype(f32),
                             preferred_element_type=f32) + bc2_ref[...], 0.0)
    # lane-dense fine output: lanes [0, 3) = offsets + centers, rest zero
    fine_ref[0] = (jnp.dot(h2, wc3_ref[...].astype(f32), preferred_element_type=f32)
                   + bc3_ref[...]
                   + jnp.dot(mb, sel_ref[...], preferred_element_type=f32))


@jax.jit
def pcn_forward_pallas(x, kp):
    weights = [kp[name] for name in KP_ORDER]
    in_specs = [pl.BlockSpec((1, N_IN, 3), lambda b: (b, 0, 0))]
    in_specs += [pl.BlockSpec(w.shape, lambda b: (0, 0)) for w in weights]
    coarse_pad, fine_pad = pl.pallas_call(
        pcn_fused_kernel,
        out_shape=(jax.ShapeDtypeStruct((B, 1, LANES), jnp.float32),
                   jax.ShapeDtypeStruct((B, N_FINE, LANES), jnp.float32)),
        grid=(B,),
        in_specs=in_specs,
        out_specs=(pl.BlockSpec((1, 1, LANES), lambda b: (b, 0, 0)),
                   pl.BlockSpec((1, N_FINE, LANES), lambda b: (b, 0, 0))),
        compiler_params=pltpu.CompilerParams(dimension_semantics=("parallel",)),
    )(x, *weights)
    coarse = coarse_pad[:, 0, :NUM_COARSE * 3].reshape(B, NUM_COARSE, 3)
    fine = fine_pad[:, :, :3]
    return coarse, fine


# ============================ parameter construction ===========================
def make_grid_feat():
    lin = jnp.linspace(-GRID_SCALE, GRID_SCALE, GRID_SIZE)
    gu, gv = jnp.meshgrid(lin, lin)
    grid_pts = jnp.stack([gu.ravel(), gv.ravel()], axis=-1)          # (GS*GS, 2)
    return jnp.tile(grid_pts, (NUM_COARSE, 1)).astype(jnp.float32)   # (N_FINE, 2)


def init_params(key):
    """Natural-form PCN weights (used by the pure-JAX reference)."""
    def kaiming(k, shape, fan_in):
        return (jnp.sqrt(2.0 / fan_in) * jax.random.normal(k, shape)).astype(jnp.float32)

    ks = iter(jax.random.split(key, 16))
    zeros = lambda c: jnp.zeros((1, c), jnp.float32)
    p = {}
    p["w1"]  = kaiming(next(ks), (3, 128), 3);                          p["b1"]  = zeros(128)
    p["w2"]  = kaiming(next(ks), (128, 256), 128);                      p["b2"]  = zeros(256)
    p["w3"]  = kaiming(next(ks), (512, 512), 512);                      p["b3"]  = zeros(512)
    p["w4"]  = kaiming(next(ks), (512, LEN_GLOBAL), 512);               p["b4"]  = zeros(LEN_GLOBAL)
    p["wf1"] = kaiming(next(ks), (LEN_GLOBAL, LEN_GLOBAL), LEN_GLOBAL); p["bf1"] = zeros(LEN_GLOBAL)
    p["wf2"] = kaiming(next(ks), (LEN_GLOBAL, LEN_GLOBAL), LEN_GLOBAL); p["bf2"] = zeros(LEN_GLOBAL)
    p["wf3"] = kaiming(next(ks), (LEN_GLOBAL, NUM_COARSE * 3), LEN_GLOBAL)
    p["bf3"] = zeros(NUM_COARSE * 3)
    fold_in = 2 + 3 + LEN_GLOBAL
    p["wg"]  = kaiming(next(ks), (2, FOLD_H), fold_in)
    p["wp"]  = kaiming(next(ks), (3, FOLD_H), fold_in)
    p["wgl"] = kaiming(next(ks), (LEN_GLOBAL, FOLD_H), fold_in);        p["bc1"] = zeros(FOLD_H)
    p["wc2"] = kaiming(next(ks), (FOLD_H, FOLD_H), FOLD_H);             p["bc2"] = zeros(FOLD_H)
    p["wc3"] = kaiming(next(ks), (FOLD_H, 3), FOLD_H);                  p["bc3"] = zeros(3)
    # Round the large matmul weights to bf16 once.  The kernel ships them as
    # bf16 (half the DMA) and upcasts in-kernel; the f32 reference uses the
    # same rounded values, so the comparison stays within f32 precision.
    for k in ("w2", "w3", "w4", "wf1", "wf2", "wf3", "wp", "wgl", "wc2", "wc3"):
        p[k] = p[k].astype(jnp.bfloat16).astype(jnp.float32)
    return p


def build_kernel_params(p):
    """Derive the padded / tiled / bf16 operands consumed by the fused kernel."""
    bf = lambda a: a.astype(jnp.bfloat16)
    nc3 = NUM_COARSE * 3
    kp = {}
    # encoder
    kp["w1"], kp["b1"] = p["w1"], p["b1"]
    kp["w2"], kp["b2"] = bf(p["w2"]), p["b2"]
    kp["w3a"], kp["w3b"] = bf(p["w3"][:256]), bf(p["w3"][256:])
    kp["b3"] = p["b3"]
    kp["w4"], kp["b4"] = bf(p["w4"]), p["b4"]
    # coarse MLP (last layer zero-padded to 128 output lanes)
    kp["wf1"], kp["bf1"] = bf(p["wf1"]), p["bf1"]
    kp["wf2"], kp["bf2"] = bf(p["wf2"]), p["bf2"]
    kp["wf3p"] = bf(jnp.pad(p["wf3"], ((0, 0), (0, LANES - nc3))))
    kp["bf3p"] = jnp.pad(p["bf3"], ((0, 0), (0, LANES - nc3)))
    # folding MLP, restructured:
    #   grid term   -> precomputed constant bias (input independent)
    #   center term -> (broadcast(coarse_row) * MASK) @ WP_TILED
    grid_feat = make_grid_feat()                                     # (N_FINE, 2)
    kp["grid_bias"] = grid_feat @ p["wg"] + p["bc1"]                 # (N_FINE, H) f32
    kp["wp_tiled"] = bf(jnp.pad(jnp.tile(p["wp"], (NUM_COARSE, 1)),
                                ((0, LANES - nc3), (0, 0))))         # (128, H)
    kp["wgl"] = bf(p["wgl"])
    kp["wc2"], kp["bc2"] = bf(p["wc2"]), p["bc2"]
    kp["wc3p"] = bf(jnp.pad(p["wc3"], ((0, 0), (0, LANES - 3))))     # (H, 128)
    kp["bc3p"] = jnp.pad(p["bc3"], ((0, 0), (0, LANES - 3)))         # (1, 128)
    # static selection masks implementing the coarse -> fine repeat in-kernel
    mask = np.zeros((N_FINE, LANES), np.float32)
    sel = np.zeros((LANES, LANES), np.float32)
    for f in range(N_FINE):
        c = f // (GRID_SIZE * GRID_SIZE)
        mask[f, 3 * c:3 * c + 3] = 1.0
    for c in range(NUM_COARSE):
        for d in range(3):
            sel[3 * c + d, d] = 1.0
    kp["mask"] = jnp.asarray(mask)
    kp["sel_pad"] = jnp.asarray(sel)
    return kp


# ============================ pure-JAX reference (natural PCN form) ============
def pcn_forward_ref(x, p):
    f = jax.nn.relu(jnp.einsum("bnd,dc->bnc", x, p["w1"]) + p["b1"])
    f = jnp.einsum("bnc,cd->bnd", f, p["w2"]) + p["b2"]
    g1 = jnp.max(f, axis=1, keepdims=True)
    feat = jnp.concatenate([f, jnp.broadcast_to(g1, f.shape)], axis=-1)
    h = jax.nn.relu(jnp.einsum("bnc,cd->bnd", feat, p["w3"]) + p["b3"])
    h = jnp.einsum("bnc,cd->bnd", h, p["w4"]) + p["b4"]
    g = jnp.max(h, axis=1)                                           # (B, LG)

    d = jax.nn.relu(g @ p["wf1"] + p["bf1"])
    d = jax.nn.relu(d @ p["wf2"] + p["bf2"])
    coarse = (d @ p["wf3"] + p["bf3"]).reshape(B, NUM_COARSE, 3)

    grid_feat = make_grid_feat()
    pf = jnp.repeat(coarse, GRID_SIZE * GRID_SIZE, axis=1)           # (B, N_FINE, 3)
    h = jax.nn.relu(grid_feat @ p["wg"]
                    + jnp.einsum("bnd,dc->bnc", pf, p["wp"])
                    + g[:, None, :] @ p["wgl"] + p["bc1"])
    h = jax.nn.relu(jnp.einsum("bnc,cd->bnd", h, p["wc2"]) + p["bc2"])
    fine = jnp.einsum("bnc,cd->bnd", h, p["wc3"]) + p["bc3"] + pf
    return coarse, fine


# ============================ main =============================================
if __name__ == "__main__":
    key = jax.random.PRNGKey(0)
    k_x, k_p = jax.random.split(key)
    x = jax.random.normal(k_x, (B, N_IN, 3), dtype=jnp.float32)   # input partial cloud
    params = init_params(k_p)
    kparams = build_kernel_params(params)

    coarse, fine = pcn_forward_pallas(x, kparams)
    coarse = jax.block_until_ready(coarse)
    fine = jax.block_until_ready(fine)

    coarse_ref, fine_ref = pcn_forward_ref(x, params)
    np.testing.assert_allclose(np.asarray(coarse), np.asarray(coarse_ref),
                               rtol=1e-4, atol=1e-4)
    np.testing.assert_allclose(np.asarray(fine), np.asarray(fine_ref),
                               rtol=1e-4, atol=1e-4)
    assert coarse.shape == (B, NUM_COARSE, 3) and fine.shape == (B, N_FINE, 3)

    print("KERNEL_OK")
</pallas_src>

<mosaic_0001>
module attributes {stable_mosaic.version = 11 : i64} {
  func.func @pcn_fused_kernel(%arg0: i32, %arg1: memref<1x64x3xf32, #tpu.memory_space<vmem>>, %arg2: memref<3x128xf32, #tpu.memory_space<vmem>>, %arg3: memref<1x128xf32, #tpu.memory_space<vmem>>, %arg4: memref<128x256xbf16, #tpu.memory_space<vmem>>, %arg5: memref<1x256xf32, #tpu.memory_space<vmem>>, %arg6: memref<256x512xbf16, #tpu.memory_space<vmem>>, %arg7: memref<256x512xbf16, #tpu.memory_space<vmem>>, %arg8: memref<1x512xf32, #tpu.memory_space<vmem>>, %arg9: memref<512x128xbf16, #tpu.memory_space<vmem>>, %arg10: memref<1x128xf32, #tpu.memory_space<vmem>>, %arg11: memref<128x128xbf16, #tpu.memory_space<vmem>>, %arg12: memref<1x128xf32, #tpu.memory_space<vmem>>, %arg13: memref<128x128xbf16, #tpu.memory_space<vmem>>, %arg14: memref<1x128xf32, #tpu.memory_space<vmem>>, %arg15: memref<128x128xbf16, #tpu.memory_space<vmem>>, %arg16: memref<1x128xf32, #tpu.memory_space<vmem>>, %arg17: memref<64x128xf32, #tpu.memory_space<vmem>>, %arg18: memref<128x256xbf16, #tpu.memory_space<vmem>>, %arg19: memref<128x256xbf16, #tpu.memory_space<vmem>>, %arg20: memref<64x256xf32, #tpu.memory_space<vmem>>, %arg21: memref<256x256xbf16, #tpu.memory_space<vmem>>, %arg22: memref<1x256xf32, #tpu.memory_space<vmem>>, %arg23: memref<256x128xbf16, #tpu.memory_space<vmem>>, %arg24: memref<1x128xf32, #tpu.memory_space<vmem>>, %arg25: memref<128x128xf32, #tpu.memory_space<vmem>>, %arg26: memref<1x1x128xf32, #tpu.memory_space<vmem>>, %arg27: memref<1x64x128xf32, #tpu.memory_space<vmem>>) attributes {dimension_semantics = [#tpu.dimension_semantics<parallel>], iteration_bounds = array<i64: 2>, scalar_prefetch = 0 : i64, scratch_operands = 0 : i64, tpu.core_type = #tpu.core_type<tc>, window_params = [{transform_indices = @transform_0, window_bounds = array<i64: 1, 64, 3>}, {pipeline_mode = #tpu.pipeline_mode<synchronous>, transform_indices = @transform_1, window_bounds = array<i64: 3, 128>}, {pipeline_mode = #tpu.pipeline_mode<synchronous>, transform_indices = @transform_2, window_bounds = array<i64: 1, 128>}, {pipeline_mode = #tpu.pipeline_mode<synchronous>, transform_indices = @transform_3, window_bounds = array<i64: 128, 256>}, {pipeline_mode = #tpu.pipeline_mode<synchronous>, transform_indices = @transform_4, window_bounds = array<i64: 1, 256>}, {pipeline_mode = #tpu.pipeline_mode<synchronous>, transform_indices = @transform_5, window_bounds = array<i64: 256, 512>}, {pipeline_mode = #tpu.pipeline_mode<synchronous>, transform_indices = @transform_6, window_bounds = array<i64: 256, 512>}, {pipeline_mode = #tpu.pipeline_mode<synchronous>, transform_indices = @transform_7, window_bounds = array<i64: 1, 512>}, {pipeline_mode = #tpu.pipeline_mode<synchronous>, transform_indices = @transform_8, window_bounds = array<i64: 512, 128>}, {pipeline_mode = #tpu.pipeline_mode<synchronous>, transform_indices = @transform_9, window_bounds = array<i64: 1, 128>}, {pipeline_mode = #tpu.pipeline_mode<synchronous>, transform_indices = @transform_10, window_bounds = array<i64: 128, 128>}, {pipeline_mode = #tpu.pipeline_mode<synchronous>, transform_indices = @transform_11, window_bounds = array<i64: 1, 128>}, {pipeline_mode = #tpu.pipeline_mode<synchronous>, transform_indices = @transform_12, window_bounds = array<i64: 128, 128>}, {pipeline_mode = #tpu.pipeline_mode<synchronous>, transform_indices = @transform_13, window_bounds = array<i64: 1, 128>}, {pipeline_mode = #tpu.pipeline_mode<synchronous>, transform_indices = @transform_14, window_bounds = array<i64: 128, 128>}, {pipeline_mode = #tpu.pipeline_mode<synchronous>, transform_indices = @transform_15, window_bounds = array<i64: 1, 128>}, {pipeline_mode = #tpu.pipeline_mode<synchronous>, transform_indices = @transform_16, window_bounds = array<i64: 64, 128>}, {pipeline_mode = #tpu.pipeline_mode<synchronous>, transform_indices = @transform_17, window_bounds = array<i64: 128, 256>}, {pipeline_mode = #tpu.pipeline_mode<synchronous>, transform_indices = @transform_18, window_bounds = array<i64: 128, 256>}, {pipeline_mode = #tpu.pipeline_mode<synchronous>, transform_indices = @transform_19, window_bounds = array<i64: 64, 256>}, {pipeline_mode = #tpu.pipeline_mode<synchronous>, transform_indices = @transform_20, window_bounds = array<i64: 256, 256>}, {pipeline_mode = #tpu.pipeline_mode<synchronous>, transform_indices = @transform_21, window_bounds = array<i64: 1, 256>}, {pipeline_mode = #tpu.pipeline_mode<synchronous>, transform_indices = @transform_22, window_bounds = array<i64: 256, 128>}, {pipeline_mode = #tpu.pipeline_mode<synchronous>, transform_indices = @transform_23, window_bounds = array<i64: 1, 128>}, {pipeline_mode = #tpu.pipeline_mode<synchronous>, transform_indices = @transform_24, window_bounds = array<i64: 128, 128>}, {transform_indices = @transform_25, window_bounds = array<i64: 1, 1, 128>}, {transform_indices = @transform_26, window_bounds = array<i64: 1, 64, 128>}]} {
    %c0 = arith.constant 0 : index
    %c0_0 = arith.constant 0 : index
    %c0_1 = arith.constant 0 : index
    %0 = vector.load %arg1[%c0, %c0_0, %c0_1] : memref<1x64x3xf32, #tpu.memory_space<vmem>>, vector<1x64x3xf32>
    %1 = vector.shape_cast %0 : vector<1x64x3xf32> to vector<64x3xf32>
    %c0_2 = arith.constant 0 : index
    %c0_3 = arith.constant 0 : index
    %2 = vector.load %arg2[%c0_2, %c0_3] : memref<3x128xf32, #tpu.memory_space<vmem>>, vector<3x128xf32>
    %3 = vector.extract_strided_slice %1 {offsets = [0, 0], sizes = [64, 1], strides = [1, 1]} : vector<64x3xf32> to vector<64x1xf32>
    %4 = vector.extract_strided_slice %2 {offsets = [0, 0], sizes = [1, 128], strides = [1, 1]} : vector<3x128xf32> to vector<1x128xf32>
    %5 = vector.broadcast %3 : vector<64x1xf32> to vector<64x128xf32>
    %6 = vector.broadcast %4 : vector<1x128xf32> to vector<64x128xf32>
    %7 = arith.mulf %5, %6 : vector<64x128xf32>
    %8 = vector.extract_strided_slice %1 {offsets = [0, 1], sizes = [64, 1], strides = [1, 1]} : vector<64x3xf32> to vector<64x1xf32>
    %9 = vector.extract_strided_slice %2 {offsets = [1, 0], sizes = [1, 128], strides = [1, 1]} : vector<3x128xf32> to vector<1x128xf32>
    %10 = vector.broadcast %8 : vector<64x1xf32> to vector<64x128xf32>
    %11 = vector.broadcast %9 : vector<1x128xf32> to vector<64x128xf32>
    %12 = arith.mulf %10, %11 : vector<64x128xf32>
    %13 = arith.addf %7, %12 : vector<64x128xf32>
    %14 = vector.extract_strided_slice %1 {offsets = [0, 2], sizes = [64, 1], strides = [1, 1]} : vector<64x3xf32> to vector<64x1xf32>
    %15 = vector.extract_strided_slice %2 {offsets = [2, 0], sizes = [1, 128], strides = [1, 1]} : vector<3x128xf32> to vector<1x128xf32>
    %16 = vector.broadcast %14 : vector<64x1xf32> to vector<64x128xf32>
    %17 = vector.broadcast %15 : vector<1x128xf32> to vector<64x128xf32>
    %18 = arith.mulf %16, %17 : vector<64x128xf32>
    %19 = arith.addf %13, %18 : vector<64x128xf32>
    %c0_4 = arith.constant 0 : index
    %c0_5 = arith.constant 0 : index
    %20 = vector.load %arg3[%c0_4, %c0_5] : memref<1x128xf32, #tpu.memory_space<vmem>>, vector<1x128xf32>
    %21 = vector.broadcast %20 : vector<1x128xf32> to vector<64x128xf32>
    %22 = arith.addf %19, %21 : vector<64x128xf32>
    %cst = arith.constant 0.000000e+00 : f32
    %23 = vector.broadcast %cst : f32 to vector<64x128xf32>
    %24 = arith.maximumf %22, %23 : vector<64x128xf32>
    %c0_6 = arith.constant 0 : index
    %c0_7 = arith.constant 0 : index
    %25 = vector.load %arg4[%c0_6, %c0_7] : memref<128x256xbf16, #tpu.memory_space<vmem>>, vector<128x256xbf16>
    %26 = arith.extf %25 : vector<128x256xbf16> to vector<128x256xf32>
    %cst_8 = arith.constant dense<0.000000e+00> : vector<64x256xf32>
    %27 = tpu.matmul %24, %26, %cst_8 {dimension_numbers = #tpu.dot_dimension_numbers<[1], [0], [0], [1], [0, 0, 1, 1], [], []>} : vector<64x128xf32>, vector<128x256xf32>, vector<64x256xf32> -> vector<64x256xf32>
    %c0_9 = arith.constant 0 : index
    %c0_10 = arith.constant 0 : index
    %28 = vector.load %arg5[%c0_9, %c0_10] : memref<1x256xf32, #tpu.memory_space<vmem>>, vector<1x256xf32>
    %29 = vector.broadcast %28 : vector<1x256xf32> to vector<64x256xf32>
    %30 = arith.addf %27, %29 : vector<64x256xf32>
    %cst_11 = arith.constant dense<0xFF800000> : vector<256xf32>
    %31 = vector.multi_reduction <maximumf>, %30, %cst_11 [0] : vector<64x256xf32> to vector<256xf32>
    %32 = vector.shape_cast %31 : vector<256xf32> to vector<1x256xf32>
    %c0_12 = arith.constant 0 : index
    %c0_13 = arith.constant 0 : index
    %33 = vector.load %arg6[%c0_12, %c0_13] : memref<256x512xbf16, #tpu.memory_space<vmem>>, vector<256x512xbf16>
    %34 = arith.extf %33 : vector<256x512xbf16> to vector<256x512xf32>
    %cst_14 = arith.constant dense<0.000000e+00> : vector<64x512xf32>
    %35 = tpu.matmul %30, %34, %cst_14 {dimension_numbers = #tpu.dot_dimension_numbers<[1], [0], [0], [1], [0, 0, 1, 1], [], []>} : vector<64x256xf32>, vector<256x512xf32>, vector<64x512xf32> -> vector<64x512xf32>
    %c0_15 = arith.constant 0 : index
    %c0_16 = arith.constant 0 : index
    %36 = vector.load %arg7[%c0_15, %c0_16] : memref<256x512xbf16, #tpu.memory_space<vmem>>, vector<256x512xbf16>
    %37 = arith.extf %36 : vector<256x512xbf16> to vector<256x512xf32>
    %cst_17 = arith.constant dense<0.000000e+00> : vector<1x512xf32>
    %38 = tpu.matmul %32, %37, %cst_17 {dimension_numbers = #tpu.dot_dimension_numbers<[1], [0], [0], [1], [0, 0, 1, 1], [], []>} : vector<1x256xf32>, vector<256x512xf32>, vector<1x512xf32> -> vector<1x512xf32>
    %39 = vector.broadcast %38 : vector<1x512xf32> to vector<64x512xf32>
    %40 = arith.addf %35, %39 : vector<64x512xf32>
    %c0_18 = arith.constant 0 : index
    %c0_19 = arith.constant 0 : index
    %41 = vector.load %arg8[%c0_18, %c0_19] : memref<1x512xf32, #tpu.memory_space<vmem>>, vector<1x512xf32>
    %42 = vector.broadcast %41 : vector<1x512xf32> to vector<64x512xf32>
    %43 = arith.addf %40, %42 : vector<64x512xf32>
    %cst_20 = arith.constant 0.000000e+00 : f32
    %44 = vector.broadcast %cst_20 : f32 to vector<64x512xf32>
    %45 = arith.maximumf %43, %44 : vector<64x512xf32>
    %c0_21 = arith.constant 0 : index
    %c0_22 = arith.constant 0 : index
    %46 = vector.load %arg9[%c0_21, %c0_22] : memref<512x128xbf16, #tpu.memory_space<vmem>>, vector<512x128xbf16>
    %47 = arith.extf %46 : vector<512x128xbf16> to vector<512x128xf32>
    %cst_23 = arith.constant dense<0.000000e+00> : vector<64x128xf32>
    %48 = tpu.matmul %45, %47, %cst_23 {dimension_numbers = #tpu.dot_dimension_numbers<[1], [0], [0], [1], [0, 0, 1, 1], [], []>} : vector<64x512xf32>, vector<512x128xf32>, vector<64x128xf32> -> vector<64x128xf32>
    %c0_24 = arith.constant 0 : index
    %c0_25 = arith.constant 0 : index
    %49 = vector.load %arg10[%c0_24, %c0_25] : memref<1x128xf32, #tpu.memory_space<vmem>>, vector<1x128xf32>
    %50 = vector.broadcast %49 : vector<1x128xf32> to vector<64x128xf32>
    %51 = arith.addf %48, %50 : vector<64x128xf32>
    %cst_26 = arith.constant dense<0xFF800000> : vector<128xf32>
    %52 = vector.multi_reduction <maximumf>, %51, %cst_26 [0] : vector<64x128xf32> to vector<128xf32>
    %53 = vector.shape_cast %52 : vector<128xf32> to vector<1x128xf32>
    %c0_27 = arith.constant 0 : index
    %c0_28 = arith.constant 0 : index
    %54 = vector.load %arg11[%c0_27, %c0_28] : memref<128x128xbf16, #tpu.memory_space<vmem>>, vector<128x128xbf16>
    %55 = arith.extf %54 : vector<128x128xbf16> to vector<128x128xf32>
    %cst_29 = arith.constant dense<0.000000e+00> : vector<1x128xf32>
    %56 = tpu.matmul %53, %55, %cst_29 {dimension_numbers = #tpu.dot_dimension_numbers<[1], [0], [0], [1], [0, 0, 1, 1], [], []>} : vector<1x128xf32>, vector<128x128xf32>, vector<1x128xf32> -> vector<1x128xf32>
    %c0_30 = arith.constant 0 : index
    %c0_31 = arith.constant 0 : index
    %57 = vector.load %arg12[%c0_30, %c0_31] : memref<1x128xf32, #tpu.memory_space<vmem>>, vector<1x128xf32>
    %58 = arith.addf %56, %57 : vector<1x128xf32>
    %cst_32 = arith.constant 0.000000e+00 : f32
    %59 = vector.broadcast %cst_32 : f32 to vector<1x128xf32>
    %60 = arith.maximumf %58, %59 : vector<1x128xf32>
    %c0_33 = arith.constant 0 : index
    %c0_34 = arith.constant 0 : index
    %61 = vector.load %arg13[%c0_33, %c0_34] : memref<128x128xbf16, #tpu.memory_space<vmem>>, vector<128x128xbf16>
    %62 = arith.extf %61 : vector<128x128xbf16> to vector<128x128xf32>
    %cst_35 = arith.constant dense<0.000000e+00> : vector<1x128xf32>
    %63 = tpu.matmul %60, %62, %cst_35 {dimension_numbers = #tpu.dot_dimension_numbers<[1], [0], [0], [1], [0, 0, 1, 1], [], []>} : vector<1x128xf32>, vector<128x128xf32>, vector<1x128xf32> -> vector<1x128xf32>
    %c0_36 = arith.constant 0 : index
    %c0_37 = arith.constant 0 : index
    %64 = vector.load %arg14[%c0_36, %c0_37] : memref<1x128xf32, #tpu.memory_space<vmem>>, vector<1x128xf32>
    %65 = arith.addf %63, %64 : vector<1x128xf32>
    %cst_38 = arith.constant 0.000000e+00 : f32
    %66 = vector.broadcast %cst_38 : f32 to vector<1x128xf32>
    %67 = arith.maximumf %65, %66 : vector<1x128xf32>
    %c0_39 = arith.constant 0 : index
    %c0_40 = arith.constant 0 : index
    %68 = vector.load %arg15[%c0_39, %c0_40] : memref<128x128xbf16, #tpu.memory_space<vmem>>, vector<128x128xbf16>
    %69 = arith.extf %68 : vector<128x128xbf16> to vector<128x128xf32>
    %cst_41 = arith.constant dense<0.000000e+00> : vector<1x128xf32>
    %70 = tpu.matmul %67, %69, %cst_41 {dimension_numbers = #tpu.dot_dimension_numbers<[1], [0], [0], [1], [0, 0, 1, 1], [], []>} : vector<1x128xf32>, vector<128x128xf32>, vector<1x128xf32> -> vector<1x128xf32>
    %c0_42 = arith.constant 0 : index
    %c0_43 = arith.constant 0 : index
    %71 = vector.load %arg16[%c0_42, %c0_43] : memref<1x128xf32, #tpu.memory_space<vmem>>, vector<1x128xf32>
    %72 = arith.addf %70, %71 : vector<1x128xf32>
    %c0_44 = arith.constant 0 : index
    %c0_45 = arith.constant 0 : index
    %c0_46 = arith.constant 0 : index
    %73 = vector.load %arg26[%c0_44, %c0_45, %c0_46] : memref<1x1x128xf32, #tpu.memory_space<vmem>>, vector<1x1x128xf32>
    %74 = vector.shape_cast %73 : vector<1x1x128xf32> to vector<1x128xf32>
    %75 = vector.shape_cast %72 : vector<1x128xf32> to vector<1x1x128xf32>
    tpu.vector_store %arg26[%c0_44, %c0_45, %c0_46], %75 {strides = array<i32>} : memref<1x1x128xf32, #tpu.memory_space<vmem>>, vector<1x1x128xf32>,
    %76 = vector.shape_cast %72 : vector<1x128xf32> to vector<1x128xf32>
    %77 = vector.broadcast %76 : vector<1x128xf32> to vector<64x128xf32>
    %c0_47 = arith.constant 0 : index
    %c0_48 = arith.constant 0 : index
    %78 = vector.load %arg17[%c0_47, %c0_48] : memref<64x128xf32, #tpu.memory_space<vmem>>, vector<64x128xf32>
    %79 = arith.mulf %77, %78 : vector<64x128xf32>
    %c0_49 = arith.constant 0 : index
    %c0_50 = arith.constant 0 : index
    %80 = vector.load %arg18[%c0_49, %c0_50] : memref<128x256xbf16, #tpu.memory_space<vmem>>, vector<128x256xbf16>
    %81 = arith.extf %80 : vector<128x256xbf16> to vector<128x256xf32>
    %cst_51 = arith.constant dense<0.000000e+00> : vector<64x256xf32>
    %82 = tpu.matmul %79, %81, %cst_51 {dimension_numbers = #tpu.dot_dimension_numbers<[1], [0], [0], [1], [0, 0, 1, 1], [], []>} : vector<64x128xf32>, vector<128x256xf32>, vector<64x256xf32> -> vector<64x256xf32>
    %c0_52 = arith.constant 0 : index
    %c0_53 = arith.constant 0 : index
    %83 = vector.load %arg19[%c0_52, %c0_53] : memref<128x256xbf16, #tpu.memory_space<vmem>>, vector<128x256xbf16>
    %84 = arith.extf %83 : vector<128x256xbf16> to vector<128x256xf32>
    %cst_54 = arith.constant dense<0.000000e+00> : vector<1x256xf32>
    %85 = tpu.matmul %53, %84, %cst_54 {dimension_numbers = #tpu.dot_dimension_numbers<[1], [0], [0], [1], [0, 0, 1, 1], [], []>} : vector<1x128xf32>, vector<128x256xf32>, vector<1x256xf32> -> vector<1x256xf32>
    %86 = vector.broadcast %85 : vector<1x256xf32> to vector<64x256xf32>
    %87 = arith.addf %82, %86 : vector<64x256xf32>
    %c0_55 = arith.constant 0 : index
    %c0_56 = arith.constant 0 : index
    %88 = vector.load %arg20[%c0_55, %c0_56] : memref<64x256xf32, #tpu.memory_space<vmem>>, vector<64x256xf32>
    %89 = arith.addf %87, %88 : vector<64x256xf32>
    %cst_57 = arith.constant 0.000000e+00 : f32
    %90 = vector.broadcast %cst_57 : f32 to vector<64x256xf32>
    %91 = arith.maximumf %89, %90 : vector<64x256xf32>
    %c0_58 = arith.constant 0 : index
    %c0_59 = arith.constant 0 : index
    %92 = vector.load %arg21[%c0_58, %c0_59] : memref<256x256xbf16, #tpu.memory_space<vmem>>, vector<256x256xbf16>
    %93 = arith.extf %92 : vector<256x256xbf16> to vector<256x256xf32>
    %cst_60 = arith.constant dense<0.000000e+00> : vector<64x256xf32>
    %94 = tpu.matmul %91, %93, %cst_60 {dimension_numbers = #tpu.dot_dimension_numbers<[1], [0], [0], [1], [0, 0, 1, 1], [], []>} : vector<64x256xf32>, vector<256x256xf32>, vector<64x256xf32> -> vector<64x256xf32>
    %c0_61 = arith.constant 0 : index
    %c0_62 = arith.constant 0 : index
    %95 = vector.load %arg22[%c0_61, %c0_62] : memref<1x256xf32, #tpu.memory_space<vmem>>, vector<1x256xf32>
    %96 = vector.broadcast %95 : vector<1x256xf32> to vector<64x256xf32>
    %97 = arith.addf %94, %96 : vector<64x256xf32>
    %cst_63 = arith.constant 0.000000e+00 : f32
    %98 = vector.broadcast %cst_63 : f32 to vector<64x256xf32>
    %99 = arith.maximumf %97, %98 : vector<64x256xf32>
    %c0_64 = arith.constant 0 : index
    %c0_65 = arith.constant 0 : index
    %100 = vector.load %arg23[%c0_64, %c0_65] : memref<256x128xbf16, #tpu.memory_space<vmem>>, vector<256x128xbf16>
    %101 = arith.extf %100 : vector<256x128xbf16> to vector<256x128xf32>
    %cst_66 = arith.constant dense<0.000000e+00> : vector<64x128xf32>
    %102 = tpu.matmul %99, %101, %cst_66 {dimension_numbers = #tpu.dot_dimension_numbers<[1], [0], [0], [1], [0, 0, 1, 1], [], []>} : vector<64x256xf32>, vector<256x128xf32>, vector<64x128xf32> -> vector<64x128xf32>
    %c0_67 = arith.constant 0 : index
    %c0_68 = arith.constant 0 : index
    %103 = vector.load %arg24[%c0_67, %c0_68] : memref<1x128xf32, #tpu.memory_space<vmem>>, vector<1x128xf32>
    %104 = vector.broadcast %103 : vector<1x128xf32> to vector<64x128xf32>
    %105 = arith.addf %102, %104 : vector<64x128xf32>
    %c0_69 = arith.constant 0 : index
    %c0_70 = arith.constant 0 : index
    %106 = vector.load %arg25[%c0_69, %c0_70] : memref<128x128xf32, #tpu.memory_space<vmem>>, vector<128x128xf32>
    %cst_71 = arith.constant dense<0.000000e+00> : vector<64x128xf32>
    %107 = tpu.matmul %79, %106, %cst_71 {dimension_numbers = #tpu.dot_dimension_numbers<[1], [0], [0], [1], [0, 0, 1, 1], [], []>} : vector<64x128xf32>, vector<128x128xf32>, vector<64x128xf32> -> vector<64x128xf32>
    %108 = arith.addf %105, %107 : vector<64x128xf32>
    %c0_72 = arith.constant 0 : index
    %c0_73 = arith.constant 0 : index
    %c0_74 = arith.constant 0 : index
    %109 = vector.load %arg27[%c0_72, %c0_73, %c0_74] : memref<1x64x128xf32, #tpu.memory_space<vmem>>, vector<1x64x128xf32>
    %110 = vector.shape_cast %109 : vector<1x64x128xf32> to vector<64x128xf32>
    %111 = vector.shape_cast %108 : vector<64x128xf32> to vector<1x64x128xf32>
    tpu.vector_store %arg27[%c0_72, %c0_73, %c0_74], %111 {strides = array<i32>} : memref<1x64x128xf32, #tpu.memory_space<vmem>>, vector<1x64x128xf32>,
    return
  }
  func.func @transform_0(%arg0: i32) -> (i32, i32, i32) {
    %c0_i32 = arith.constant 0 : i32
    %c0_i32_0 = arith.constant 0 : i32
    %c0_i32_1 = arith.constant 0 : i32
    return %arg0, %c0_i32, %c0_i32_0 : i32, i32, i32
  }
  func.func @transform_1(%arg0: i32) -> (i32, i32) {
    %c0_i32 = arith.constant 0 : i32
    %c0_i32_0 = arith.constant 0 : i32
    %c0_i32_1 = arith.constant 0 : i32
    return %c0_i32, %c0_i32_0 : i32, i32
  }
  func.func @transform_2(%arg0: i32) -> (i32, i32) {
    %c0_i32 = arith.constant 0 : i32
    %c0_i32_0 = arith.constant 0 : i32
    %c0_i32_1 = arith.constant 0 : i32
    return %c0_i32, %c0_i32_0 : i32, i32
  }
  func.func @transform_3(%arg0: i32) -> (i32, i32) {
    %c0_i32 = arith.constant 0 : i32
    %c0_i32_0 = arith.constant 0 : i32
    %c0_i32_1 = arith.constant 0 : i32
    return %c0_i32, %c0_i32_0 : i32, i32
  }
  func.func @transform_4(%arg0: i32) -> (i32, i32) {
    %c0_i32 = arith.constant 0 : i32
    %c0_i32_0 = arith.constant 0 : i32
    %c0_i32_1 = arith.constant 0 : i32
    return %c0_i32, %c0_i32_0 : i32, i32
  }
  func.func @transform_5(%arg0: i32) -> (i32, i32) {
    %c0_i32 = arith.constant 0 : i32
    %c0_i32_0 = arith.constant 0 : i32
    %c0_i32_1 = arith.constant 0 : i32
    return %c0_i32, %c0_i32_0 : i32, i32
  }
  func.func @transform_6(%arg0: i32) -> (i32, i32) {
    %c0_i32 = arith.constant 0 : i32
    %c0_i32_0 = arith.constant 0 : i32
    %c0_i32_1 = arith.constant 0 : i32
    return %c0_i32, %c0_i32_0 : i32, i32
  }
  func.func @transform_7(%arg0: i32) -> (i32, i32) {
    %c0_i32 = arith.constant 0 : i32
    %c0_i32_0 = arith.constant 0 : i32
    %c0_i32_1 = arith.constant 0 : i32
    return %c0_i32, %c0_i32_0 : i32, i32
  }
  func.func @transform_8(%arg0: i32) -> (i32, i32) {
    %c0_i32 = arith.constant 0 : i32
    %c0_i32_0 = arith.constant 0 : i32
    %c0_i32_1 = arith.constant 0 : i32
    return %c0_i32, %c0_i32_0 : i32, i32
  }
  func.func @transform_9(%arg0: i32) -> (i32, i32) {
    %c0_i32 = arith.constant 0 : i32
    %c0_i32_0 = arith.constant 0 : i32
    %c0_i32_1 = arith.constant 0 : i32
    return %c0_i32, %c0_i32_0 : i32, i32
  }
  func.func @transform_10(%arg0: i32) -> (i32, i32) {
    %c0_i32 = arith.constant 0 : i32
    %c0_i32_0 = arith.constant 0 : i32
    %c0_i32_1 = arith.constant 0 : i32
    return %c0_i32, %c0_i32_0 : i32, i32
  }
  func.func @transform_11(%arg0: i32) -> (i32, i32) {
    %c0_i32 = arith.constant 0 : i32
    %c0_i32_0 = arith.constant 0 : i32
    %c0_i32_1 = arith.constant 0 : i32
    return %c0_i32, %c0_i32_0 : i32, i32
  }
  func.func @transform_12(%arg0: i32) -> (i32, i32) {
    %c0_i32 = arith.constant 0 : i32
    %c0_i32_0 = arith.constant 0 : i32
    %c0_i32_1 = arith.constant 0 : i32
    return %c0_i32, %c0_i32_0 : i32, i32
  }
  func.func @transform_13(%arg0: i32) -> (i32, i32) {
    %c0_i32 = arith.constant 0 : i32
    %c0_i32_0 = arith.constant 0 : i32
    %c0_i32_1 = arith.constant 0 : i32
    return %c0_i32, %c0_i32_0 : i32, i32
  }
  func.func @transform_14(%arg0: i32) -> (i32, i32) {
    %c0_i32 = arith.constant 0 : i32
    %c0_i32_0 = arith.constant 0 : i32
    %c0_i32_1 = arith.constant 0 : i32
    return %c0_i32, %c0_i32_0 : i32, i32
  }
  func.func @transform_15(%arg0: i32) -> (i32, i32) {
    %c0_i32 = arith.constant 0 : i32
    %c0_i32_0 = arith.constant 0 : i32
    %c0_i32_1 = arith.constant 0 : i32
    return %c0_i32, %c0_i32_0 : i32, i32
  }
  func.func @transform_16(%arg0: i32) -> (i32, i32) {
    %c0_i32 = arith.constant 0 : i32
    %c0_i32_0 = arith.constant 0 : i32
    %c0_i32_1 = arith.constant 0 : i32
    return %c0_i32, %c0_i32_0 : i32, i32
  }
  func.func @transform_17(%arg0: i32) -> (i32, i32) {
    %c0_i32 = arith.constant 0 : i32
    %c0_i32_0 = arith.constant 0 : i32
    %c0_i32_1 = arith.constant 0 : i32
    return %c0_i32, %c0_i32_0 : i32, i32
  }
  func.func @transform_18(%arg0: i32) -> (i32, i32) {
    %c0_i32 = arith.constant 0 : i32
    %c0_i32_0 = arith.constant 0 : i32
    %c0_i32_1 = arith.constant 0 : i32
    return %c0_i32, %c0_i32_0 : i32, i32
  }
  func.func @transform_19(%arg0: i32) -> (i32, i32) {
    %c0_i32 = arith.constant 0 : i32
    %c0_i32_0 = arith.constant 0 : i32
    %c0_i32_1 = arith.constant 0 : i32
    return %c0_i32, %c0_i32_0 : i32, i32
  }
  func.func @transform_20(%arg0: i32) -> (i32, i32) {
    %c0_i32 = arith.constant 0 : i32
    %c0_i32_0 = arith.constant 0 : i32
    %c0_i32_1 = arith.constant 0 : i32
    return %c0_i32, %c0_i32_0 : i32, i32
  }
  func.func @transform_21(%arg0: i32) -> (i32, i32) {
    %c0_i32 = arith.constant 0 : i32
    %c0_i32_0 = arith.constant 0 : i32
    %c0_i32_1 = arith.constant 0 : i32
    return %c0_i32, %c0_i32_0 : i32, i32
  }
  func.func @transform_22(%arg0: i32) -> (i32, i32) {
    %c0_i32 = arith.constant 0 : i32
    %c0_i32_0 = arith.constant 0 : i32
    %c0_i32_1 = arith.constant 0 : i32
    return %c0_i32, %c0_i32_0 : i32, i32
  }
  func.func @transform_23(%arg0: i32) -> (i32, i32) {
    %c0_i32 = arith.constant 0 : i32
    %c0_i32_0 = arith.constant 0 : i32
    %c0_i32_1 = arith.constant 0 : i32
    return %c0_i32, %c0_i32_0 : i32, i32
  }
  func.func @transform_24(%arg0: i32) -> (i32, i32) {
    %c0_i32 = arith.constant 0 : i32
    %c0_i32_0 = arith.constant 0 : i32
    %c0_i32_1 = arith.constant 0 : i32
    return %c0_i32, %c0_i32_0 : i32, i32
  }
  func.func @transform_25(%arg0: i32) -> (i32, i32, i32) {
    %c0_i32 = arith.constant 0 : i32
    %c0_i32_0 = arith.constant 0 : i32
    %c0_i32_1 = arith.constant 0 : i32
    return %arg0, %c0_i32, %c0_i32_0 : i32, i32, i32
  }
  func.func @transform_26(%arg0: i32) -> (i32, i32, i32) {
    %c0_i32 = arith.constant 0 : i32
    %c0_i32_0 = arith.constant 0 : i32
    %c0_i32_1 = arith.constant 0 : i32
    return %arg0, %c0_i32, %c0_i32_0 : i32, i32, i32
  }
}

</mosaic_0001>

<llo_original>
// kernel: squeeze.1
$region0: #{squeeze.1}
  %s0 = inlined_call_operand.vmem [shape: f32[2,48], index: 0, kind: input, shape index: {}]
  %s1 = inlined_call_operand.vmem [shape: f32[2,16,3], index: 1, kind: output, shape index: {}]
  $region1: #{squeeze.1} parent=0
    #allocation0 [shape = 'u8[4096]{0}', space=vmem, size = 0x1000, scoped, tag = 'scoped mem for input reshape']
    %s3 = ssub.s32 4, 1
    %v4 = vld [vmem:[%s0] sm:%s3]
    %5 = vst [vmem:[#allocation0] sm:%s3] %v4
    %v6 = vld [vmem:[#allocation0] sm:$0x3]
    %vm7 = vcmask 23552
    %8 = vst.msk [vmem:[%s1] ss:$16 sm:$0x3] %vm7, %v6
    %v9 = vld [vmem:[#allocation0] sm:$0x3]
    %10 = vrot.lane.b32.xlu0 %v9, 125
    %v11 = vpop.permute.xlu0 %10
    %vm12 = vcmask 23552
    %s13 = scalar_lea.vmem %s1, 1
    %14 = vst.msk [vmem:[%s13] ss:$16 sm:$0x3] %vm12, %v11
    %v15 = vld [vmem:[#allocation0] sm:$0x3]
    %16 = vrot.lane.b32.xlu0 %v15, 122
    %v17 = vpop.permute.xlu0 %16
    %vm18 = vcmask 23552
    %s19 = scalar_lea.vmem %s1, 2
    %20 = vst.msk [vmem:[%s19] ss:$16 sm:$0x3] %vm18, %v17
    %v21 = vld [vmem:[#allocation0] sm:$0x3]
    %22 = vrot.lane.b32.xlu0 %v21, 119
    %v23 = vpop.permute.xlu0 %22
    %vm24 = vcmask 23552
    %s25 = scalar_lea.vmem %s1, 3
    %26 = vst.msk [vmem:[%s25] ss:$16 sm:$0x3] %vm24, %v23
    %v27 = vld [vmem:[#allocation0] sm:$0x3]
    %28 = vrot.lane.b32.xlu0 %v27, 116
    %v29 = vpop.permute.xlu0 %28
    %vm30 = vcmask 23552
    %s31 = scalar_lea.vmem %s1, 4
    %32 = vst.msk [vmem:[%s31] ss:$16 sm:$0x3] %vm30, %v29
    %v33 = vld [vmem:[#allocation0] sm:$0x3]
    %34 = vrot.lane.b32.xlu0 %v33, 113
    %v35 = vpop.permute.xlu0 %34
    %vm36 = vcmask 23552
    %s37 = scalar_lea.vmem %s1, 5
    %38 = vst.msk [vmem:[%s37] ss:$16 sm:$0x3] %vm36, %v35
    %v39 = vld [vmem:[#allocation0] sm:$0x3]
    %40 = vrot.lane.b32.xlu0 %v39, 110
    %v41 = vpop.permute.xlu0 %40
    %vm42 = vcmask 23552
    %s43 = scalar_lea.vmem %s1, 6
    %44 = vst.msk [vmem:[%s43] ss:$16 sm:$0x3] %vm42, %v41
    %v45 = vld [vmem:[#allocation0] sm:$0x3]
    %46 = vrot.lane.b32.xlu0 %v45, 107
    %v47 = vpop.permute.xlu0 %46
    %vm48 = vcmask 23552
    %s49 = scalar_lea.vmem %s1, 7
    %50 = vst.msk [vmem:[%s49] ss:$16 sm:$0x3] %vm48, %v47
    %v51 = vld [vmem:[#allocation0] sm:$0x3]
    %52 = vrot.lane.b32.xlu0 %v51, 104
    %v53 = vpop.permute.xlu0 %52
    %vm54 = vcmask 23552
    %s55 = scalar_lea.vmem %s1, 8
    %56 = vst.msk [vmem:[%s55] ss:$16 sm:$0x3] %vm54, %v53
    %v57 = vld [vmem:[#allocation0] sm:$0x3]
    %58 = vrot.lane.b32.xlu0 %v57, 101
    %v59 = vpop.permute.xlu0 %58
    %vm60 = vcmask 23552
    %s61 = scalar_lea.vmem %s1, 9
    %62 = vst.msk [vmem:[%s61] ss:$16 sm:$0x3] %vm60, %v59
    %v63 = vld [vmem:[#allocation0] sm:$0x3]
    %64 = vrot.lane.b32.xlu0 %v63, 98
    %v65 = vpop.permute.xlu0 %64
    %vm66 = vcmask 23552
    %s67 = scalar_lea.vmem %s1, 10
    %68 = vst.msk [vmem:[%s67] ss:$16 sm:$0x3] %vm66, %v65
    %v69 = vld [vmem:[#allocation0] sm:$0x3]
    %70 = vrot.lane.b32.xlu0 %v69, 95
    %v71 = vpop.permute.xlu0 %70
    %vm72 = vcmask 23552
    %s73 = scalar_lea.vmem %s1, 11
    %74 = vst.msk [vmem:[%s73] ss:$16 sm:$0x3] %vm72, %v71
    %v75 = vld [vmem:[#allocation0] sm:$0x3]
    %76 = vrot.lane.b32.xlu0 %v75, 92
    %v77 = vpop.permute.xlu0 %76
    %vm78 = vcmask 23552
    %s79 = scalar_lea.vmem %s1, 12
    %80 = vst.msk [vmem:[%s79] ss:$16 sm:$0x3] %vm78, %v77
    %v81 = vld [vmem:[#allocation0] sm:$0x3]
    %82 = vrot.lane.b32.xlu0 %v81, 89
    %v83 = vpop.permute.xlu0 %82
    %vm84 = vcmask 23552
    %s85 = scalar_lea.vmem %s1, 13
    %86 = vst.msk [vmem:[%s85] ss:$16 sm:$0x3] %vm84, %v83
    %v87 = vld [vmem:[#allocation0] sm:$0x3]
    %88 = vrot.lane.b32.xlu0 %v87, 86
    %v89 = vpop.permute.xlu0 %88
    %vm90 = vcmask 23552
    %s91 = scalar_lea.vmem %s1, 14
    %92 = vst.msk [vmem:[%s91] ss:$16 sm:$0x3] %vm90, %v89
    %v93 = vld [vmem:[#allocation0] sm:$0x3]
    %94 = vrot.lane.b32.xlu0 %v93, 83
    %v95 = vpop.permute.xlu0 %94
    %vm96 = vcmask 23552
    %s97 = scalar_lea.vmem %s1, 15
    %98 = vst.msk [vmem:[%s97] ss:$16 sm:$0x3] %vm96, %v95

// kernel: pcn_forward_pallas.1
$region0: #{pcn_forward_pallas.1}
  #allocation0 [shape = 'u32[]', space=smem, size = 0x4, offset = 0x4, fixed_abs, tag = 'smem constant byte address 0x4 - core index']
  #allocation1 [shape = 'u32[72,128]{1,0:T(1,128)}', space=vmem, size = 0x9000, scoped, tag = 'internal scratch']
  %s0 = inlined_call_operand.vmem [shape: f32[2,64,3], index: 0, kind: input, shape index: {}]
  %s1 = inlined_call_operand.vmem [shape: f32[3,128], index: 1, kind: input, shape index: {}]
  %s2 = inlined_call_operand.vmem [shape: f32[1,128], index: 2, kind: input, shape index: {}]
  %s3 = inlined_call_operand.vmem [shape: bf16[128,256], index: 3, kind: input, shape index: {}]
  %s4 = inlined_call_operand.vmem [shape: f32[1,256], index: 4, kind: input, shape index: {}]
  %s5 = inlined_call_operand.hbm [shape: bf16[256,512], index: 5, kind: input, shape index: {}]
  %s6 = inlined_call_operand.hbm [shape: bf16[256,512], index: 6, kind: input, shape index: {}]
  %s7 = inlined_call_operand.vmem [shape: f32[1,512], index: 7, kind: input, shape index: {}]
  %s8 = inlined_call_operand.hbm [shape: bf16[512,128], index: 8, kind: input, shape index: {}]
  %s9 = inlined_call_operand.vmem [shape: f32[1,128], index: 9, kind: input, shape index: {}]
  %s10 = inlined_call_operand.hbm [shape: bf16[128,128], index: 10, kind: input, shape index: {}]
  %s11 = inlined_call_operand.vmem [shape: f32[1,128], index: 11, kind: input, shape index: {}]
  %s12 = inlined_call_operand.hbm [shape: bf16[128,128], index: 12, kind: input, shape index: {}]
  %s13 = inlined_call_operand.vmem [shape: f32[1,128], index: 13, kind: input, shape index: {}]
  %s14 = inlined_call_operand.hbm [shape: bf16[128,128], index: 14, kind: input, shape index: {}]
  %s15 = inlined_call_operand.vmem [shape: f32[1,128], index: 15, kind: input, shape index: {}]
  %s16 = inlined_call_operand.hbm [shape: f32[64,128], index: 16, kind: input, shape index: {}]
  %s17 = inlined_call_operand.hbm [shape: bf16[128,256], index: 17, kind: input, shape index: {}]
  %s18 = inlined_call_operand.hbm [shape: bf16[128,256], index: 18, kind: input, shape index: {}]
  %s19 = inlined_call_operand.hbm [shape: f32[64,256], index: 19, kind: input, shape index: {}]
  %s20 = inlined_call_operand.hbm [shape: bf16[256,256], index: 20, kind: input, shape index: {}]
  %s21 = inlined_call_operand.vmem [shape: f32[1,256], index: 21, kind: input, shape index: {}]
  %s22 = inlined_call_operand.hbm [shape: bf16[256,128], index: 22, kind: input, shape index: {}]
  %s23 = inlined_call_operand.vmem [shape: f32[1,128], index: 23, kind: input, shape index: {}]
  %s24 = inlined_call_operand.hbm [shape: f32[128,128], index: 24, kind: input, shape index: {}]
  %s25 = inlined_call_operand.vmem [shape: f32[2,1,128], index: 25, kind: output, shape index: {0}]
  %s26 = inlined_call_operand.vmem [shape: f32[2,64,128], index: 26, kind: output, shape index: {1}]
  %27 = xla_tuple %s25, %s26
  %s28 = sld [smem:[#allocation0]]
  $region193: #{pcn_forward_pallas.1} parent=0
    _
  %s30 = ssub.s32 1, %s28
  %s31 = scalar_select 0, %s30, %s28
  $region1: #{pcn_forward_pallas.1} parent=0
    #allocation2 [shape = 'u8[262144]{0}', space=vmem, size = 0x40000, scoped, tag = 'input window, operand 5, single buffered']
    #allocation3 [shape = 's32[2]{0}', space=sflag, size = 0x8, scoped, tag = 'scoped memory for pcn_forward_pallas.1']
    #allocation4 [shape = 'u8[262144]{0}', space=vmem, size = 0x40000, scoped, tag = 'input window, operand 6, single buffered']
    #allocation5 [shape = 's32[1]{0}', space=sflag, size = 0x4, scoped, tag = 'scoped memory for pcn_forward_pallas.1']
    #allocation6 [shape = 'u8[131072]{0}', space=vmem, size = 0x20000, scoped, tag = 'input window, operand 8, single buffered']
    #allocation7 [shape = 'u8[32768]{0}', space=vmem, size = 0x8000, scoped, tag = 'input window, operand 10, single buffered']
    #allocation8 [shape = 's32[1]{0}', space=sflag, size = 0x4, scoped, tag = 'scoped memory for pcn_forward_pallas.1']
    #allocation9 [shape = 'u8[32768]{0}', space=vmem, size = 0x8000, scoped, tag = 'input window, operand 12, single buffered']
    #allocation10 [shape = 'u8[32768]{0}', space=vmem, size = 0x8000, scoped, tag = 'input window, operand 14, single buffered']
    #allocation11 [shape = 's32[1]{0}', space=sflag, size = 0x4, scoped, tag = 'scoped memory for pcn_forward_pallas.1']
    #allocation12 [shape = 'u8[32768]{0}', space=vmem, size = 0x8000, scoped, tag = 'input window, operand 16, single buffered']
    #allocation13 [shape = 'u8[65536]{0}', space=vmem, size = 0x10000, scoped, tag = 'input window, operand 17, single buffered']
    #allocation14 [shape = 's32[1]{0}', space=sflag, size = 0x4, scoped, tag = 'scoped memory for pcn_forward_pallas.1']
    #allocation15 [shape = 'u8[65536]{0}', space=vmem, size = 0x10000, scoped, tag = 'input window, operand 18, single buffered']
    #allocation16 [shape = 'u8[65536]{0}', space=vmem, size = 0x10000, scoped, tag = 'input window, operand 19, single buffered']
    #allocation17 [shape = 's32[1]{0}', space=sflag, size = 0x4, scoped, tag = 'scoped memory for pcn_forward_pallas.1']
    #allocation18 [shape = 'u8[131072]{0}', space=vmem, size = 0x20000, scoped, tag = 'input window, operand 20, single buffered']
    #allocation19 [shape = 'u8[65536]{0}', space=vmem, size = 0x10000, scoped, tag = 'input window, operand 22, single buffered']
    #allocation20 [shape = 's32[1]{0}', space=sflag, size = 0x4, scoped, tag = 'scoped memory for pcn_forward_pallas.1']
    #allocation21 [shape = 'u8[65536]{0}', space=vmem, size = 0x10000, scoped, tag = 'input window, operand 24, single buffered']
    %32 = vsyncpa [#allocation3], 0
    %33 = vsyncpa [#allocation5], 0
    %34 = vsyncpa [#allocation8], 0
    %35 = vsyncpa [#allocation11], 0
    %36 = vsyncpa [#allocation14], 0
    %37 = vsyncpa [#allocation17], 0
    %38 = vsyncpa [#allocation20], 0
    loop: start=0, step=1, limit=4
    $region2: #{pcn_forward_pallas.1} parent=1 // loop_pre_header
      _
    $region3: #{pcn_forward_pallas.1} parent=1 // loop_header
      %s40 = sphi 0, %s44
      %p41 = scmp.ge.s32.totalorder %s40, 4
      %s50 = sphi 0, %s52
      %s53 = sphi 0, %s50
      %s54 = sphi 0, %s53
      %s70 = sphi 0, %s54
      %s74 = sphi 0, %s74
      %s76 = sphi 0, %s74
      %s77 = sphi 0, %s76
      %s91 = sphi 0, %s77
      %s95 = sphi 0, %s95
      %s97 = sphi 0, %s95
      %s98 = sphi 0, %s97
      %s112 = sphi 0, %s98
      %s116 = sphi 0, %s116
      %s118 = sphi 0, %s116
      %s119 = sphi 0, %s118
      %s133 = sphi 0, %s119
      %s137 = sphi 0, %s137
      %s139 = sphi 0, %s137
      %s140 = sphi 0, %s139
      %s154 = sphi 0, %s140
      %s158 = sphi 0, %s158
      %s160 = sphi 0, %s158
      %s161 = sphi 0, %s160
      %s175 = sphi 0, %s161
      %s179 = sphi 0, %s179
      %s181 = sphi 0, %s179
      %s182 = sphi 0, %s181
      %s196 = sphi 0, %s182
      %s200 = sphi 0, %s200
      %s202 = sphi 0, %s200
      %s203 = sphi 0, %s202
      %s217 = sphi 0, %s203
      %s221 = sphi 0, %s221
      %s223 = sphi 0, %s221
      %s224 = sphi 0, %s223
      %s238 = sphi 0, %s224
      %s242 = sphi 0, %s242
      %s244 = sphi 0, %s242
      %s245 = sphi 0, %s244
      %s259 = sphi 0, %s245
      %s263 = sphi 0, %s263
      %s265 = sphi 0, %s263
      %s266 = sphi 0, %s265
      %s280 = sphi 0, %s266
      %s284 = sphi 0, %s284
      %s286 = sphi 0, %s284
      %s287 = sphi 0, %s286
      %s301 = sphi 0, %s287
      %s305 = sphi 0, %s305
      %s307 = sphi 0, %s305
      %s308 = sphi 0, %s307
      %s322 = sphi 0, %s308
      %s326 = sphi 0, %s326
      %s328 = sphi 0, %s326
      %s329 = sphi 0, %s328
      %s343 = sphi 0, %s329
      %s347 = sphi 0, %s347
      %s349 = sphi 0, %s347
      %s350 = sphi 0, %s349
      %s364 = sphi 0, %s350
      %s368 = sphi 0, %s368
      %s370 = sphi 0, %s368
      %s371 = sphi 0, %s370
      %s385 = sphi 0, %s371
      %s389 = sphi 0, %s389
      %s391 = sphi 0, %s389
      %s392 = sphi 0, %s391
      %s406 = sphi 0, %s392
      %s410 = sphi 0, %s410
      %s412 = sphi 0, %s410
      %s413 = sphi 0, %s412
      %s427 = sphi 0, %s413
      %s431 = sphi 0, %s431
      %s433 = sphi 0, %s431
      %s434 = sphi 0, %s433
      %s448 = sphi 0, %s434
      %s452 = sphi 0, %s452
      %s454 = sphi 0, %s452
      %s455 = sphi 0, %s454
      %s469 = sphi 0, %s455
      %s473 = sphi 0, %s473
      %s475 = sphi 0, %s473
      %s476 = sphi 0, %s475
      %s490 = sphi 0, %s476
      %s494 = sphi 0, %s494
      %s496 = sphi 0, %s494
      %s497 = sphi 0, %s496
      %s511 = sphi 0, %s497
      %s515 = sphi 0, %s515
      %s517 = sphi 0, %s515
      %s518 = sphi 0, %s517
      %s532 = sphi 0, %s518
      %s536 = sphi 0, %s536
      %s538 = sphi 0, %s536
      %s539 = sphi 0, %s538
      %s553 = sphi 0, %s539
      %s557 = sphi 0, %s557
      %s559 = sphi 0, %s557
      %s560 = sphi 0, %s559
      %s574 = sphi 0, %s560
      %s580 = sphi 0, %s582
      %s583 = sphi 0, %s580
      %s584 = sphi 0, %s583
      %s600 = sphi 0, %s584
      %s606 = sphi 0, %s608
      %s609 = sphi 0, %s606
      %s610 = sphi 0, %s609
      %s626 = sphi 0, %s610
    $region4: #{pcn_forward_pallas.1} parent=1 // loop_header_branch
      %43 = sbr.rel (%p41) target = $region8
    $region5: #{pcn_forward_pallas.1} parent=1 // loop_body
      %s45 = ssub.s32 %s40, 1
      %s46 = ssub.s32 %s40, 2
      %s47 = sadd.s32 %s40, 1
      %s48 = ssub.s32 %s40, %s47
      %p49 = scmp.eq.s32.totalorder %s48, 0
      %s51 = sadd.s32 %s50, 1
      %s52 = scalar_select %p49, %s50, %s51
      %p55 = pneg %p49
      %p56 = scmp.eq.s32.totalorder %s40, 1
      %p57 = por %p55, %p56
      %p58 = scmp.ne.s32.totalorder %s50, %s53
      %p59 = scmp.eq.s32.totalorder %s40, 0
      %p60 = por %p58, %p59
      %p61 = scmp.ne.s32.totalorder %s50, %s53
      %p62 = scmp.eq.s32.totalorder %s45, 1
      %p63 = por %p61, %p62
      %p64 = scmp.ne.s32.totalorder %s53, %s54
      %p65 = scmp.eq.s32.totalorder %s45, 0
      %p66 = por %p64, %p65
      %p67 = scmp.ne.s32.totalorder %s53, %s54
      %p68 = scmp.eq.s32.totalorder %s46, 1
      %p69 = por %p67, %p68
      %p71 = scmp.ne.s32.totalorder %s54, %s70
      %p72 = scmp.eq.s32.totalorder %s46, 0
      %p73 = por %p71, %p72
      %s75 = sadd.s32 %s74, 1
      %p78 = scmp.eq.s32.totalorder %s40, 1
      %p79 = scmp.ne.s32.totalorder %s74, %s76
      %p80 = scmp.eq.s32.totalorder %s40, 0
      %p81 = por %p79, %p80
      %p82 = scmp.ne.s32.totalorder %s74, %s76
      %p83 = scmp.eq.s32.totalorder %s45, 1
      %p84 = por %p82, %p83
      %p85 = scmp.ne.s32.totalorder %s76, %s77
      %p86 = scmp.eq.s32.totalorder %s45, 0
      %p87 = por %p85, %p86
      %p88 = scmp.ne.s32.totalorder %s76, %s77
      %p89 = scmp.eq.s32.totalorder %s46, 1
      %p90 = por %p88, %p89
      %p92 = scmp.ne.s32.totalorder %s77, %s91
      %p93 = scmp.eq.s32.totalorder %s46, 0
      %p94 = por %p92, %p93
      %s96 = sadd.s32 %s95, 1
      %p99 = scmp.eq.s32.totalorder %s40, 1
      %p100 = scmp.ne.s32.totalorder %s95, %s97
      %p101 = scmp.eq.s32.totalorder %s40, 0
      %p102 = por %p100, %p101
      %p103 = scmp.ne.s32.totalorder %s95, %s97
      %p104 = scmp.eq.s32.totalorder %s45, 1
      %p105 = por %p103, %p104
      %p106 = scmp.ne.s32.totalorder %s97, %s98
      %p107 = scmp.eq.s32.totalorder %s45, 0
      %p108 = por %p106, %p107
      %p109 = scmp.ne.s32.totalorder %s97, %s98
      %p110 = scmp.eq.s32.totalorder %s46, 1
      %p111 = por %p109, %p110
      %p113 = scmp.ne.s32.totalorder %s98, %s112
      %p114 = scmp.eq.s32.totalorder %s46, 0
      %p115 = por %p113, %p114
      %s117 = sadd.s32 %s116, 1
      %p120 = scmp.eq.s32.totalorder %s40, 1
      %p121 = scmp.ne.s32.totalorder %s116, %s118
      %p122 = scmp.eq.s32.totalorder %s40, 0
      %p123 = por %p121, %p122
      %p124 = scmp.ne.s32.totalorder %s116, %s118
      %p125 = scmp.eq.s32.totalorder %s45, 1
      %p126 = por %p124, %p125
      %p127 = scmp.ne.s32.totalorder %s118, %s119
      %p128 = scmp.eq.s32.totalorder %s45, 0
      %p129 = por %p127, %p128
      %p130 = scmp.ne.s32.totalorder %s118, %s119
      %p131 = scmp.eq.s32.totalorder %s46, 1
      %p132 = por %p130, %p131
      %p134 = scmp.ne.s32.totalorder %s119, %s133
      %p135 = scmp.eq.s32.totalorder %s46, 0
      %p136 = por %p134, %p135
      %s138 = sadd.s32 %s137, 1
      %p141 = scmp.eq.s32.totalorder %s40, 1
      %p142 = scmp.ne.s32.totalorder %s137, %s139
      %p143 = scmp.eq.s32.totalorder %s40, 0
      %p144 = por %p142, %p143
      %p145 = scmp.ne.s32.totalorder %s137, %s139
      %p146 = scmp.eq.s32.totalorder %s45, 1
      %p147 = por %p145, %p146
      %p148 = scmp.ne.s32.totalorder %s139, %s140
      %p149 = scmp.eq.s32.totalorder %s45, 0
      %p150 = por %p148, %p149
      %p151 = scmp.ne.s32.totalorder %s139, %s140
      %p152 = scmp.eq.s32.totalorder %s46, 1
      %p153 = por %p151, %p152
      %p155 = scmp.ne.s32.totalorder %s140, %s154
      %p156 = scmp.eq.s32.totalorder %s46, 0
      %p157 = por %p155, %p156
      %s159 = sadd.s32 %s158, 1
      %p162 = scmp.eq.s32.totalorder %s40, 1
      %p163 = scmp.ne.s32.totalorder %s158, %s160
      %p164 = scmp.eq.s32.totalorder %s40, 0
      %p165 = por %p163, %p164
      %p166 = scmp.ne.s32.totalorder %s158, %s160
      %p167 = scmp.eq.s32.totalorder %s45, 1
      %p168 = por %p166, %p167
      %p169 = scmp.ne.s32.totalorder %s160, %s161
      %p170 = scmp.eq.s32.totalorder %s45, 0
      %p171 = por %p169, %p170
      %p172 = scmp.ne.s32.totalorder %s160, %s161
      %p173 = scmp.eq.s32.totalorder %s46, 1
      %p174 = por %p172, %p173
      %p176 = scmp.ne.s32.totalorder %s161, %s175
      %p177 = scmp.eq.s32.totalorder %s46, 0
      %p178 = por %p176, %p177
      %s180 = sadd.s32 %s179, 1
      %p183 = scmp.eq.s32.totalorder %s40, 1
      %p184 = scmp.ne.s32.totalorder %s179, %s181
      %p185 = scmp.eq.s32.totalorder %s40, 0
      %p186 = por %p184, %p185
      %p187 = scmp.ne.s32.totalorder %s179, %s181
      %p188 = scmp.eq.s32.totalorder %s45, 1
      %p189 = por %p187, %p188
      %p190 = scmp.ne.s32.totalorder %s181, %s182
      %p191 = scmp.eq.s32.totalorder %s45, 0
      %p192 = por %p190, %p191
      %p193 = scmp.ne.s32.totalorder %s181, %s182
      %p194 = scmp.eq.s32.totalorder %s46, 1
      %p195 = por %p193, %p194
      %p197 = scmp.ne.s32.totalorder %s182, %s196
      %p198 = scmp.eq.s32.totalorder %s46, 0
      %p199 = por %p197, %p198
      %s201 = sadd.s32 %s200, 1
      %p204 = scmp.eq.s32.totalorder %s40, 1
      %p205 = scmp.ne.s32.totalorder %s200, %s202
      %p206 = scmp.eq.s32.totalorder %s40, 0
      %p207 = por %p205, %p206
      %p208 = scmp.ne.s32.totalorder %s200, %s202
      %p209 = scmp.eq.s32.totalorder %s45, 1
      %p210 = por %p208, %p209
      %p211 = scmp.ne.s32.totalorder %s202, %s203
      %p212 = scmp.eq.s32.totalorder %s45, 0
      %p213 = por %p211, %p212
      %p214 = scmp.ne.s32.totalorder %s202, %s203
      %p215 = scmp.eq.s32.totalorder %s46, 1
      %p216 = por %p214, %p215
      %p218 = scmp.ne.s32.totalorder %s203, %s217
      %p219 = scmp.eq.s32.totalorder %s46, 0
      %p220 = por %p218, %p219
      %s222 = sadd.s32 %s221, 1
      %p225 = scmp.eq.s32.totalorder %s40, 1
      %p226 = scmp.ne.s32.totalorder %s221, %s223
      %p227 = scmp.eq.s32.totalorder %s40, 0
      %p228 = por %p226, %p227
      %p229 = scmp.ne.s32.totalorder %s221, %s223
      %p230 = scmp.eq.s32.totalorder %s45, 1
      %p231 = por %p229, %p230
      %p232 = scmp.ne.s32.totalorder %s223, %s224
      %p233 = scmp.eq.s32.totalorder %s45, 0
      %p234 = por %p232, %p233
      %p235 = scmp.ne.s32.totalorder %s223, %s224
      %p236 = scmp.eq.s32.totalorder %s46, 1
      %p237 = por %p235, %p236
      %p239 = scmp.ne.s32.totalorder %s224, %s238
      %p240 = scmp.eq.s32.totalorder %s46, 0
      %p241 = por %p239, %p240
      %s243 = sadd.s32 %s242, 1
      %p246 = scmp.eq.s32.totalorder %s40, 1
      %p247 = scmp.ne.s32.totalorder %s242, %s244
      %p248 = scmp.eq.s32.totalorder %s40, 0
      %p249 = por %p247, %p248
      %p250 = scmp.ne.s32.totalorder %s242, %s244
      %p251 = scmp.eq.s32.totalorder %s45, 1
      %p252 = por %p250, %p251
      %p253 = scmp.ne.s32.totalorder %s244, %s245
      %p254 = scmp.eq.s32.totalorder %s45, 0
      %p255 = por %p253, %p254
      %p256 = scmp.ne.s32.totalorder %s244, %s245
      %p257 = scmp.eq.s32.totalorder %s46, 1
      %p258 = por %p256, %p257
      %p260 = scmp.ne.s32.totalorder %s245, %s259
      %p261 = scmp.eq.s32.totalorder %s46, 0
      %p262 = por %p260, %p261
      %s264 = sadd.s32 %s263, 1
      %p267 = scmp.eq.s32.totalorder %s40, 1
      %p268 = scmp.ne.s32.totalorder %s263, %s265
      %p269 = scmp.eq.s32.totalorder %s40, 0
      %p270 = por %p268, %p269
      %p271 = scmp.ne.s32.totalorder %s263, %s265
      %p272 = scmp.eq.s32.totalorder %s45, 1
      %p273 = por %p271, %p272
      %p274 = scmp.ne.s32.totalorder %s265, %s266
      %p275 = scmp.eq.s32.totalorder %s45, 0
      %p276 = por %p274, %p275
      %p277 = scmp.ne.s32.totalorder %s265, %s266
      %p278 = scmp.eq.s32.totalorder %s46, 1
      %p279 = por %p277, %p278
      %p281 = scmp.ne.s32.totalorder %s266, %s280
      %p282 = scmp.eq.s32.totalorder %s46, 0
      %p283 = por %p281, %p282
      %s285 = sadd.s32 %s284, 1
      %p288 = scmp.eq.s32.totalorder %s40, 1
      %p289 = scmp.ne.s32.totalorder %s284, %s286
      %p290 = scmp.eq.s32.totalorder %s40, 0
      %p291 = por %p289, %p290
      %p292 = scmp.ne.s32.totalorder %s284, %s286
      %p293 = scmp.eq.s32.totalorder %s45, 1
      %p294 = por %p292, %p293
      %p295 = scmp.ne.s32.totalorder %s286, %s287
      %p296 = scmp.eq.s32.totalorder %s45, 0
      %p297 = por %p295, %p296
      %p298 = scmp.ne.s32.totalorder %s286, %s287
      %p299 = scmp.eq.s32.totalorder %s46, 1
      %p300 = por %p298, %p299
      %p302 = scmp.ne.s32.totalorder %s287, %s301
      %p303 = scmp.eq.s32.totalorder %s46, 0
      %p304 = por %p302, %p303
      %s306 = sadd.s32 %s305, 1
      %p309 = scmp.eq.s32.totalorder %s40, 1
      %p310 = scmp.ne.s32.totalorder %s305, %s307
      %p311 = scmp.eq.s32.totalorder %s40, 0
      %p312 = por %p310, %p311
      %p313 = scmp.ne.s32.totalorder %s305, %s307
      %p314 = scmp.eq.s32.totalorder %s45, 1
      %p315 = por %p313, %p314
      %p316 = scmp.ne.s32.totalorder %s307, %s308
      %p317 = scmp.eq.s32.totalorder %s45, 0
      %p318 = por %p316, %p317
      %p319 = scmp.ne.s32.totalorder %s307, %s308
      %p320 = scmp.eq.s32.totalorder %s46, 1
      %p321 = por %p319, %p320
      %p323 = scmp.ne.s32.totalorder %s308, %s322
      %p324 = scmp.eq.s32.totalorder %s46, 0
      %p325 = por %p323, %p324
      %s327 = sadd.s32 %s326, 1
      %p330 = scmp.eq.s32.totalorder %s40, 1
      %p331 = scmp.ne.s32.totalorder %s326, %s328
      %p332 = scmp.eq.s32.totalorder %s40, 0
      %p333 = por %p331, %p332
      %p334 = scmp.ne.s32.totalorder %s326, %s328
      %p335 = scmp.eq.s32.totalorder %s45, 1
      %p336 = por %p334, %p335
      %p337 = scmp.ne.s32.totalorder %s328, %s329
      %p338 = scmp.eq.s32.totalorder %s45, 0
      %p339 = por %p337, %p338
      %p340 = scmp.ne.s32.totalorder %s328, %s329
      %p341 = scmp.eq.s32.totalorder %s46, 1
      %p342 = por %p340, %p341
      %p344 = scmp.ne.s32.totalorder %s329, %s343
      %p345 = scmp.eq.s32.totalorder %s46, 0
      %p346 = por %p344, %p345
      %s348 = sadd.s32 %s347, 1
      %p351 = scmp.eq.s32.totalorder %s40, 1
      %p352 = scmp.ne.s32.totalorder %s347, %s349
      %p353 = scmp.eq.s32.totalorder %s40, 0
      %p354 = por %p352, %p353
      %p355 = scmp.ne.s32.totalorder %s347, %s349
      %p356 = scmp.eq.s32.totalorder %s45, 1
      %p357 = por %p355, %p356
      %p358 = scmp.ne.s32.totalorder %s349, %s350
      %p359 = scmp.eq.s32.totalorder %s45, 0
      %p360 = por %p358, %p359
      %p361 = scmp.ne.s32.totalorder %s349, %s350
      %p362 = scmp.eq.s32.totalorder %s46, 1
      %p363 = por %p361, %p362
      %p365 = scmp.ne.s32.totalorder %s350, %s364
      %p366 = scmp.eq.s32.totalorder %s46, 0
      %p367 = por %p365, %p366
      %s369 = sadd.s32 %s368, 1
      %p372 = scmp.eq.s32.totalorder %s40, 1
      %p373 = scmp.ne.s32.totalorder %s368, %s370
      %p374 = scmp.eq.s32.totalorder %s40, 0
      %p375 = por %p373, %p374
      %p376 = scmp.ne.s32.totalorder %s368, %s370
      %p377 = scmp.eq.s32.totalorder %s45, 1
      %p378 = por %p376, %p377
      %p379 = scmp.ne.s32.totalorder %s370, %s371
      %p380 = scmp.eq.s32.totalorder %s45, 0
      %p381 = por %p379, %p380
      %p382 = scmp.ne.s32.totalorder %s370, %s371
      %p383 = scmp.eq.s32.totalorder %s46, 1
      %p384 = por %p382, %p383
      %p386 = scmp.ne.s32.totalorder %s371, %s385
      %p387 = scmp.eq.s32.totalorder %s46, 0
      %p388 = por %p386, %p387
      %s390 = sadd.s32 %s389, 1
      %p393 = scmp.eq.s32.totalorder %s40, 1
      %p394 = scmp.ne.s32.totalorder %s389, %s391
      %p395 = scmp.eq.s32.totalorder %s40, 0
      %p396 = por %p394, %p395
      %p397 = scmp.ne.s32.totalorder %s389, %s391
      %p398 = scmp.eq.s32.totalorder %s45, 1
      %p399 = por %p397, %p398
      %p400 = scmp.ne.s32.totalorder %s391, %s392
      %p401 = scmp.eq.s32.totalorder %s45, 0
      %p402 = por %p400, %p401
      %p403 = scmp.ne.s32.totalorder %s391, %s392
      %p404 = scmp.eq.s32.totalorder %s46, 1
      %p405 = por %p403, %p404
      %p407 = scmp.ne.s32.totalorder %s392, %s406
      %p408 = scmp.eq.s32.totalorder %s46, 0
      %p409 = por %p407, %p408
      %s411 = sadd.s32 %s410, 1
      %p414 = scmp.eq.s32.totalorder %s40, 1
      %p415 = scmp.ne.s32.totalorder %s410, %s412
      %p416 = scmp.eq.s32.totalorder %s40, 0
      %p417 = por %p415, %p416
      %p418 = scmp.ne.s32.totalorder %s410, %s412
      %p419 = scmp.eq.s32.totalorder %s45, 1
      %p420 = por %p418, %p419
      %p421 = scmp.ne.s32.totalorder %s412, %s413
      %p422 = scmp.eq.s32.totalorder %s45, 0
      %p423 = por %p421, %p422
      %p424 = scmp.ne.s32.totalorder %s412, %s413
      %p425 = scmp.eq.s32.totalorder %s46, 1
      %p426 = por %p424, %p425
      %p428 = scmp.ne.s32.totalorder %s413, %s427
      %p429 = scmp.eq.s32.totalorder %s46, 0
      %p430 = por %p428, %p429
      %s432 = sadd.s32 %s431, 1
      %p435 = scmp.eq.s32.totalorder %s40, 1
      %p436 = scmp.ne.s32.totalorder %s431, %s433
      %p437 = scmp.eq.s32.totalorder %s40, 0
      %p438 = por %p436, %p437
      %p439 = scmp.ne.s32.totalorder %s431, %s433
      %p440 = scmp.eq.s32.totalorder %s45, 1
      %p441 = por %p439, %p440
      %p442 = scmp.ne.s32.totalorder %s433, %s434
      %p443 = scmp.eq.s32.totalorder %s45, 0
      %p444 = por %p442, %p443
      %p445 = scmp.ne.s32.totalorder %s433, %s434
      %p446 = scmp.eq.s32.totalorder %s46, 1
      %p447 = por %p445, %p446
      %p449 = scmp.ne.s32.totalorder %s434, %s448
      %p450 = scmp.eq.s32.totalorder %s46, 0
      %p451 = por %p449, %p450
      %s453 = sadd.s32 %s452, 1
      %p456 = scmp.eq.s32.totalorder %s40, 1
      %p457 = scmp.ne.s32.totalorder %s452, %s454
      %p458 = scmp.eq.s32.totalorder %s40, 0
      %p459 = por %p457, %p458
      %p460 = scmp.ne.s32.totalorder %s452, %s454
      %p461 = scmp.eq.s32.totalorder %s45, 1
      %p462 = por %p460, %p461
      %p463 = scmp.ne.s32.totalorder %s454, %s455
      %p464 = scmp.eq.s32.totalorder %s45, 0
      %p465 = por %p463, %p464
      %p466 = scmp.ne.s32.totalorder %s454, %s455
      %p467 = scmp.eq.s32.totalorder %s46, 1
      %p468 = por %p466, %p467
      %p470 = scmp.ne.s32.totalorder %s455, %s469
      %p471 = scmp.eq.s32.totalorder %s46, 0
      %p472 = por %p470, %p471
      %s474 = sadd.s32 %s473, 1
      %p477 = scmp.eq.s32.totalorder %s40, 1
      %p478 = scmp.ne.s32.totalorder %s473, %s475
      %p479 = scmp.eq.s32.totalorder %s40, 0
      %p480 = por %p478, %p479
      %p481 = scmp.ne.s32.totalorder %s473, %s475
      %p482 = scmp.eq.s32.totalorder %s45, 1
      %p483 = por %p481, %p482
      %p484 = scmp.ne.s32.totalorder %s475, %s476
      %p485 = scmp.eq.s32.totalorder %s45, 0
      %p486 = por %p484, %p485
      %p487 = scmp.ne.s32.totalorder %s475, %s476
      %p488 = scmp.eq.s32.totalorder %s46, 1
      %p489 = por %p487, %p488
      %p491 = scmp.ne.s32.totalorder %s476, %s490
      %p492 = scmp.eq.s32.totalorder %s46, 0
      %p493 = por %p491, %p492
      %s495 = sadd.s32 %s494, 1
      %p498 = scmp.eq.s32.totalorder %s40, 1
      %p499 = scmp.ne.s32.totalorder %s494, %s496
      %p500 = scmp.eq.s32.totalorder %s40, 0
      %p501 = por %p499, %p500
      %p502 = scmp.ne.s32.totalorder %s494, %s496
      %p503 = scmp.eq.s32.totalorder %s45, 1
      %p504 = por %p502, %p503
      %p505 = scmp.ne.s32.totalorder %s496, %s497
      %p506 = scmp.eq.s32.totalorder %s45, 0
      %p507 = por %p505, %p506
      %p508 = scmp.ne.s32.totalorder %s496, %s497
      %p509 = scmp.eq.s32.totalorder %s46, 1
      %p510 = por %p508, %p509
      %p512 = scmp.ne.s32.totalorder %s497, %s511
      %p513 = scmp.eq.s32.totalorder %s46, 0
      %p514 = por %p512, %p513
      %s516 = sadd.s32 %s515, 1
      %p519 = scmp.eq.s32.totalorder %s40, 1
      %p520 = scmp.ne.s32.totalorder %s515, %s517
      %p521 = scmp.eq.s32.totalorder %s40, 0
      %p522 = por %p520, %p521
      %p523 = scmp.ne.s32.totalorder %s515, %s517
      %p524 = scmp.eq.s32.totalorder %s45, 1
      %p525 = por %p523, %p524
      %p526 = scmp.ne.s32.totalorder %s517, %s518
      %p527 = scmp.eq.s32.totalorder %s45, 0
      %p528 = por %p526, %p527
      %p529 = scmp.ne.s32.totalorder %s517, %s518
      %p530 = scmp.eq.s32.totalorder %s46, 1
      %p531 = por %p529, %p530
      %p533 = scmp.ne.s32.totalorder %s518, %s532
      %p534 = scmp.eq.s32.totalorder %s46, 0
      %p535 = por %p533, %p534
      %s537 = sadd.s32 %s536, 1
      %p540 = scmp.eq.s32.totalorder %s40, 1
      %p541 = scmp.ne.s32.totalorder %s536, %s538
      %p542 = scmp.eq.s32.totalorder %s40, 0
      %p543 = por %p541, %p542
      %p544 = scmp.ne.s32.totalorder %s536, %s538
      %p545 = scmp.eq.s32.totalorder %s45, 1
      %p546 = por %p544, %p545
      %p547 = scmp.ne.s32.totalorder %s538, %s539
      %p548 = scmp.eq.s32.totalorder %s45, 0
      %p549 = por %p547, %p548
      %p550 = scmp.ne.s32.totalorder %s538, %s539
      %p551 = scmp.eq.s32.totalorder %s46, 1
      %p552 = por %p550, %p551
      %p554 = scmp.ne.s32.totalorder %s539, %s553
      %p555 = scmp.eq.s32.totalorder %s46, 0
      %p556 = por %p554, %p555
      %s558 = sadd.s32 %s557, 1
      %p561 = scmp.eq.s32.totalorder %s40, 1
      %p562 = scmp.ne.s32.totalorder %s557, %s559
      %p563 = scmp.eq.s32.totalorder %s40, 0
      %p564 = por %p562, %p563
      %p565 = scmp.ne.s32.totalorder %s557, %s559
      %p566 = scmp.eq.s32.totalorder %s45, 1
      %p567 = por %p565, %p566
      %p568 = scmp.ne.s32.totalorder %s559, %s560
      %p569 = scmp.eq.s32.totalorder %s45, 0
      %p570 = por %p568, %p569
      %p571 = scmp.ne.s32.totalorder %s559, %s560
      %p572 = scmp.eq.s32.totalorder %s46, 1
      %p573 = por %p571, %p572
      %p575 = scmp.ne.s32.totalorder %s560, %s574
      %p576 = scmp.eq.s32.totalorder %s46, 0
      %p577 = por %p575, %p576
      %s578 = ssub.s32 %s40, %s47
      %p579 = scmp.eq.s32.totalorder %s578, 0
      %s581 = sadd.s32 %s580, 1
      %s582 = scalar_select %p579, %s580, %s581
      %p585 = pneg %p579
      %p586 = scmp.eq.s32.totalorder %s40, 1
      %p587 = por %p585, %p586
      %p588 = scmp.ne.s32.totalorder %s580, %s583
      %p589 = scmp.eq.s32.totalorder %s40, 0
      %p590 = por %p588, %p589
      %p591 = scmp.ne.s32.totalorder %s580, %s583
      %p592 = scmp.eq.s32.totalorder %s45, 1
      %p593 = por %p591, %p592
      %p594 = scmp.ne.s32.totalorder %s583, %s584
      %p595 = scmp.eq.s32.totalorder %s45, 0
      %p596 = por %p594, %p595
      %p597 = scmp.ne.s32.totalorder %s583, %s584
      %p598 = scmp.eq.s32.totalorder %s46, 1
      %p599 = por %p597, %p598
      %p601 = scmp.ne.s32.totalorder %s584, %s600
      %p602 = scmp.eq.s32.totalorder %s46, 0
      %p603 = por %p601, %p602
      %s604 = ssub.s32 %s40, %s47
      %p605 = scmp.eq.s32.totalorder %s604, 0
      %s607 = sadd.s32 %s606, 1
      %s608 = scalar_select %p605, %s606, %s607
      %p611 = pneg %p605
      %p612 = scmp.eq.s32.totalorder %s40, 1
      %p613 = por %p611, %p612
      %p614 = scmp.ne.s32.totalorder %s606, %s609
      %p615 = scmp.eq.s32.totalorder %s40, 0
      %p616 = por %p614, %p615
      %p617 = scmp.ne.s32.totalorder %s606, %s609
      %p618 = scmp.eq.s32.totalorder %s45, 1
      %p619 = por %p617, %p618
      %p620 = scmp.ne.s32.totalorder %s609, %s610
      %p621 = scmp.eq.s32.totalorder %s45, 0
      %p622 = por %p620, %p621
      %p623 = scmp.ne.s32.totalorder %s609, %s610
      %p624 = scmp.eq.s32.totalorder %s46, 1
      %p625 = por %p623, %p624
      %p627 = scmp.ne.s32.totalorder %s610, %s626
      %p628 = scmp.eq.s32.totalorder %s46, 0
      %p629 = por %p627, %p628
      %p630 = scmp.le.s32.totalorder 1, %s40
      %p631 = scmp.lt.s32.totalorder %s40, 3
      %p632 = pnand %p630, %p631
      %p633 = pneg %p632
      // Predicated region
      $region9: #{pcn_forward_pallas.1} parent=5 // pred_check
        _
      $region10: #{pcn_forward_pallas.1} parent=5 // pred_check_branch
        %635 = sbr.rel (%p632) target = $region12
      $region11: #{pcn_forward_pallas.1} parent=5 // pred_region
        %s636 = ssub.s32 %s40, 1
        // Predicated region
        $region13: #{pcn_forward_pallas.1} parent=11 // pred_check
          %p637 = pneg %p87
        $region14: #{pcn_forward_pallas.1} parent=11 // pred_check_branch
          %639 = sbr.rel (%p637) target = $region16
        $region15: #{pcn_forward_pallas.1} parent=11 // pred_region
          _
        $region16: #{pcn_forward_pallas.1} parent=11 // pred_fallthru
          _
        // Predicated region
        $region17: #{pcn_forward_pallas.1} parent=11 // pred_check
          %p640 = pneg %p108
        $region18: #{pcn_forward_pallas.1} parent=11 // pred_check_branch
          %642 = sbr.rel (%p640) target = $region20
        $region19: #{pcn_forward_pallas.1} parent=11 // pred_region
          _
        $region20: #{pcn_forward_pallas.1} parent=11 // pred_fallthru
          _
        // Predicated region
        $region21: #{pcn_forward_pallas.1} parent=11 // pred_check
          %p643 = pneg %p129
        $region22: #{pcn_forward_pallas.1} parent=11 // pred_check_branch
          %645 = sbr.rel (%p643) target = $region24
        $region23: #{pcn_forward_pallas.1} parent=11 // pred_region
          _
        $region24: #{pcn_forward_pallas.1} parent=11 // pred_fallthru
          _
        // Predicated region
        $region25: #{pcn_forward_pallas.1} parent=11 // pred_check
          %p646 = pneg %p150
        $region26: #{pcn_forward_pallas.1} parent=11 // pred_check_branch
          %648 = sbr.rel (%p646) target = $region28
        $region27: #{pcn_forward_pallas.1} parent=11 // pred_region
          _
        $region28: #{pcn_forward_pallas.1} parent=11 // pred_fallthru
          _
        // Predicated region
        $region29: #{pcn_forward_pallas.1} parent=11 // pred_check
          %p649 = pneg %p171
        $region30: #{pcn_forward_pallas.1} parent=11 // pred_check_branch
          %651 = sbr.rel (%p649) target = $region32
        $region31: #{pcn_forward_pallas.1} parent=11 // pred_region
          %653 = vsyncadd [#allocation3], 0
          %s654 = sshll.u32 %s5, 4
          %s655 = int_to_ptr.hbm [resolvable:$true] %s654
          %s656 = sshll.u32 [#allocation2], 4
          %s657 = int_to_ptr.vmem [resolvable:$true] %s656
          %662 = dma.hbm_to_vmem [thread:$0]  %s655, 8192, %s657, [#allocation3], 256, 256, 16
        $region32: #{pcn_forward_pallas.1} parent=11 // pred_fallthru
          _
        // Predicated region
        $region33: #{pcn_forward_pallas.1} parent=11 // pred_check
          %p663 = pneg %p192
        $region34: #{pcn_forward_pallas.1} parent=11 // pred_check_branch
          %665 = sbr.rel (%p663) target = $region36
        $region35: #{pcn_forward_pallas.1} parent=11 // pred_region
          %667 = vsyncadd [#allocation5], 0
          %s668 = sshll.u32 %s6, 4
          %s669 = int_to_ptr.hbm [resolvable:$true] %s668
          %s670 = sshll.u32 [#allocation4], 4
          %s671 = int_to_ptr.vmem [resolvable:$true] %s670
          %676 = dma.hbm_to_vmem [thread:$0]  %s669, 8192, %s671, [#allocation5], 256, 256, 16
        $region36: #{pcn_forward_pallas.1} parent=11 // pred_fallthru
          _
        // Predicated region
        $region37: #{pcn_forward_pallas.1} parent=11 // pred_check
          %p677 = pneg %p213
        $region38: #{pcn_forward_pallas.1} parent=11 // pred_check_branch
          %679 = sbr.rel (%p677) target = $region40
        $region39: #{pcn_forward_pallas.1} parent=11 // pred_region
          _
        $region40: #{pcn_forward_pallas.1} parent=11 // pred_fallthru
          _
        // Predicated region
        $region41: #{pcn_forward_pallas.1} parent=11 // pred_check
          %p680 = pneg %p234
        $region42: #{pcn_forward_pallas.1} parent=11 // pred_check_branch
          %682 = sbr.rel (%p680) target = $region44
        $region43: #{pcn_forward_pallas.1} parent=11 // pred_region
          %684 = vsyncadd [#allocation5], 0
          %s685 = sshll.u32 %s8, 4
          %s686 = int_to_ptr.hbm [resolvable:$true] %s685
          %s687 = sshll.u32 [#allocation6], 4
          %s688 = int_to_ptr.vmem [resolvable:$true] %s687
          %693 = dma.hbm_to_vmem [thread:$0]  %s686, 4096, %s688, [#allocation5], 64, 64, 4
        $region44: #{pcn_forward_pallas.1} parent=11 // pred_fallthru
          _
        // Predicated region
        $region45: #{pcn_forward_pallas.1} parent=11 // pred_check
          %p694 = pneg %p255
        $region46: #{pcn_forward_pallas.1} parent=11 // pred_check_branch
          %696 = sbr.rel (%p694) target = $region48
        $region47: #{pcn_forward_pallas.1} parent=11 // pred_region
          _
        $region48: #{pcn_forward_pallas.1} parent=11 // pred_fallthru
          _
        // Predicated region
        $region49: #{pcn_forward_pallas.1} parent=11 // pred_check
          %p697 = pneg %p276
        $region50: #{pcn_forward_pallas.1} parent=11 // pred_check_branch
          %699 = sbr.rel (%p697) target = $region52
        $region51: #{pcn_forward_pallas.1} parent=11 // pred_region
          %701 = vsyncadd [#allocation8], 0
          %s702 = sshll.u32 %s10, 4
          %s703 = int_to_ptr.hbm [resolvable:$true] %s702
          %s704 = sshll.u32 [#allocation7], 4
          %s705 = int_to_ptr.vmem [resolvable:$true] %s704
          %710 = dma.hbm_to_vmem [thread:$0]  %s703, 1024, %s705, [#allocation8], 64, 64, 4
        $region52: #{pcn_forward_pallas.1} parent=11 // pred_fallthru
          _
        // Predicated region
        $region53: #{pcn_forward_pallas.1} parent=11 // pred_check
          %p711 = pneg %p297
        $region54: #{pcn_forward_pallas.1} parent=11 // pred_check_branch
          %713 = sbr.rel (%p711) target = $region56
        $region55: #{pcn_forward_pallas.1} parent=11 // pred_region
          _
        $region56: #{pcn_forward_pallas.1} parent=11 // pred_fallthru
          _
        // Predicated region
        $region57: #{pcn_forward_pallas.1} parent=11 // pred_check
          %p714 = pneg %p318
        $region58: #{pcn_forward_pallas.1} parent=11 // pred_check_branch
          %716 = sbr.rel (%p714) target = $region60
        $region59: #{pcn_forward_pallas.1} parent=11 // pred_region
          %718 = vsyncadd [#allocation8], 0
          %s719 = sshll.u32 %s12, 4
          %s720 = int_to_ptr.hbm [resolvable:$true] %s719
          %s721 = sshll.u32 [#allocation9], 4
          %s722 = int_to_ptr.vmem [resolvable:$true] %s721
          %727 = dma.hbm_to_vmem [thread:$0]  %s720, 1024, %s722, [#allocation8], 64, 64, 4
        $region60: #{pcn_forward_pallas.1} parent=11 // pred_fallthru
          _
        // Predicated region
        $region61: #{pcn_forward_pallas.1} parent=11 // pred_check
          %p728 = pneg %p339
        $region62: #{pcn_forward_pallas.1} parent=11 // pred_check_branch
          %730 = sbr.rel (%p728) target = $region64
        $region63: #{pcn_forward_pallas.1} parent=11 // pred_region
          _
        $region64: #{pcn_forward_pallas.1} parent=11 // pred_fallthru
          _
        // Predicated region
        $region65: #{pcn_forward_pallas.1} parent=11 // pred_check
          %p731 = pneg %p360
        $region66: #{pcn_forward_pallas.1} parent=11 // pred_check_branch
          %733 = sbr.rel (%p731) target = $region68
        $region67: #{pcn_forward_pallas.1} parent=11 // pred_region
          %735 = vsyncadd [#allocation11], 0
          %s736 = sshll.u32 %s14, 4
          %s737 = int_to_ptr.hbm [resolvable:$true] %s736
          %s738 = sshll.u32 [#allocation10], 4
          %s739 = int_to_ptr.vmem [resolvable:$true] %s738
          %744 = dma.hbm_to_vmem [thread:$0]  %s737, 1024, %s739, [#allocation11], 64, 64, 4
        $region68: #{pcn_forward_pallas.1} parent=11 // pred_fallthru
          _
        // Predicated region
        $region69: #{pcn_forward_pallas.1} parent=11 // pred_check
          %p745 = pneg %p381
        $region70: #{pcn_forward_pallas.1} parent=11 // pred_check_branch
          %747 = sbr.rel (%p745) target = $region72
        $region71: #{pcn_forward_pallas.1} parent=11 // pred_region
          _
        $region72: #{pcn_forward_pallas.1} parent=11 // pred_fallthru
          _
        // Predicated region
        $region73: #{pcn_forward_pallas.1} parent=11 // pred_check
          %p748 = pneg %p402
        $region74: #{pcn_forward_pallas.1} parent=11 // pred_check_branch
          %750 = sbr.rel (%p748) target = $region76
        $region75: #{pcn_forward_pallas.1} parent=11 // pred_region
          %752 = vsyncadd [#allocation11], 0
          %s753 = sshll.u32 %s16, 4
          %s754 = int_to_ptr.hbm [resolvable:$true] %s753
          %s755 = sshll.u32 [#allocation12], 4
          %s756 = int_to_ptr.vmem [resolvable:$true] %s755
          %761 = dma.hbm_to_vmem [thread:$0]  %s754, 1024, %s756, [#allocation11], 128, 128, 8
        $region76: #{pcn_forward_pallas.1} parent=11 // pred_fallthru
          _
        // Predicated region
        $region77: #{pcn_forward_pallas.1} parent=11 // pred_check
          %p762 = pneg %p423
        $region78: #{pcn_forward_pallas.1} parent=11 // pred_check_branch
          %764 = sbr.rel (%p762) target = $region80
        $region79: #{pcn_forward_pallas.1} parent=11 // pred_region
          %766 = vsyncadd [#allocation14], 0
          %s767 = sshll.u32 %s17, 4
          %s768 = int_to_ptr.hbm [resolvable:$true] %s767
          %s769 = sshll.u32 [#allocation13], 4
          %s770 = int_to_ptr.vmem [resolvable:$true] %s769
          %775 = dma.hbm_to_vmem [thread:$0]  %s768, 2048, %s770, [#allocation14], 128, 128, 8
        $region80: #{pcn_forward_pallas.1} parent=11 // pred_fallthru
          _
        // Predicated region
        $region81: #{pcn_forward_pallas.1} parent=11 // pred_check
          %p776 = pneg %p444
        $region82: #{pcn_forward_pallas.1} parent=11 // pred_check_branch
          %778 = sbr.rel (%p776) target = $region84
        $region83: #{pcn_forward_pallas.1} parent=11 // pred_region
          %780 = vsyncadd [#allocation14], 0
          %s781 = sshll.u32 %s18, 4
          %s782 = int_to_ptr.hbm [resolvable:$true] %s781
          %s783 = sshll.u32 [#allocation15], 4
          %s784 = int_to_ptr.vmem [resolvable:$true] %s783
          %789 = dma.hbm_to_vmem [thread:$0]  %s782, 2048, %s784, [#allocation14], 128, 128, 8
        $region84: #{pcn_forward_pallas.1} parent=11 // pred_fallthru
          _
        // Predicated region
        $region85: #{pcn_forward_pallas.1} parent=11 // pred_check
          %p790 = pneg %p465
        $region86: #{pcn_forward_pallas.1} parent=11 // pred_check_branch
          %792 = sbr.rel (%p790) target = $region88
        $region87: #{pcn_forward_pallas.1} parent=11 // pred_region
          %794 = vsyncadd [#allocation17], 0
          %s795 = sshll.u32 %s19, 4
          %s796 = int_to_ptr.hbm [resolvable:$true] %s795
          %s797 = sshll.u32 [#allocation16], 4
          %s798 = int_to_ptr.vmem [resolvable:$true] %s797
          %803 = dma.hbm_to_vmem [thread:$0]  %s796, 2048, %s798, [#allocation17], 256, 256, 16
        $region88: #{pcn_forward_pallas.1} parent=11 // pred_fallthru
          _
        // Predicated region
        $region89: #{pcn_forward_pallas.1} parent=11 // pred_check
          %p804 = pneg %p486
        $region90: #{pcn_forward_pallas.1} parent=11 // pred_check_branch
          %806 = sbr.rel (%p804) target = $region92
        $region91: #{pcn_forward_pallas.1} parent=11 // pred_region
          %808 = vsyncadd [#allocation17], 0
          %s809 = sshll.u32 %s20, 4
          %s810 = int_to_ptr.hbm [resolvable:$true] %s809
          %s811 = sshll.u32 [#allocation18], 4
          %s812 = int_to_ptr.vmem [resolvable:$true] %s811
          %817 = dma.hbm_to_vmem [thread:$0]  %s810, 4096, %s812, [#allocation17], 128, 128, 8
        $region92: #{pcn_forward_pallas.1} parent=11 // pred_fallthru
          _
        // Predicated region
        $region93: #{pcn_forward_pallas.1} parent=11 // pred_check
          %p818 = pneg %p507
        $region94: #{pcn_forward_pallas.1} parent=11 // pred_check_branch
          %820 = sbr.rel (%p818) target = $region96
        $region95: #{pcn_forward_pallas.1} parent=11 // pred_region
          _
        $region96: #{pcn_forward_pallas.1} parent=11 // pred_fallthru
          _
        // Predicated region
        $region97: #{pcn_forward_pallas.1} parent=11 // pred_check
          %p821 = pneg %p528
        $region98: #{pcn_forward_pallas.1} parent=11 // pred_check_branch
          %823 = sbr.rel (%p821) target = $region100
        $region99: #{pcn_forward_pallas.1} parent=11 // pred_region
          %825 = vsyncadd [#allocation20], 0
          %s826 = sshll.u32 %s22, 4
          %s827 = int_to_ptr.hbm [resolvable:$true] %s826
          %s828 = sshll.u32 [#allocation19], 4
          %s829 = int_to_ptr.vmem [resolvable:$true] %s828
          %834 = dma.hbm_to_vmem [thread:$0]  %s827, 2048, %s829, [#allocation20], 64, 64, 4
        $region100: #{pcn_forward_pallas.1} parent=11 // pred_fallthru
          _
        // Predicated region
        $region101: #{pcn_forward_pallas.1} parent=11 // pred_check
          %p835 = pneg %p549
        $region102: #{pcn_forward_pallas.1} parent=11 // pred_check_branch
          %837 = sbr.rel (%p835) target = $region104
        $region103: #{pcn_forward_pallas.1} parent=11 // pred_region
          _
        $region104: #{pcn_forward_pallas.1} parent=11 // pred_fallthru
          _
        // Predicated region
        $region105: #{pcn_forward_pallas.1} parent=11 // pred_check
          %p838 = pneg %p570
        $region106: #{pcn_forward_pallas.1} parent=11 // pred_check_branch
          %840 = sbr.rel (%p838) target = $region108
        $region107: #{pcn_forward_pallas.1} parent=11 // pred_region
          %842 = vsyncadd [#allocation20], 0
          %s843 = sshll.u32 %s24, 4
          %s844 = int_to_ptr.hbm [resolvable:$true] %s843
          %s845 = sshll.u32 [#allocation21], 4
          %s846 = int_to_ptr.vmem [resolvable:$true] %s845
          %851 = dma.hbm_to_vmem [thread:$0]  %s844, 2048, %s846, [#allocation20], 128, 128, 8
        $region108: #{pcn_forward_pallas.1} parent=11 // pred_fallthru
          _
      $region12: #{pcn_forward_pallas.1} parent=5 // pred_fallthru
        _
      %p852 = scmp.lt.s32.totalorder %s40, 2
      // Predicated region
      $region109: #{pcn_forward_pallas.1} parent=5 // pred_check
        %p853 = pneg %p852
      $region110: #{pcn_forward_pallas.1} parent=5 // pred_check_branch
        %855 = sbr.rel (%p853) target = $region112
      $region111: #{pcn_forward_pallas.1} parent=5 // pred_region
        // Predicated region
        $region113: #{pcn_forward_pallas.1} parent=111 // pred_check
          %p856 = pneg %p60
        $region114: #{pcn_forward_pallas.1} parent=111 // pred_check_branch
          %858 = sbr.rel (%p856) target = $region116
        $region115: #{pcn_forward_pallas.1} parent=111 // pred_region
          %p859 = scmp.lt.s32.totalorder %s40, 1
          %s860 = scalar_select %p859, %s40, 1
          %s861 = smul.addr %s860, 8
          %s862 = smul.addr %s861, 8
          %s863 = scalar_lea.vmem %s0, %s862
        $region116: #{pcn_forward_pallas.1} parent=111 // pred_fallthru
          _
      $region112: #{pcn_forward_pallas.1} parent=5 // pred_fallthru
        _
      %p864 = scmp.le.s32.totalorder 1, %s40
      %p865 = scmp.lt.s32.totalorder %s40, 3
      %p866 = pnand %p864, %p865
      %p867 = pneg %p866
      // Predicated region
      $region117: #{pcn_forward_pallas.1} parent=5 // pred_check
        _
      $region118: #{pcn_forward_pallas.1} parent=5 // pred_check_branch
        %869 = sbr.rel (%p866) target = $region120
      $region119: #{pcn_forward_pallas.1} parent=5 // pred_region
        %s870 = ssub.s32 %s40, 1
        // Predicated region
        $region121: #{pcn_forward_pallas.1} parent=119 // pred_check
          %p871 = pneg %p171
        $region122: #{pcn_forward_pallas.1} parent=119 // pred_check_branch
          %873 = sbr.rel (%p871) target = $region124
        $region123: #{pcn_forward_pallas.1} parent=119 // pred_region
          %875 = dma.done [#allocation3], 8192
        $region124: #{pcn_forward_pallas.1} parent=119 // pred_fallthru
          _
        // Predicated region
        $region125: #{pcn_forward_pallas.1} parent=119 // pred_check
          %p876 = pneg %p192
        $region126: #{pcn_forward_pallas.1} parent=119 // pred_check_branch
          %878 = sbr.rel (%p876) target = $region128
        $region127: #{pcn_forward_pallas.1} parent=119 // pred_region
          %880 = dma.done [#allocation5], 8192
        $region128: #{pcn_forward_pallas.1} parent=119 // pred_fallthru
          _
        // Predicated region
        $region129: #{pcn_forward_pallas.1} parent=119 // pred_check
          %p881 = pneg %p234
        $region130: #{pcn_forward_pallas.1} parent=119 // pred_check_branch
          %883 = sbr.rel (%p881) target = $region132
        $region131: #{pcn_forward_pallas.1} parent=119 // pred_region
          %885 = dma.done [#allocation5], 4096
        $region132: #{pcn_forward_pallas.1} parent=119 // pred_fallthru
          _
        // Predicated region
        $region133: #{pcn_forward_pallas.1} parent=119 // pred_check
          %p886 = pneg %p276
        $region134: #{pcn_forward_pallas.1} parent=119 // pred_check_branch
          %888 = sbr.rel (%p886) target = $region136
        $region135: #{pcn_forward_pallas.1} parent=119 // pred_region
          %890 = dma.done [#allocation8], 1024
        $region136: #{pcn_forward_pallas.1} parent=119 // pred_fallthru
          _
        // Predicated region
        $region137: #{pcn_forward_pallas.1} parent=119 // pred_check
          %p891 = pneg %p318
        $region138: #{pcn_forward_pallas.1} parent=119 // pred_check_branch
          %893 = sbr.rel (%p891) target = $region140
        $region139: #{pcn_forward_pallas.1} parent=119 // pred_region
          %895 = dma.done [#allocation8], 1024
        $region140: #{pcn_forward_pallas.1} parent=119 // pred_fallthru
          _
        // Predicated region
        $region141: #{pcn_forward_pallas.1} parent=119 // pred_check
          %p896 = pneg %p360
        $region142: #{pcn_forward_pallas.1} parent=119 // pred_check_branch
          %898 = sbr.rel (%p896) target = $region144
        $region143: #{pcn_forward_pallas.1} parent=119 // pred_region
          %900 = dma.done [#allocation11], 1024
        $region144: #{pcn_forward_pallas.1} parent=119 // pred_fallthru
          _
        // Predicated region
        $region145: #{pcn_forward_pallas.1} parent=119 // pred_check
          %p901 = pneg %p402
        $region146: #{pcn_forward_pallas.1} parent=119 // pred_check_branch
          %903 = sbr.rel (%p901) target = $region148
        $region147: #{pcn_forward_pallas.1} parent=119 // pred_region
          %905 = dma.done [#allocation11], 1024
        $region148: #{pcn_forward_pallas.1} parent=119 // pred_fallthru
          _
        // Predicated region
        $region149: #{pcn_forward_pallas.1} parent=119 // pred_check
          %p906 = pneg %p423
        $region150: #{pcn_forward_pallas.1} parent=119 // pred_check_branch
          %908 = sbr.rel (%p906) target = $region152
        $region151: #{pcn_forward_pallas.1} parent=119 // pred_region
          %910 = dma.done [#allocation14], 2048
        $region152: #{pcn_forward_pallas.1} parent=119 // pred_fallthru
          _
        // Predicated region
        $region153: #{pcn_forward_pallas.1} parent=119 // pred_check
          %p911 = pneg %p444
        $region154: #{pcn_forward_pallas.1} parent=119 // pred_check_branch
          %913 = sbr.rel (%p911) target = $region156
        $region155: #{pcn_forward_pallas.1} parent=119 // pred_region
          %915 = dma.done [#allocation14], 2048
        $region156: #{pcn_forward_pallas.1} parent=119 // pred_fallthru
          _
        // Predicated region
        $region157: #{pcn_forward_pallas.1} parent=119 // pred_check
          %p916 = pneg %p465
        $region158: #{pcn_forward_pallas.1} parent=119 // pred_check_branch
          %918 = sbr.rel (%p916) target = $region160
        $region159: #{pcn_forward_pallas.1} parent=119 // pred_region
          %920 = dma.done [#allocation17], 2048
        $region160: #{pcn_forward_pallas.1} parent=119 // pred_fallthru
          _
        // Predicated region
        $region161: #{pcn_forward_pallas.1} parent=119 // pred_check
          %p921 = pneg %p486
        $region162: #{pcn_forward_pallas.1} parent=119 // pred_check_branch
          %923 = sbr.rel (%p921) target = $region164
        $region163: #{pcn_forward_pallas.1} parent=119 // pred_region
          %925 = dma.done [#allocation17], 4096
        $region164: #{pcn_forward_pallas.1} parent=119 // pred_fallthru
          _
        // Predicated region
        $region165: #{pcn_forward_pallas.1} parent=119 // pred_check
          %p926 = pneg %p528
        $region166: #{pcn_forward_pallas.1} parent=119 // pred_check_branch
          %928 = sbr.rel (%p926) target = $region168
        $region167: #{pcn_forward_pallas.1} parent=119 // pred_region
          %930 = dma.done [#allocation20], 2048
        $region168: #{pcn_forward_pallas.1} parent=119 // pred_fallthru
          _
        // Predicated region
        $region169: #{pcn_forward_pallas.1} parent=119 // pred_check
          %p931 = pneg %p570
        $region170: #{pcn_forward_pallas.1} parent=119 // pred_check_branch
          %933 = sbr.rel (%p931) target = $region172
        $region171: #{pcn_forward_pallas.1} parent=119 // pred_region
          %935 = dma.done [#allocation20], 2048
        $region172: #{pcn_forward_pallas.1} parent=119 // pred_fallthru
          _
        %p936 = scmp.lt.s32.totalorder %s45, 1
        %s937 = scalar_select %p936, %s45, 1
        %s938 = smul.addr %s937, 8
        %s939 = smul.addr %s938, 8
        %s940 = scalar_lea.vmem %s0, %s939
        %p941 = pneg %p66
        %p942 = pneg %p63
        %p943 = pneg %p87
        %p944 = pneg %p84
        %p945 = pneg %p108
        %p946 = pneg %p105
        %p947 = pneg %p129
        %p948 = pneg %p126
        %p949 = pneg %p150
        %p950 = pneg %p147
        %p951 = pneg %p171
        %p952 = pneg %p168
        %p953 = pneg %p192
        %p954 = pneg %p189
        %p955 = pneg %p213
        %p956 = pneg %p210
        %p957 = pneg %p234
        %p958 = pneg %p231
        %p959 = pneg %p255
        %p960 = pneg %p252
        %p961 = pneg %p276
        %p962 = pneg %p273
        %p963 = pneg %p297
        %p964 = pneg %p294
        %p965 = pneg %p318
        %p966 = pneg %p315
        %p967 = pneg %p339
        %p968 = pneg %p336
        %p969 = pneg %p360
        %p970 = pneg %p357
        %p971 = pneg %p381
        %p972 = pneg %p378
        %p973 = pneg %p402
        %p974 = pneg %p399
        %p975 = pneg %p423
        %p976 = pneg %p420
        %p977 = pneg %p444
        %p978 = pneg %p441
        %p979 = pneg %p465
        %p980 = pneg %p462
        %p981 = pneg %p486
        %p982 = pneg %p483
        %p983 = pneg %p507
        %p984 = pneg %p504
        %p985 = pneg %p528
        %p986 = pneg %p525
        %p987 = pneg %p549
        %p988 = pneg %p546
        %p989 = pneg %p570
        %p990 = pneg %p567
        %p991 = pneg %p596
        %p992 = pneg %p593
        %p993 = scmp.lt.s32.totalorder %s45, 1
        %s994 = scalar_select %p993, %s45, 1
        %s995 = scalar_lea.vmem %s25, %s994
        %p996 = pneg %p622
        %p997 = pneg %p619
        %p998 = scmp.lt.s32.totalorder %s45, 1
        %s999 = scalar_select %p998, %s45, 1
        %s1000 = smul.addr %s999, 8
        %s1001 = smul.addr %s1000, 8
        %s1002 = scalar_lea.vmem %s26, %s1001
        %p1003 = scmp.lt.s32.totalorder %s45, 1
        %s1004 = scalar_select %p1003, %s45, 1
        %s1005 = smul.addr %s1004, 8
        %s1006 = smul.addr %s1005, 8
        %s1007 = scalar_lea.vmem %s0, %s1006
        %p1008 = scmp.lt.s32.totalorder %s45, 1
        %s1009 = scalar_select %p1008, %s45, 1
        %s1010 = scalar_lea.vmem %s25, %s1009
        %p1011 = scmp.lt.s32.totalorder %s45, 1
        %s1012 = scalar_select %p1011, %s45, 1
        %s1013 = smul.addr %s1012, 8
        %s1014 = smul.addr %s1013, 8
        %s1015 = scalar_lea.vmem %s26, %s1014
        %v1016 = vld [vmem:[%s1007] sm:$0xff]
        %v1017 = vld [vmem:[%s1007 + $0x8] sm:$0xff]
        %v1018 = vld [vmem:[%s1007 + $0x10] sm:$0xff]
        %v1019 = vld [vmem:[%s1007 + $0x18] sm:$0xff]
        %v1020 = vld [vmem:[%s1007 + $0x20] sm:$0xff]
        %v1021 = vld [vmem:[%s1007 + $0x28] sm:$0xff]
        %v1022 = vld [vmem:[%s1007 + $0x30] sm:$0xff]
        %v1023 = vld [vmem:[%s1007 + $0x38] sm:$0xff]
        %v1024 = vld [vmem:[%s1] sm:$0x7]
        %1026 = vset.pattern.permute.xlu0 0
        %1027 = vperm.xlu0 %1026, %v1016
        %v1028 = vpop.permute.xlu0 %1027
        %1031 = vset.pattern.permute.xlu0 0
        %1032 = vperm.xlu0 %1031, %v1017
        %v1033 = vpop.permute.xlu0 %1032
        %1036 = vset.pattern.permute.xlu0 0
        %1037 = vperm.xlu0 %1036, %v1018
        %v1038 = vpop.permute.xlu0 %1037
        %1041 = vset.pattern.permute.xlu0 0
        %1042 = vperm.xlu0 %1041, %v1019
        %v1043 = vpop.permute.xlu0 %1042
        %1046 = vset.pattern.permute.xlu0 0
        %1047 = vperm.xlu0 %1046, %v1020
        %v1048 = vpop.permute.xlu0 %1047
        %1051 = vset.pattern.permute.xlu0 0
        %1052 = vperm.xlu0 %1051, %v1021
        %v1053 = vpop.permute.xlu0 %1052
        %1056 = vset.pattern.permute.xlu0 0
        %1057 = vperm.xlu0 %1056, %v1022
        %v1058 = vpop.permute.xlu0 %1057
        %1061 = vset.pattern.permute.xlu0 0
        %1062 = vperm.xlu0 %1061, %v1023
        %v1063 = vpop.permute.xlu0 %1062
        %v1065 = vperm.slane %v1024, 0
        %v1066 = vmul.f32 %v1028, %v1065
        %v1067 = vmul.f32 %v1033, %v1065
        %v1068 = vmul.f32 %v1038, %v1065
        %v1069 = vmul.f32 %v1043, %v1065
        %v1070 = vmul.f32 %v1048, %v1065
        %v1071 = vmul.f32 %v1053, %v1065
        %v1072 = vmul.f32 %v1058, %v1065
        %v1073 = vmul.f32 %v1063, %v1065
        %1074 = vset.pattern.permute.xlu0 1
        %1075 = vperm.xlu0 %1074, %v1016
        %v1076 = vpop.permute.xlu0 %1075
        %1078 = vset.pattern.permute.xlu0 1
        %1079 = vperm.xlu0 %1078, %v1017
        %v1080 = vpop.permute.xlu0 %1079
        %1082 = vset.pattern.permute.xlu0 1
        %1083 = vperm.xlu0 %1082, %v1018
        %v1084 = vpop.permute.xlu0 %1083
        %1086 = vset.pattern.permute.xlu0 1
        %1087 = vperm.xlu0 %1086, %v1019
        %v1088 = vpop.permute.xlu0 %1087
        %1090 = vset.pattern.permute.xlu0 1
        %1091 = vperm.xlu0 %1090, %v1020
        %v1092 = vpop.permute.xlu0 %1091
        %1094 = vset.pattern.permute.xlu0 1
        %1095 = vperm.xlu0 %1094, %v1021
        %v1096 = vpop.permute.xlu0 %1095
        %1098 = vset.pattern.permute.xlu0 1
        %1099 = vperm.xlu0 %1098, %v1022
        %v1100 = vpop.permute.xlu0 %1099
        %1102 = vset.pattern.permute.xlu0 1
        %1103 = vperm.xlu0 %1102, %v1023
        %v1104 = vpop.permute.xlu0 %1103
        %v1106 = vperm.slane %v1024, 1
        %v1107 = vmul.f32 %v1076, %v1106
        %v1108 = vmul.f32 %v1080, %v1106
        %v1109 = vmul.f32 %v1084, %v1106
        %v1110 = vmul.f32 %v1088, %v1106
        %v1111 = vmul.f32 %v1092, %v1106
        %v1112 = vmul.f32 %v1096, %v1106
        %v1113 = vmul.f32 %v1100, %v1106
        %v1114 = vmul.f32 %v1104, %v1106
        %v1115 = vadd.f32 %v1066, %v1107
        %v1116 = vadd.f32 %v1067, %v1108
        %v1117 = vadd.f32 %v1068, %v1109
        %v1118 = vadd.f32 %v1069, %v1110
        %v1119 = vadd.f32 %v1070, %v1111
        %v1120 = vadd.f32 %v1071, %v1112
        %v1121 = vadd.f32 %v1072, %v1113
        %v1122 = vadd.f32 %v1073, %v1114
        %1123 = vset.pattern.permute.xlu0 2
        %1124 = vperm.xlu0 %1123, %v1016
        %v1125 = vpop.permute.xlu0 %1124
        %1127 = vset.pattern.permute.xlu0 2
        %1128 = vperm.xlu0 %1127, %v1017
        %v1129 = vpop.permute.xlu0 %1128
        %1131 = vset.pattern.permute.xlu0 2
        %1132 = vperm.xlu0 %1131, %v1018
        %v1133 = vpop.permute.xlu0 %1132
        %1135 = vset.pattern.permute.xlu0 2
        %1136 = vperm.xlu0 %1135, %v1019
        %v1137 = vpop.permute.xlu0 %1136
        %1139 = vset.pattern.permute.xlu0 2
        %1140 = vperm.xlu0 %1139, %v1020
        %v1141 = vpop.permute.xlu0 %1140
        %1143 = vset.pattern.permute.xlu0 2
        %1144 = vperm.xlu0 %1143, %v1021
        %v1145 = vpop.permute.xlu0 %1144
        %1147 = vset.pattern.permute.xlu0 2
        %1148 = vperm.xlu0 %1147, %v1022
        %v1149 = vpop.permute.xlu0 %1148
        %1151 = vset.pattern.permute.xlu0 2
        %1152 = vperm.xlu0 %1151, %v1023
        %v1153 = vpop.permute.xlu0 %1152
        %v1155 = vperm.slane %v1024, 2
        %v1156 = vmul.f32 %v1125, %v1155
        %v1157 = vmul.f32 %v1129, %v1155
        %v1158 = vmul.f32 %v1133, %v1155
        %v1159 = vmul.f32 %v1137, %v1155
        %v1160 = vmul.f32 %v1141, %v1155
        %v1161 = vmul.f32 %v1145, %v1155
        %v1162 = vmul.f32 %v1149, %v1155
        %v1163 = vmul.f32 %v1153, %v1155
        %v1164 = vadd.f32 %v1115, %v1156
        %v1165 = vadd.f32 %v1116, %v1157
        %v1166 = vadd.f32 %v1117, %v1158
        %v1167 = vadd.f32 %v1118, %v1159
        %v1168 = vadd.f32 %v1119, %v1160
        %v1169 = vadd.f32 %v1120, %v1161
        %v1170 = vadd.f32 %v1121, %v1162
        %v1171 = vadd.f32 %v1122, %v1163
        %v1172 = vld [vmem:[%s2] sm:$0x1]
        %v1174 = vperm.slane %v1172, 0
        %v1176 = vadd.f32 %v1164, %v1174
        %v1177 = vadd.f32 %v1165, %v1174
        %v1178 = vadd.f32 %v1166, %v1174
        %v1179 = vadd.f32 %v1167, %v1174
        %v1180 = vadd.f32 %v1168, %v1174
        %v1181 = vadd.f32 %v1169, %v1174
        %v1182 = vadd.f32 %v1170, %v1174
        %v1183 = vadd.f32 %v1171, %v1174
        %v1184 = vmax.f32 %v1176, 0.0
        %v1185 = vmax.f32 %v1177, 0.0
        %v1186 = vmax.f32 %v1178, 0.0
        %v1187 = vmax.f32 %v1179, 0.0
        %v1188 = vmax.f32 %v1180, 0.0
        %v1189 = vmax.f32 %v1181, 0.0
        %v1190 = vmax.f32 %v1182, 0.0
        %v1191 = vmax.f32 %v1183, 0.0
        %v1192 = vld [vmem:[%s3] sm:$0xff]
        %v1193 = vld [vmem:[%s3 + $0x8] sm:$0xff]
        %v1194 = vld [vmem:[%s3 + $0x10] sm:$0xff]
        %v1195 = vld [vmem:[%s3 + $0x18] sm:$0xff]
        %v1196 = vld [vmem:[%s3 + $0x20] sm:$0xff]
        %v1197 = vld [vmem:[%s3 + $0x28] sm:$0xff]
        %v1198 = vld [vmem:[%s3 + $0x30] sm:$0xff]
        %v1199 = vld [vmem:[%s3 + $0x38] sm:$0xff]
        %v1200 = vld [vmem:[%s3 + $0x40] sm:$0xff]
        %v1201 = vld [vmem:[%s3 + $0x48] sm:$0xff]
        %v1202 = vld [vmem:[%s3 + $0x50] sm:$0xff]
        %v1203 = vld [vmem:[%s3 + $0x58] sm:$0xff]
        %v1204 = vld [vmem:[%s3 + $0x60] sm:$0xff]
        %v1205 = vld [vmem:[%s3 + $0x68] sm:$0xff]
        %v1206 = vld [vmem:[%s3 + $0x70] sm:$0xff]
        %v1207 = vld [vmem:[%s3 + $0x78] sm:$0xff]
        %v1208 = vunpack.c.l.bf16 %v1192
        %v1209 = vunpack.c.h.bf16 %v1192
        %v1210 = vunpack.c.l.bf16 %v1193
        %v1211 = vunpack.c.h.bf16 %v1193
        %v1212 = vunpack.c.l.bf16 %v1194
        %v1213 = vunpack.c.h.bf16 %v1194
        %v1214 = vunpack.c.l.bf16 %v1195
        %v1215 = vunpack.c.h.bf16 %v1195
        %v1216 = vunpack.c.l.bf16 %v1196
        %v1217 = vunpack.c.h.bf16 %v1196
        %v1218 = vunpack.c.l.bf16 %v1197
        %v1219 = vunpack.c.h.bf16 %v1197
        %v1220 = vunpack.c.l.bf16 %v1198
        %v1221 = vunpack.c.h.bf16 %v1198
        %v1222 = vunpack.c.l.bf16 %v1199
        %v1223 = vunpack.c.h.bf16 %v1199
        %v1224 = vunpack.c.l.bf16 %v1200
        %v1225 = vunpack.c.h.bf16 %v1200
        %v1226 = vunpack.c.l.bf16 %v1201
        %v1227 = vunpack.c.h.bf16 %v1201
        %v1228 = vunpack.c.l.bf16 %v1202
        %v1229 = vunpack.c.h.bf16 %v1202
        %v1230 = vunpack.c.l.bf16 %v1203
        %v1231 = vunpack.c.h.bf16 %v1203
        %v1232 = vunpack.c.l.bf16 %v1204
        %v1233 = vunpack.c.h.bf16 %v1204
        %v1234 = vunpack.c.l.bf16 %v1205
        %v1235 = vunpack.c.h.bf16 %v1205
        %v1236 = vunpack.c.l.bf16 %v1206
        %v1237 = vunpack.c.h.bf16 %v1206
        %v1238 = vunpack.c.l.bf16 %v1207
        %v1239 = vunpack.c.h.bf16 %v1207
        %v1240 = vld [vmem:[%s4] sm:$0x3]
        %v1242 = vperm.slane %v1240, 0
        %v1243 = vperm.slane %v1240, 1
        %1246 = vmatpush.msra.mxu0 %v1238
        %1247 = vmatpush.msra.mxu0 %v1236
        %1248 = vmatpush.msra.mxu0 %v1234
        %1249 = vmatpush.msra.mxu0 %v1232
        %1250 = vmatpush.msra.mxu0 %v1230
        %1251 = vmatpush.msra.mxu0 %v1228
        %1252 = vmatpush.msra.mxu0 %v1226
        %1253 = vmatpush.msra.mxu0 %v1224
        %1254 = vmatpush.msra.mxu0 %v1222
        %1255 = vmatpush.msra.mxu0 %v1220
        %1256 = vmatpush.msra.mxu0 %v1218
        %1257 = vmatpush.msra.mxu0 %v1216
        %1258 = vmatpush.msra.mxu0 %v1214
        %1259 = vmatpush.msra.mxu0 %v1212
        %1260 = vmatpush.msra.mxu0 %v1210
        %1261 = vmatpush.msra.mxu0 %v1208
        %1262 = vmatmul.f32.gmra.mxu0 %v1184
        %v1263 = vpop.f32.mrf.mxu0
        %v1264 = vadd.f32 %v1242, %v1263
        %1265 = vmatmul.f32.gmra.mxu0 %v1185
        %v1266 = vpop.f32.mrf.mxu0
        %v1267 = vadd.f32 %v1242, %v1266
        %1268 = vmatmul.f32.gmra.mxu0 %v1186
        %v1269 = vpop.f32.mrf.mxu0
        %v1270 = vadd.f32 %v1242, %v1269
        %1271 = vmatmul.f32.gmra.mxu0 %v1187
        %v1272 = vpop.f32.mrf.mxu0
        %v1273 = vadd.f32 %v1242, %v1272
        %1274 = vmatmul.f32.gmra.mxu0 %v1188
        %v1275 = vpop.f32.mrf.mxu0
        %v1276 = vadd.f32 %v1242, %v1275
        %1277 = vmatmul.f32.gmra.mxu0 %v1189
        %v1278 = vpop.f32.mrf.mxu0
        %v1279 = vadd.f32 %v1242, %v1278
        %1280 = vmatmul.f32.gmra.mxu0 %v1190
        %v1281 = vpop.f32.mrf.mxu0
        %v1282 = vadd.f32 %v1242, %v1281
        %1283 = vmatmul.f32.gmra.mxu0 %v1191
        %v1284 = vpop.f32.mrf.mxu0
        %v1285 = vadd.f32 %v1242, %v1284
        %1286 = vdwg.mxu0
        %1287 = vmatpush.msra.mxu0 %v1239
        %1288 = vmatpush.msra.mxu0 %v1237
        %1289 = vmatpush.msra.mxu0 %v1235
        %1290 = vmatpush.msra.mxu0 %v1233
        %1291 = vmatpush.msra.mxu0 %v1231
        %1292 = vmatpush.msra.mxu0 %v1229
        %1293 = vmatpush.msra.mxu0 %v1227
        %1294 = vmatpush.msra.mxu0 %v1225
        %1295 = vmatpush.msra.mxu0 %v1223
        %1296 = vmatpush.msra.mxu0 %v1221
        %1297 = vmatpush.msra.mxu0 %v1219
        %1298 = vmatpush.msra.mxu0 %v1217
        %1299 = vmatpush.msra.mxu0 %v1215
        %1300 = vmatpush.msra.mxu0 %v1213
        %1301 = vmatpush.msra.mxu0 %v1211
        %1302 = vmatpush.msra.mxu0 %v1209
        %1303 = vmatmul.f32.gmra.mxu0 %v1184
        %v1304 = vpop.f32.mrf.mxu0
        %v1305 = vadd.f32 %v1243, %v1304
        %1306 = vmatmul.f32.gmra.mxu0 %v1185
        %v1307 = vpop.f32.mrf.mxu0
        %v1308 = vadd.f32 %v1243, %v1307
        %1309 = vmatmul.f32.gmra.mxu0 %v1186
        %v1310 = vpop.f32.mrf.mxu0
        %v1311 = vadd.f32 %v1243, %v1310
        %1312 = vmatmul.f32.gmra.mxu0 %v1187
        %v1313 = vpop.f32.mrf.mxu0
        %v1314 = vadd.f32 %v1243, %v1313
        %1315 = vmatmul.f32.gmra.mxu0 %v1188
        %v1316 = vpop.f32.mrf.mxu0
        %v1317 = vadd.f32 %v1243, %v1316
        %1318 = vmatmul.f32.gmra.mxu0 %v1189
        %v1319 = vpop.f32.mrf.mxu0
        %v1320 = vadd.f32 %v1243, %v1319
        %1321 = vmatmul.f32.gmra.mxu0 %v1190
        %v1322 = vpop.f32.mrf.mxu0
        %v1323 = vadd.f32 %v1243, %v1322
        %1324 = vmatmul.f32.gmra.mxu0 %v1191
        %v1325 = vpop.f32.mrf.mxu0
        %v1326 = vadd.f32 %v1243, %v1325
        %1327 = vdwg.mxu0
        %v1328 = vmax.f32 %v1264, %v1270
        %v1329 = vmax.f32 %v1267, %v1273
        %v1330 = vmax.f32 %v1328, %v1276
        %v1331 = vmax.f32 %v1329, %v1279
        %v1332 = vmax.f32 %v1330, %v1282
        %v1333 = vmax.f32 %v1331, %v1285
        %v1334 = vmax.f32 %v1332, %v1333
        %v1335 = vrot.slane %v1334, 4
        %v1336 = vmax.f32 %v1334, %v1335
        %v1337 = vrot.slane %v1336, 2
        %v1338 = vmax.f32 %v1336, %v1337
        %v1339 = vrot.slane %v1338, 1
        %v1340 = vmax.f32 %v1338, %v1339
        %v1341 = vmax.f32 %v1305, %v1311
        %v1342 = vmax.f32 %v1308, %v1314
        %v1343 = vmax.f32 %v1341, %v1317
        %v1344 = vmax.f32 %v1342, %v1320
        %v1345 = vmax.f32 %v1343, %v1323
        %v1346 = vmax.f32 %v1344, %v1326
        %v1347 = vmax.f32 %v1345, %v1346
        %v1348 = vrot.slane %v1347, 4
        %v1349 = vmax.f32 %v1347, %v1348
        %v1350 = vrot.slane %v1349, 2
        %v1351 = vmax.f32 %v1349, %v1350
        %v1352 = vrot.slane %v1351, 1
        %v1353 = vmax.f32 %v1351, %v1352
        %v1354 = vld [vmem:[#allocation2] sm:$0xff]
        %v1355 = vld [vmem:[#allocation2 + $0x8] sm:$0xff]
        %v1356 = vld [vmem:[#allocation2 + $0x10] sm:$0xff]
        %v1357 = vld [vmem:[#allocation2 + $0x18] sm:$0xff]
        %v1358 = vld [vmem:[#allocation2 + $0x20] sm:$0xff]
        %v1359 = vld [vmem:[#allocation2 + $0x28] sm:$0xff]
        %v1360 = vld [vmem:[#allocation2 + $0x30] sm:$0xff]
        %v1361 = vld [vmem:[#allocation2 + $0x38] sm:$0xff]
        %v1362 = vld [vmem:[#allocation2 + $0x40] sm:$0xff]
        %v1363 = vld [vmem:[#allocation2 + $0x48] sm:$0xff]
        %v1364 = vld [vmem:[#allocation2 + $0x50] sm:$0xff]
        %v1365 = vld [vmem:[#allocation2 + $0x58] sm:$0xff]
        %v1366 = vld [vmem:[#allocation2 + $0x60] sm:$0xff]
        %v1367 = vld [vmem:[#allocation2 + $0x68] sm:$0xff]
        %v1368 = vld [vmem:[#allocation2 + $0x70] sm:$0xff]
        %v1369 = vld [vmem:[#allocation2 + $0x78] sm:$0xff]
        %v1370 = vld [vmem:[#allocation2 + $0x80] sm:$0xff]
        %v1371 = vld [vmem:[#allocation2 + $0x88] sm:$0xff]
        %v1372 = vld [vmem:[#allocation2 + $0x90] sm:$0xff]
        %v1373 = vld [vmem:[#allocation2 + $0x98] sm:$0xff]
        %v1374 = vld [vmem:[#allocation2 + $0xa0] sm:$0xff]
        %v1375 = vld [vmem:[#allocation2 + $0xa8] sm:$0xff]
        %v1376 = vld [vmem:[#allocation2 + $0xb0] sm:$0xff]
        %v1377 = vld [vmem:[#allocation2 + $0xb8] sm:$0xff]
        %v1378 = vld [vmem:[#allocation2 + $0xc0] sm:$0xff]
        %v1379 = vld [vmem:[#allocation2 + $0xc8] sm:$0xff]
        %v1380 = vld [vmem:[#allocation2 + $0xd0] sm:$0xff]
        %v1381 = vld [vmem:[#allocation2 + $0xd8] sm:$0xff]
        %v1382 = vld [vmem:[#allocation2 + $0xe0] sm:$0xff]
        %v1383 = vld [vmem:[#allocation2 + $0xe8] sm:$0xff]
        %v1384 = vld [vmem:[#allocation2 + $0xf0] sm:$0xff]
        %v1385 = vld [vmem:[#allocation2 + $0xf8] sm:$0xff]
        %v1386 = vld [vmem:[#allocation2 + $0x100] sm:$0xff]
        %v1387 = vld [vmem:[#allocation2 + $0x108] sm:$0xff]
        %v1388 = vld [vmem:[#allocation2 + $0x110] sm:$0xff]
        %v1389 = vld [vmem:[#allocation2 + $0x118] sm:$0xff]
        %v1390 = vld [vmem:[#allocation2 + $0x120] sm:$0xff]
        %v1391 = vld [vmem:[#allocation2 + $0x128] sm:$0xff]
        %v1392 = vld [vmem:[#allocation2 + $0x130] sm:$0xff]
        %v1393 = vld [vmem:[#allocation2 + $0x138] sm:$0xff]
        %v1394 = vld [vmem:[#allocation2 + $0x140] sm:$0xff]
        %v1395 = vld [vmem:[#allocation2 + $0x148] sm:$0xff]
        %v1396 = vld [vmem:[#allocation2 + $0x150] sm:$0xff]
        %v1397 = vld [vmem:[#allocation2 + $0x158] sm:$0xff]
        %v1398 = vld [vmem:[#allocation2 + $0x160] sm:$0xff]
        %v1399 = vld [vmem:[#allocation2 + $0x168] sm:$0xff]
        %v1400 = vld [vmem:[#allocation2 + $0x170] sm:$0xff]
        %v1401 = vld [vmem:[#allocation2 + $0x178] sm:$0xff]
        %v1402 = vld [vmem:[#allocation2 + $0x180] sm:$0xff]
        %v1403 = vld [vmem:[#allocation2 + $0x188] sm:$0xff]
        %v1404 = vld [vmem:[#allocation2 + $0x190] sm:$0xff]
        %v1405 = vld [vmem:[#allocation2 + $0x198] sm:$0xff]
        %v1406 = vld [vmem:[#allocation2 + $0x1a0] sm:$0xff]
        %v1407 = vld [vmem:[#allocation2 + $0x1a8] sm:$0xff]
        %v1408 = vld [vmem:[#allocation2 + $0x1b0] sm:$0xff]
        %v1409 = vld [vmem:[#allocation2 + $0x1b8] sm:$0xff]
        %v1410 = vld [vmem:[#allocation2 + $0x1c0] sm:$0xff]
        %v1411 = vld [vmem:[#allocation2 + $0x1c8] sm:$0xff]
        %v1412 = vld [vmem:[#allocation2 + $0x1d0] sm:$0xff]
        %v1413 = vld [vmem:[#allocation2 + $0x1d8] sm:$0xff]
        %v1414 = vld [vmem:[#allocation2 + $0x1e0] sm:$0xff]
        %v1415 = vld [vmem:[#allocation2 + $0x1e8] sm:$0xff]
        %v1416 = vld [vmem:[#allocation2 + $0x1f0] sm:$0xff]
        %v1417 = vld [vmem:[#allocation2 + $0x1f8] sm:$0xff]
        %v1418 = vunpack.c.l.bf16 %v1354
        %v1419 = vunpack.c.h.bf16 %v1354
        %v1420 = vunpack.c.l.bf16 %v1355
        %v1421 = vunpack.c.h.bf16 %v1355
        %v1422 = vunpack.c.l.bf16 %v1356
        %v1423 = vunpack.c.h.bf16 %v1356
        %v1424 = vunpack.c.l.bf16 %v1357
        %v1425 = vunpack.c.h.bf16 %v1357
        %v1426 = vunpack.c.l.bf16 %v1358
        %v1427 = vunpack.c.h.bf16 %v1358
        %v1428 = vunpack.c.l.bf16 %v1359
        %v1429 = vunpack.c.h.bf16 %v1359
        %v1430 = vunpack.c.l.bf16 %v1360
        %v1431 = vunpack.c.h.bf16 %v1360
        %v1432 = vunpack.c.l.bf16 %v1361
        %v1433 = vunpack.c.h.bf16 %v1361
        %v1434 = vunpack.c.l.bf16 %v1362
        %v1435 = vunpack.c.h.bf16 %v1362
        %v1436 = vunpack.c.l.bf16 %v1363
        %v1437 = vunpack.c.h.bf16 %v1363
        %v1438 = vunpack.c.l.bf16 %v1364
        %v1439 = vunpack.c.h.bf16 %v1364
        %v1440 = vunpack.c.l.bf16 %v1365
        %v1441 = vunpack.c.h.bf16 %v1365
        %v1442 = vunpack.c.l.bf16 %v1366
        %v1443 = vunpack.c.h.bf16 %v1366
        %v1444 = vunpack.c.l.bf16 %v1367
        %v1445 = vunpack.c.h.bf16 %v1367
        %v1446 = vunpack.c.l.bf16 %v1368
        %v1447 = vunpack.c.h.bf16 %v1368
        %v1448 = vunpack.c.l.bf16 %v1369
        %v1449 = vunpack.c.h.bf16 %v1369
        %v1450 = vunpack.c.l.bf16 %v1370
        %v1451 = vunpack.c.h.bf16 %v1370
        %v1452 = vunpack.c.l.bf16 %v1371
        %v1453 = vunpack.c.h.bf16 %v1371
        %v1454 = vunpack.c.l.bf16 %v1372
        %v1455 = vunpack.c.h.bf16 %v1372
        %v1456 = vunpack.c.l.bf16 %v1373
        %v1457 = vunpack.c.h.bf16 %v1373
        %v1458 = vunpack.c.l.bf16 %v1374
        %v1459 = vunpack.c.h.bf16 %v1374
        %v1460 = vunpack.c.l.bf16 %v1375
        %v1461 = vunpack.c.h.bf16 %v1375
        %v1462 = vunpack.c.l.bf16 %v1376
        %v1463 = vunpack.c.h.bf16 %v1376
        %v1464 = vunpack.c.l.bf16 %v1377
        %v1465 = vunpack.c.h.bf16 %v1377
        %v1466 = vunpack.c.l.bf16 %v1378
        %v1467 = vunpack.c.h.bf16 %v1378
        %v1468 = vunpack.c.l.bf16 %v1379
        %v1469 = vunpack.c.h.bf16 %v1379
        %v1470 = vunpack.c.l.bf16 %v1380
        %v1471 = vunpack.c.h.bf16 %v1380
        %v1472 = vunpack.c.l.bf16 %v1381
        %v1473 = vunpack.c.h.bf16 %v1381
        %v1474 = vunpack.c.l.bf16 %v1382
        %v1475 = vunpack.c.h.bf16 %v1382
        %v1476 = vunpack.c.l.bf16 %v1383
        %v1477 = vunpack.c.h.bf16 %v1383
        %v1478 = vunpack.c.l.bf16 %v1384
        %v1479 = vunpack.c.h.bf16 %v1384
        %v1480 = vunpack.c.l.bf16 %v1385
        %v1481 = vunpack.c.h.bf16 %v1385
        %v1482 = vunpack.c.l.bf16 %v1386
        %v1483 = vunpack.c.h.bf16 %v1386
        %v1484 = vunpack.c.l.bf16 %v1387
        %v1485 = vunpack.c.h.bf16 %v1387
        %v1486 = vunpack.c.l.bf16 %v1388
        %v1487 = vunpack.c.h.bf16 %v1388
        %v1488 = vunpack.c.l.bf16 %v1389
        %v1489 = vunpack.c.h.bf16 %v1389
        %v1490 = vunpack.c.l.bf16 %v1390
        %v1491 = vunpack.c.h.bf16 %v1390
        %v1492 = vunpack.c.l.bf16 %v1391
        %v1493 = vunpack.c.h.bf16 %v1391
        %v1494 = vunpack.c.l.bf16 %v1392
        %v1495 = vunpack.c.h.bf16 %v1392
        %v1496 = vunpack.c.l.bf16 %v1393
        %v1497 = vunpack.c.h.bf16 %v1393
        %v1498 = vunpack.c.l.bf16 %v1394
        %v1499 = vunpack.c.h.bf16 %v1394
        %v1500 = vunpack.c.l.bf16 %v1395
        %v1501 = vunpack.c.h.bf16 %v1395
        %v1502 = vunpack.c.l.bf16 %v1396
        %v1503 = vunpack.c.h.bf16 %v1396
        %v1504 = vunpack.c.l.bf16 %v1397
        %v1505 = vunpack.c.h.bf16 %v1397
        %v1506 = vunpack.c.l.bf16 %v1398
        %v1507 = vunpack.c.h.bf16 %v1398
        %v1508 = vunpack.c.l.bf16 %v1399
        %v1509 = vunpack.c.h.bf16 %v1399
        %v1510 = vunpack.c.l.bf16 %v1400
        %v1511 = vunpack.c.h.bf16 %v1400
        %v1512 = vunpack.c.l.bf16 %v1401
        %v1513 = vunpack.c.h.bf16 %v1401
        %v1514 = vunpack.c.l.bf16 %v1402
        %v1515 = vunpack.c.h.bf16 %v1402
        %v1516 = vunpack.c.l.bf16 %v1403
        %v1517 = vunpack.c.h.bf16 %v1403
        %v1518 = vunpack.c.l.bf16 %v1404
        %v1519 = vunpack.c.h.bf16 %v1404
        %v1520 = vunpack.c.l.bf16 %v1405
        %v1521 = vunpack.c.h.bf16 %v1405
        %v1522 = vunpack.c.l.bf16 %v1406
        %v1523 = vunpack.c.h.bf16 %v1406
        %v1524 = vunpack.c.l.bf16 %v1407
        %v1525 = vunpack.c.h.bf16 %v1407
        %v1526 = vunpack.c.l.bf16 %v1408
        %v1527 = vunpack.c.h.bf16 %v1408
        %v1528 = vunpack.c.l.bf16 %v1409
        %v1529 = vunpack.c.h.bf16 %v1409
        %v1530 = vunpack.c.l.bf16 %v1410
        %v1531 = vunpack.c.h.bf16 %v1410
        %v1532 = vunpack.c.l.bf16 %v1411
        %v1533 = vunpack.c.h.bf16 %v1411
        %v1534 = vunpack.c.l.bf16 %v1412
        %v1535 = vunpack.c.h.bf16 %v1412
        %v1536 = vunpack.c.l.bf16 %v1413
        %v1537 = vunpack.c.h.bf16 %v1413
        %v1538 = vunpack.c.l.bf16 %v1414
        %v1539 = vunpack.c.h.bf16 %v1414
        %v1540 = vunpack.c.l.bf16 %v1415
        %v1541 = vunpack.c.h.bf16 %v1415
        %v1542 = vunpack.c.l.bf16 %v1416
        %v1543 = vunpack.c.h.bf16 %v1416
        %v1544 = vunpack.c.l.bf16 %v1417
        %v1545 = vunpack.c.h.bf16 %v1417
        %v1546 = vld [vmem:[#allocation4] sm:$0xff]
        %v1547 = vld [vmem:[#allocation4 + $0x8] sm:$0xff]
        %v1548 = vld [vmem:[#allocation4 + $0x10] sm:$0xff]
        %v1549 = vld [vmem:[#allocation4 + $0x18] sm:$0xff]
        %v1550 = vld [vmem:[#allocation4 + $0x20] sm:$0xff]
        %v1551 = vld [vmem:[#allocation4 + $0x28] sm:$0xff]
        %v1552 = vld [vmem:[#allocation4 + $0x30] sm:$0xff]
        %v1553 = vld [vmem:[#allocation4 + $0x38] sm:$0xff]
        %v1554 = vld [vmem:[#allocation4 + $0x40] sm:$0xff]
        %v1555 = vld [vmem:[#allocation4 + $0x48] sm:$0xff]
        %v1556 = vld [vmem:[#allocation4 + $0x50] sm:$0xff]
        %v1557 = vld [vmem:[#allocation4 + $0x58] sm:$0xff]
        %v1558 = vld [vmem:[#allocation4 + $0x60] sm:$0xff]
        %v1559 = vld [vmem:[#allocation4 + $0x68] sm:$0xff]
        %v1560 = vld [vmem:[#allocation4 + $0x70] sm:$0xff]
        %v1561 = vld [vmem:[#allocation4 + $0x78] sm:$0xff]
        %v1562 = vld [vmem:[#allocation4 + $0x80] sm:$0xff]
        %v1563 = vld [vmem:[#allocation4 + $0x88] sm:$0xff]
        %v1564 = vld [vmem:[#allocation4 + $0x90] sm:$0xff]
        %v1565 = vld [vmem:[#allocation4 + $0x98] sm:$0xff]
        %v1566 = vld [vmem:[#allocation4 + $0xa0] sm:$0xff]
        %v1567 = vld [vmem:[#allocation4 + $0xa8] sm:$0xff]
        %v1568 = vld [vmem:[#allocation4 + $0xb0] sm:$0xff]
        %v1569 = vld [vmem:[#allocation4 + $0xb8] sm:$0xff]
        %v1570 = vld [vmem:[#allocation4 + $0xc0] sm:$0xff]
        %v1571 = vld [vmem:[#allocation4 + $0xc8] sm:$0xff]
        %v1572 = vld [vmem:[#allocation4 + $0xd0] sm:$0xff]
        %v1573 = vld [vmem:[#allocation4 + $0xd8] sm:$0xff]
        %v1574 = vld [vmem:[#allocation4 + $0xe0] sm:$0xff]
        %v1575 = vld [vmem:[#allocation4 + $0xe8] sm:$0xff]
        %v1576 = vld [vmem:[#allocation4 + $0xf0] sm:$0xff]
        %v1577 = vld [vmem:[#allocation4 + $0xf8] sm:$0xff]
        %v1578 = vld [vmem:[#allocation4 + $0x100] sm:$0xff]
        %v1579 = vld [vmem:[#allocation4 + $0x108] sm:$0xff]
        %v1580 = vld [vmem:[#allocation4 + $0x110] sm:$0xff]
        %v1581 = vld [vmem:[#allocation4 + $0x118] sm:$0xff]
        %v1582 = vld [vmem:[#allocation4 + $0x120] sm:$0xff]
        %v1583 = vld [vmem:[#allocation4 + $0x128] sm:$0xff]
        %v1584 = vld [vmem:[#allocation4 + $0x130] sm:$0xff]
        %v1585 = vld [vmem:[#allocation4 + $0x138] sm:$0xff]
        %v1586 = vld [vmem:[#allocation4 + $0x140] sm:$0xff]
        %v1587 = vld [vmem:[#allocation4 + $0x148] sm:$0xff]
        %v1588 = vld [vmem:[#allocation4 + $0x150] sm:$0xff]
        %v1589 = vld [vmem:[#allocation4 + $0x158] sm:$0xff]
        %v1590 = vld [vmem:[#allocation4 + $0x160] sm:$0xff]
        %v1591 = vld [vmem:[#allocation4 + $0x168] sm:$0xff]
        %v1592 = vld [vmem:[#allocation4 + $0x170] sm:$0xff]
        %v1593 = vld [vmem:[#allocation4 + $0x178] sm:$0xff]
        %v1594 = vld [vmem:[#allocation4 + $0x180] sm:$0xff]
        %v1595 = vld [vmem:[#allocation4 + $0x188] sm:$0xff]
        %v1596 = vld [vmem:[#allocation4 + $0x190] sm:$0xff]
        %v1597 = vld [vmem:[#allocation4 + $0x198] sm:$0xff]
        %v1598 = vld [vmem:[#allocation4 + $0x1a0] sm:$0xff]
        %v1599 = vld [vmem:[#allocation4 + $0x1a8] sm:$0xff]
        %v1600 = vld [vmem:[#allocation4 + $0x1b0] sm:$0xff]
        %v1601 = vld [vmem:[#allocation4 + $0x1b8] sm:$0xff]
        %v1602 = vld [vmem:[#allocation4 + $0x1c0] sm:$0xff]
        %v1603 = vld [vmem:[#allocation4 + $0x1c8] sm:$0xff]
        %v1604 = vld [vmem:[#allocation4 + $0x1d0] sm:$0xff]
        %v1605 = vld [vmem:[#allocation4 + $0x1d8] sm:$0xff]
        %v1606 = vld [vmem:[#allocation4 + $0x1e0] sm:$0xff]
        %v1607 = vld [vmem:[#allocation4 + $0x1e8] sm:$0xff]
        %v1608 = vld [vmem:[#allocation4 + $0x1f0] sm:$0xff]
        %v1609 = vld [vmem:[#allocation4 + $0x1f8] sm:$0xff]
        %v1610 = vunpack.c.l.bf16 %v1546
        %v1611 = vunpack.c.h.bf16 %v1546
        %v1612 = vunpack.c.l.bf16 %v1547
        %v1613 = vunpack.c.h.bf16 %v1547
        %v1614 = vunpack.c.l.bf16 %v1548
        %v1615 = vunpack.c.h.bf16 %v1548
        %v1616 = vunpack.c.l.bf16 %v1549
        %v1617 = vunpack.c.h.bf16 %v1549
        %v1618 = vunpack.c.l.bf16 %v1550
        %v1619 = vunpack.c.h.bf16 %v1550
        %v1620 = vunpack.c.l.bf16 %v1551
        %v1621 = vunpack.c.h.bf16 %v1551
        %v1622 = vunpack.c.l.bf16 %v1552
        %v1623 = vunpack.c.h.bf16 %v1552
        %v1624 = vunpack.c.l.bf16 %v1553
        %v1625 = vunpack.c.h.bf16 %v1553
        %v1626 = vunpack.c.l.bf16 %v1554
        %v1627 = vunpack.c.h.bf16 %v1554
        %v1628 = vunpack.c.l.bf16 %v1555
        %v1629 = vunpack.c.h.bf16 %v1555
        %v1630 = vunpack.c.l.bf16 %v1556
        %v1631 = vunpack.c.h.bf16 %v1556
        %v1632 = vunpack.c.l.bf16 %v1557
        %v1633 = vunpack.c.h.bf16 %v1557
        %v1634 = vunpack.c.l.bf16 %v1558
        %v1635 = vunpack.c.h.bf16 %v1558
        %v1636 = vunpack.c.l.bf16 %v1559
        %v1637 = vunpack.c.h.bf16 %v1559
        %v1638 = vunpack.c.l.bf16 %v1560
        %v1639 = vunpack.c.h.bf16 %v1560
        %v1640 = vunpack.c.l.bf16 %v1561
        %v1641 = vunpack.c.h.bf16 %v1561
        %v1642 = vunpack.c.l.bf16 %v1562
        %v1643 = vunpack.c.h.bf16 %v1562
        %v1644 = vunpack.c.l.bf16 %v1563
        %v1645 = vunpack.c.h.bf16 %v1563
        %v1646 = vunpack.c.l.bf16 %v1564
        %v1647 = vunpack.c.h.bf16 %v1564
        %v1648 = vunpack.c.l.bf16 %v1565
        %v1649 = vunpack.c.h.bf16 %v1565
        %v1650 = vunpack.c.l.bf16 %v1566
        %v1651 = vunpack.c.h.bf16 %v1566
        %v1652 = vunpack.c.l.bf16 %v1567
        %v1653 = vunpack.c.h.bf16 %v1567
        %v1654 = vunpack.c.l.bf16 %v1568
        %v1655 = vunpack.c.h.bf16 %v1568
        %v1656 = vunpack.c.l.bf16 %v1569
        %v1657 = vunpack.c.h.bf16 %v1569
        %v1658 = vunpack.c.l.bf16 %v1570
        %v1659 = vunpack.c.h.bf16 %v1570
        %v1660 = vunpack.c.l.bf16 %v1571
        %v1661 = vunpack.c.h.bf16 %v1571
        %v1662 = vunpack.c.l.bf16 %v1572
        %v1663 = vunpack.c.h.bf16 %v1572
        %v1664 = vunpack.c.l.bf16 %v1573
        %v1665 = vunpack.c.h.bf16 %v1573
        %v1666 = vunpack.c.l.bf16 %v1574
        %v1667 = vunpack.c.h.bf16 %v1574
        %v1668 = vunpack.c.l.bf16 %v1575
        %v1669 = vunpack.c.h.bf16 %v1575
        %v1670 = vunpack.c.l.bf16 %v1576
        %v1671 = vunpack.c.h.bf16 %v1576
        %v1672 = vunpack.c.l.bf16 %v1577
        %v1673 = vunpack.c.h.bf16 %v1577
        %v1674 = vunpack.c.l.bf16 %v1578
        %v1675 = vunpack.c.h.bf16 %v1578
        %v1676 = vunpack.c.l.bf16 %v1579
        %v1677 = vunpack.c.h.bf16 %v1579
        %v1678 = vunpack.c.l.bf16 %v1580
        %v1679 = vunpack.c.h.bf16 %v1580
        %v1680 = vunpack.c.l.bf16 %v1581
        %v1681 = vunpack.c.h.bf16 %v1581
        %v1682 = vunpack.c.l.bf16 %v1582
        %v1683 = vunpack.c.h.bf16 %v1582
        %v1684 = vunpack.c.l.bf16 %v1583
        %v1685 = vunpack.c.h.bf16 %v1583
        %v1686 = vunpack.c.l.bf16 %v1584
        %v1687 = vunpack.c.h.bf16 %v1584
        %v1688 = vunpack.c.l.bf16 %v1585
        %v1689 = vunpack.c.h.bf16 %v1585
        %v1690 = vunpack.c.l.bf16 %v1586
        %v1691 = vunpack.c.h.bf16 %v1586
        %v1692 = vunpack.c.l.bf16 %v1587
        %v1693 = vunpack.c.h.bf16 %v1587
        %v1694 = vunpack.c.l.bf16 %v1588
        %v1695 = vunpack.c.h.bf16 %v1588
        %v1696 = vunpack.c.l.bf16 %v1589
        %v1697 = vunpack.c.h.bf16 %v1589
        %v1698 = vunpack.c.l.bf16 %v1590
        %v1699 = vunpack.c.h.bf16 %v1590
        %v1700 = vunpack.c.l.bf16 %v1591
        %v1701 = vunpack.c.h.bf16 %v1591
        %v1702 = vunpack.c.l.bf16 %v1592
        %v1703 = vunpack.c.h.bf16 %v1592
        %v1704 = vunpack.c.l.bf16 %v1593
        %v1705 = vunpack.c.h.bf16 %v1593
        %v1706 = vunpack.c.l.bf16 %v1594
        %v1707 = vunpack.c.h.bf16 %v1594
        %v1708 = vunpack.c.l.bf16 %v1595
        %v1709 = vunpack.c.h.bf16 %v1595
        %v1710 = vunpack.c.l.bf16 %v1596
        %v1711 = vunpack.c.h.bf16 %v1596
        %v1712 = vunpack.c.l.bf16 %v1597
        %v1713 = vunpack.c.h.bf16 %v1597
        %v1714 = vunpack.c.l.bf16 %v1598
        %v1715 = vunpack.c.h.bf16 %v1598
        %v1716 = vunpack.c.l.bf16 %v1599
        %v1717 = vunpack.c.h.bf16 %v1599
        %v1718 = vunpack.c.l.bf16 %v1600
        %v1719 = vunpack.c.h.bf16 %v1600
        %v1720 = vunpack.c.l.bf16 %v1601
        %v1721 = vunpack.c.h.bf16 %v1601
        %v1722 = vunpack.c.l.bf16 %v1602
        %v1723 = vunpack.c.h.bf16 %v1602
        %v1724 = vunpack.c.l.bf16 %v1603
        %v1725 = vunpack.c.h.bf16 %v1603
        %v1726 = vunpack.c.l.bf16 %v1604
        %v1727 = vunpack.c.h.bf16 %v1604
        %v1728 = vunpack.c.l.bf16 %v1605
        %v1729 = vunpack.c.h.bf16 %v1605
        %v1730 = vunpack.c.l.bf16 %v1606
        %v1731 = vunpack.c.h.bf16 %v1606
        %v1732 = vunpack.c.l.bf16 %v1607
        %v1733 = vunpack.c.h.bf16 %v1607
        %v1734 = vunpack.c.l.bf16 %v1608
        %v1735 = vunpack.c.h.bf16 %v1608
        %v1736 = vunpack.c.l.bf16 %v1609
        %v1737 = vunpack.c.h.bf16 %v1609
        %1738 = vmatpush.msra.mxu0 %v1670
        %1739 = vmatpush.msra.mxu0 %v1666
        %1740 = vmatpush.msra.mxu0 %v1662
        %1741 = vmatpush.msra.mxu0 %v1658
        %1742 = vmatpush.msra.mxu0 %v1654
        %1743 = vmatpush.msra.mxu0 %v1650
        %1744 = vmatpush.msra.mxu0 %v1646
        %1745 = vmatpush.msra.mxu0 %v1642
        %1746 = vmatpush.msra.mxu0 %v1638
        %1747 = vmatpush.msra.mxu0 %v1634
        %1748 = vmatpush.msra.mxu0 %v1630
        %1749 = vmatpush.msra.mxu0 %v1626
        %1750 = vmatpush.msra.mxu0 %v1622
        %1751 = vmatpush.msra.mxu0 %v1618
        %1752 = vmatpush.msra.mxu0 %v1614
        %1753 = vmatpush.msra.mxu0 %v1610
        %1754 = vmatmul.f32.gmra.mxu0 %v1340
        %v1755 = vpop.f32.mrf.mxu0
        %v1756 = vadd.f32 0.0, %v1755
        %1757 = vdwg.mxu0
        %1758 = vmatpush.msra.mxu0 %v1734
        %1759 = vmatpush.msra.mxu0 %v1730
        %1760 = vmatpush.msra.mxu0 %v1726
        %1761 = vmatpush.msra.mxu0 %v1722
        %1762 = vmatpush.msra.mxu0 %v1718
        %1763 = vmatpush.msra.mxu0 %v1714
        %1764 = vmatpush.msra.mxu0 %v1710
        %1765 = vmatpush.msra.mxu0 %v1706
        %1766 = vmatpush.msra.mxu0 %v1702
        %1767 = vmatpush.msra.mxu0 %v1698
        %1768 = vmatpush.msra.mxu0 %v1694
        %1769 = vmatpush.msra.mxu0 %v1690
        %1770 = vmatpush.msra.mxu0 %v1686
        %1771 = vmatpush.msra.mxu0 %v1682
        %1772 = vmatpush.msra.mxu0 %v1678
        %1773 = vmatpush.msra.mxu0 %v1674
        %1774 = vmatmul.f32.gmra.mxu0 %v1353
        %v1775 = vpop.f32.mrf.mxu0
        %v1776 = vadd.f32 %v1756, %v1775
        %1777 = vdwg.mxu0
        %1778 = vmatpush.msra.mxu0 %v1671
        %1779 = vmatpush.msra.mxu0 %v1667
        %1780 = vmatpush.msra.mxu0 %v1663
        %1781 = vmatpush.msra.mxu0 %v1659
        %1782 = vmatpush.msra.mxu0 %v1655
        %1783 = vmatpush.msra.mxu0 %v1651
        %1784 = vmatpush.msra.mxu0 %v1647
        %1785 = vmatpush.msra.mxu0 %v1643
        %1786 = vmatpush.msra.mxu0 %v1639
        %1787 = vmatpush.msra.mxu0 %v1635
        %1788 = vmatpush.msra.mxu0 %v1631
        %1789 = vmatpush.msra.mxu0 %v1627
        %1790 = vmatpush.msra.mxu0 %v1623
        %1791 = vmatpush.msra.mxu0 %v1619
        %1792 = vmatpush.msra.mxu0 %v1615
        %1793 = vmatpush.msra.mxu0 %v1611
        %1794 = vmatmul.f32.gmra.mxu0 %v1340
        %v1795 = vpop.f32.mrf.mxu0
        %v1796 = vadd.f32 0.0, %v1795
        %1797 = vdwg.mxu0
        %1798 = vmatpush.msra.mxu0 %v1735
        %1799 = vmatpush.msra.mxu0 %v1731
        %1800 = vmatpush.msra.mxu0 %v1727
        %1801 = vmatpush.msra.mxu0 %v1723
        %1802 = vmatpush.msra.mxu0 %v1719
        %1803 = vmatpush.msra.mxu0 %v1715
        %1804 = vmatpush.msra.mxu0 %v1711
        %1805 = vmatpush.msra.mxu0 %v1707
        %1806 = vmatpush.msra.mxu0 %v1703
        %1807 = vmatpush.msra.mxu0 %v1699
        %1808 = vmatpush.msra.mxu0 %v1695
        %1809 = vmatpush.msra.mxu0 %v1691
        %1810 = vmatpush.msra.mxu0 %v1687
        %1811 = vmatpush.msra.mxu0 %v1683
        %1812 = vmatpush.msra.mxu0 %v1679
        %1813 = vmatpush.msra.mxu0 %v1675
        %1814 = vmatmul.f32.gmra.mxu0 %v1353
        %v1815 = vpop.f32.mrf.mxu0
        %v1816 = vadd.f32 %v1796, %v1815
        %1817 = vdwg.mxu0
        %1818 = vmatpush.msra.mxu0 %v1672
        %1819 = vmatpush.msra.mxu0 %v1668
        %1820 = vmatpush.msra.mxu0 %v1664
        %1821 = vmatpush.msra.mxu0 %v1660
        %1822 = vmatpush.msra.mxu0 %v1656
        %1823 = vmatpush.msra.mxu0 %v1652
        %1824 = vmatpush.msra.mxu0 %v1648
        %1825 = vmatpush.msra.mxu0 %v1644
        %1826 = vmatpush.msra.mxu0 %v1640
        %1827 = vmatpush.msra.mxu0 %v1636
        %1828 = vmatpush.msra.mxu0 %v1632
        %1829 = vmatpush.msra.mxu0 %v1628
        %1830 = vmatpush.msra.mxu0 %v1624
        %1831 = vmatpush.msra.mxu0 %v1620
        %1832 = vmatpush.msra.mxu0 %v1616
        %1833 = vmatpush.msra.mxu0 %v1612
        %1834 = vmatmul.f32.gmra.mxu0 %v1340
        %v1835 = vpop.f32.mrf.mxu0
        %v1836 = vadd.f32 0.0, %v1835
        %1837 = vdwg.mxu0
        %1838 = vmatpush.msra.mxu0 %v1736
        %1839 = vmatpush.msra.mxu0 %v1732
        %1840 = vmatpush.msra.mxu0 %v1728
        %1841 = vmatpush.msra.mxu0 %v1724
        %1842 = vmatpush.msra.mxu0 %v1720
        %1843 = vmatpush.msra.mxu0 %v1716
        %1844 = vmatpush.msra.mxu0 %v1712
        %1845 = vmatpush.msra.mxu0 %v1708
        %1846 = vmatpush.msra.mxu0 %v1704
        %1847 = vmatpush.msra.mxu0 %v1700
        %1848 = vmatpush.msra.mxu0 %v1696
        %1849 = vmatpush.msra.mxu0 %v1692
        %1850 = vmatpush.msra.mxu0 %v1688
        %1851 = vmatpush.msra.mxu0 %v1684
        %1852 = vmatpush.msra.mxu0 %v1680
        %1853 = vmatpush.msra.mxu0 %v1676
        %1854 = vmatmul.f32.gmra.mxu0 %v1353
        %v1855 = vpop.f32.mrf.mxu0
        %v1856 = vadd.f32 %v1836, %v1855
        %1857 = vdwg.mxu0
        %1858 = vmatpush.msra.mxu0 %v1673
        %1859 = vmatpush.msra.mxu0 %v1669
        %1860 = vmatpush.msra.mxu0 %v1665
        %1861 = vmatpush.msra.mxu0 %v1661
        %1862 = vmatpush.msra.mxu0 %v1657
        %1863 = vmatpush.msra.mxu0 %v1653
        %1864 = vmatpush.msra.mxu0 %v1649
        %1865 = vmatpush.msra.mxu0 %v1645
        %1866 = vmatpush.msra.mxu0 %v1641
        %1867 = vmatpush.msra.mxu0 %v1637
        %1868 = vmatpush.msra.mxu0 %v1633
        %1869 = vmatpush.msra.mxu0 %v1629
        %1870 = vmatpush.msra.mxu0 %v1625
        %1871 = vmatpush.msra.mxu0 %v1621
        %1872 = vmatpush.msra.mxu0 %v1617
        %1873 = vmatpush.msra.mxu0 %v1613
        %1874 = vmatmul.f32.gmra.mxu0 %v1340
        %v1875 = vpop.f32.mrf.mxu0
        %v1876 = vadd.f32 0.0, %v1875
        %1877 = vdwg.mxu0
        %1878 = vmatpush.msra.mxu0 %v1737
        %1879 = vmatpush.msra.mxu0 %v1733
        %1880 = vmatpush.msra.mxu0 %v1729
        %1881 = vmatpush.msra.mxu0 %v1725
        %1882 = vmatpush.msra.mxu0 %v1721
        %1883 = vmatpush.msra.mxu0 %v1717
        %1884 = vmatpush.msra.mxu0 %v1713
        %1885 = vmatpush.msra.mxu0 %v1709
        %1886 = vmatpush.msra.mxu0 %v1705
        %1887 = vmatpush.msra.mxu0 %v1701
        %1888 = vmatpush.msra.mxu0 %v1697
        %1889 = vmatpush.msra.mxu0 %v1693
        %1890 = vmatpush.msra.mxu0 %v1689
        %1891 = vmatpush.msra.mxu0 %v1685
        %1892 = vmatpush.msra.mxu0 %v1681
        %1893 = vmatpush.msra.mxu0 %v1677
        %1894 = vmatmul.f32.gmra.mxu0 %v1353
        %v1895 = vpop.f32.mrf.mxu0
        %v1896 = vadd.f32 %v1876, %v1895
        %1897 = vdwg.mxu0
        %v1898 = vperm.slane %v1776, 0
        %v1899 = vperm.slane %v1816, 0
        %v1900 = vperm.slane %v1856, 0
        %v1901 = vperm.slane %v1896, 0
        %1902 = vmatpush.msra.mxu0 %v1478
        %1903 = vmatpush.msra.mxu0 %v1474
        %1904 = vmatpush.msra.mxu0 %v1470
        %1905 = vmatpush.msra.mxu0 %v1466
        %1906 = vmatpush.msra.mxu0 %v1462
        %1907 = vmatpush.msra.mxu0 %v1458
        %1908 = vmatpush.msra.mxu0 %v1454
        %1909 = vmatpush.msra.mxu0 %v1450
        %1910 = vmatpush.msra.mxu0 %v1446
        %1911 = vmatpush.msra.mxu0 %v1442
        %1912 = vmatpush.msra.mxu0 %v1438
        %1913 = vmatpush.msra.mxu0 %v1434
        %1914 = vmatpush.msra.mxu0 %v1430
        %1915 = vmatpush.msra.mxu0 %v1426
        %1916 = vmatpush.msra.mxu0 %v1422
        %1917 = vmatpush.msra.mxu0 %v1418
        %1918 = vmatmul.f32.gmra.mxu0 %v1264
        %v1919 = vpop.f32.mrf.mxu0
        %v1920 = vadd.f32 %v1898, %v1919
        %1921 = vmatmul.f32.gmra.mxu0 %v1267
        %v1922 = vpop.f32.mrf.mxu0
        %v1923 = vadd.f32 %v1898, %v1922
        %1924 = vmatmul.f32.gmra.mxu0 %v1270
        %v1925 = vpop.f32.mrf.mxu0
        %v1926 = vadd.f32 %v1898, %v1925
        %1927 = vmatmul.f32.gmra.mxu0 %v1273
        %v1928 = vpop.f32.mrf.mxu0
        %v1929 = vadd.f32 %v1898, %v1928
        %1930 = vmatmul.f32.gmra.mxu0 %v1276
        %v1931 = vpop.f32.mrf.mxu0
        %v1932 = vadd.f32 %v1898, %v1931
        %1933 = vmatmul.f32.gmra.mxu0 %v1279
        %v1934 = vpop.f32.mrf.mxu0
        %v1935 = vadd.f32 %v1898, %v1934
        %1936 = vmatmul.f32.gmra.mxu0 %v1282
        %v1937 = vpop.f32.mrf.mxu0
        %v1938 = vadd.f32 %v1898, %v1937
        %1939 = vmatmul.f32.gmra.mxu0 %v1285
        %v1940 = vpop.f32.mrf.mxu0
        %v1941 = vadd.f32 %v1898, %v1940
        %1942 = vdwg.mxu0
        %1943 = vmatpush.msra.mxu0 %v1542
        %1944 = vmatpush.msra.mxu0 %v1538
        %1945 = vmatpush.msra.mxu0 %v1534
        %1946 = vmatpush.msra.mxu0 %v1530
        %1947 = vmatpush.msra.mxu0 %v1526
        %1948 = vmatpush.msra.mxu0 %v1522
        %1949 = vmatpush.msra.mxu0 %v1518
        %1950 = vmatpush.msra.mxu0 %v1514
        %1951 = vmatpush.msra.mxu0 %v1510
        %1952 = vmatpush.msra.mxu0 %v1506
        %1953 = vmatpush.msra.mxu0 %v1502
        %1954 = vmatpush.msra.mxu0 %v1498
        %1955 = vmatpush.msra.mxu0 %v1494
        %1956 = vmatpush.msra.mxu0 %v1490
        %1957 = vmatpush.msra.mxu0 %v1486
        %1958 = vmatpush.msra.mxu0 %v1482
        %1959 = vmatmul.f32.gmra.mxu0 %v1305
        %v1960 = vpop.f32.mrf.mxu0
        %v1961 = vadd.f32 %v1920, %v1960
        %1962 = vmatmul.f32.gmra.mxu0 %v1308
        %v1963 = vpop.f32.mrf.mxu0
        %v1964 = vadd.f32 %v1923, %v1963
        %1965 = vmatmul.f32.gmra.mxu0 %v1311
        %v1966 = vpop.f32.mrf.mxu0
        %v1967 = vadd.f32 %v1926, %v1966
        %1968 = vmatmul.f32.gmra.mxu0 %v1314
        %v1969 = vpop.f32.mrf.mxu0
        %v1970 = vadd.f32 %v1929, %v1969
        %1971 = vmatmul.f32.gmra.mxu0 %v1317
        %v1972 = vpop.f32.mrf.mxu0
        %v1973 = vadd.f32 %v1932, %v1972
        %1974 = vmatmul.f32.gmra.mxu0 %v1320
        %v1975 = vpop.f32.mrf.mxu0
        %v1976 = vadd.f32 %v1935, %v1975
        %1977 = vmatmul.f32.gmra.mxu0 %v1323
        %v1978 = vpop.f32.mrf.mxu0
        %v1979 = vadd.f32 %v1938, %v1978
        %1980 = vmatmul.f32.gmra.mxu0 %v1326
        %v1981 = vpop.f32.mrf.mxu0
        %v1982 = vadd.f32 %v1941, %v1981
        %1983 = vdwg.mxu0
        %1984 = vmatpush.msra.mxu0 %v1479
        %1985 = vmatpush.msra.mxu0 %v1475
        %1986 = vmatpush.msra.mxu0 %v1471
        %1987 = vmatpush.msra.mxu0 %v1467
        %1988 = vmatpush.msra.mxu0 %v1463
        %1989 = vmatpush.msra.mxu0 %v1459
        %1990 = vmatpush.msra.mxu0 %v1455
        %1991 = vmatpush.msra.mxu0 %v1451
        %1992 = vmatpush.msra.mxu0 %v1447
        %1993 = vmatpush.msra.mxu0 %v1443
        %1994 = vmatpush.msra.mxu0 %v1439
        %1995 = vmatpush.msra.mxu0 %v1435
        %1996 = vmatpush.msra.mxu0 %v1431
        %1997 = vmatpush.msra.mxu0 %v1427
        %1998 = vmatpush.msra.mxu0 %v1423
        %1999 = vmatpush.msra.mxu0 %v1419
        %2000 = vmatmul.f32.gmra.mxu0 %v1264
        %v2001 = vpop.f32.mrf.mxu0
        %v2002 = vadd.f32 %v1899, %v2001
        %2003 = vmatmul.f32.gmra.mxu0 %v1267
        %v2004 = vpop.f32.mrf.mxu0
        %v2005 = vadd.f32 %v1899, %v2004
        %2006 = vmatmul.f32.gmra.mxu0 %v1270
        %v2007 = vpop.f32.mrf.mxu0
        %v2008 = vadd.f32 %v1899, %v2007
        %2009 = vmatmul.f32.gmra.mxu0 %v1273
        %v2010 = vpop.f32.mrf.mxu0
        %v2011 = vadd.f32 %v1899, %v2010
        %2012 = vmatmul.f32.gmra.mxu0 %v1276
        %v2013 = vpop.f32.mrf.mxu0
        %v2014 = vadd.f32 %v1899, %v2013
        %2015 = vmatmul.f32.gmra.mxu0 %v1279
        %v2016 = vpop.f32.mrf.mxu0
        %v2017 = vadd.f32 %v1899, %v2016
        %2018 = vmatmul.f32.gmra.mxu0 %v1282
        %v2019 = vpop.f32.mrf.mxu0
        %v2020 = vadd.f32 %v1899, %v2019
        %2021 = vmatmul.f32.gmra.mxu0 %v1285
        %v2022 = vpop.f32.mrf.mxu0
        %v2023 = vadd.f32 %v1899, %v2022
        %2024 = vdwg.mxu0
        %2025 = vmatpush.msra.mxu0 %v1543
        %2026 = vmatpush.msra.mxu0 %v1539
        %2027 = vmatpush.msra.mxu0 %v1535
        %2028 = vmatpush.msra.mxu0 %v1531
        %2029 = vmatpush.msra.mxu0 %v1527
        %2030 = vmatpush.msra.mxu0 %v1523
        %2031 = vmatpush.msra.mxu0 %v1519
        %2032 = vmatpush.msra.mxu0 %v1515
        %2033 = vmatpush.msra.mxu0 %v1511
        %2034 = vmatpush.msra.mxu0 %v1507
        %2035 = vmatpush.msra.mxu0 %v1503
        %2036 = vmatpush.msra.mxu0 %v1499
        %2037 = vmatpush.msra.mxu0 %v1495
        %2038 = vmatpush.msra.mxu0 %v1491
        %2039 = vmatpush.msra.mxu0 %v1487
        %2040 = vmatpush.msra.mxu0 %v1483
        %2041 = vmatmul.f32.gmra.mxu0 %v1305
        %v2042 = vpop.f32.mrf.mxu0
        %v2043 = vadd.f32 %v2002, %v2042
        %2044 = vmatmul.f32.gmra.mxu0 %v1308
        %v2045 = vpop.f32.mrf.mxu0
        %v2046 = vadd.f32 %v2005, %v2045
        %2047 = vmatmul.f32.gmra.mxu0 %v1311
        %v2048 = vpop.f32.mrf.mxu0
        %v2049 = vadd.f32 %v2008, %v2048
        %2050 = vmatmul.f32.gmra.mxu0 %v1314
        %v2051 = vpop.f32.mrf.mxu0
        %v2052 = vadd.f32 %v2011, %v2051
        %2053 = vmatmul.f32.gmra.mxu0 %v1317
        %v2054 = vpop.f32.mrf.mxu0
        %v2055 = vadd.f32 %v2014, %v2054
        %2056 = vmatmul.f32.gmra.mxu0 %v1320
        %v2057 = vpop.f32.mrf.mxu0
        %v2058 = vadd.f32 %v2017, %v2057
        %2059 = vmatmul.f32.gmra.mxu0 %v1323
        %v2060 = vpop.f32.mrf.mxu0
        %v2061 = vadd.f32 %v2020, %v2060
        %2062 = vmatmul.f32.gmra.mxu0 %v1326
        %v2063 = vpop.f32.mrf.mxu0
        %v2064 = vadd.f32 %v2023, %v2063
        %2065 = vdwg.mxu0
        %2066 = vmatpush.msra.mxu0 %v1480
        %2067 = vmatpush.msra.mxu0 %v1476
        %2068 = vmatpush.msra.mxu0 %v1472
        %2069 = vmatpush.msra.mxu0 %v1468
        %2070 = vmatpush.msra.mxu0 %v1464
        %2071 = vmatpush.msra.mxu0 %v1460
        %2072 = vmatpush.msra.mxu0 %v1456
        %2073 = vmatpush.msra.mxu0 %v1452
        %2074 = vmatpush.msra.mxu0 %v1448
        %2075 = vmatpush.msra.mxu0 %v1444
        %2076 = vmatpush.msra.mxu0 %v1440
        %2077 = vmatpush.msra.mxu0 %v1436
        %2078 = vmatpush.msra.mxu0 %v1432
        %2079 = vmatpush.msra.mxu0 %v1428
        %2080 = vmatpush.msra.mxu0 %v1424
        %2081 = vmatpush.msra.mxu0 %v1420
        %2082 = vmatmul.f32.gmra.mxu0 %v1264
        %v2083 = vpop.f32.mrf.mxu0
        %v2084 = vadd.f32 %v1900, %v2083
        %2085 = vmatmul.f32.gmra.mxu0 %v1267
        %v2086 = vpop.f32.mrf.mxu0
        %v2087 = vadd.f32 %v1900, %v2086
        %2088 = vmatmul.f32.gmra.mxu0 %v1270
        %v2089 = vpop.f32.mrf.mxu0
        %v2090 = vadd.f32 %v1900, %v2089
        %2091 = vmatmul.f32.gmra.mxu0 %v1273
        %v2092 = vpop.f32.mrf.mxu0
        %v2093 = vadd.f32 %v1900, %v2092
        %2094 = vmatmul.f32.gmra.mxu0 %v1276
        %v2095 = vpop.f32.mrf.mxu0
        %v2096 = vadd.f32 %v1900, %v2095
        %2097 = vmatmul.f32.gmra.mxu0 %v1279
        %v2098 = vpop.f32.mrf.mxu0
        %v2099 = vadd.f32 %v1900, %v2098
        %2100 = vmatmul.f32.gmra.mxu0 %v1282
        %v2101 = vpop.f32.mrf.mxu0
        %v2102 = vadd.f32 %v1900, %v2101
        %2103 = vmatmul.f32.gmra.mxu0 %v1285
        %v2104 = vpop.f32.mrf.mxu0
        %v2105 = vadd.f32 %v1900, %v2104
        %2106 = vdwg.mxu0
        %2107 = vmatpush.msra.mxu0 %v1544
        %2108 = vmatpush.msra.mxu0 %v1540
        %2109 = vmatpush.msra.mxu0 %v1536
        %2110 = vmatpush.msra.mxu0 %v1532
        %2111 = vmatpush.msra.mxu0 %v1528
        %2112 = vmatpush.msra.mxu0 %v1524
        %2113 = vmatpush.msra.mxu0 %v1520
        %2114 = vmatpush.msra.mxu0 %v1516
        %2115 = vmatpush.msra.mxu0 %v1512
        %2116 = vmatpush.msra.mxu0 %v1508
        %2117 = vmatpush.msra.mxu0 %v1504
        %2118 = vmatpush.msra.mxu0 %v1500
        %2119 = vmatpush.msra.mxu0 %v1496
        %2120 = vmatpush.msra.mxu0 %v1492
        %2121 = vmatpush.msra.mxu0 %v1488
        %2122 = vmatpush.msra.mxu0 %v1484
        %2123 = vmatmul.f32.gmra.mxu0 %v1305
        %v2124 = vpop.f32.mrf.mxu0
        %v2125 = vadd.f32 %v2084, %v2124
        %2126 = vmatmul.f32.gmra.mxu0 %v1308
        %v2127 = vpop.f32.mrf.mxu0
        %v2128 = vadd.f32 %v2087, %v2127
        %2129 = vmatmul.f32.gmra.mxu0 %v1311
        %v2130 = vpop.f32.mrf.mxu0
        %v2131 = vadd.f32 %v2090, %v2130
        %2132 = vmatmul.f32.gmra.mxu0 %v1314
        %v2133 = vpop.f32.mrf.mxu0
        %v2134 = vadd.f32 %v2093, %v2133
        %2135 = vmatmul.f32.gmra.mxu0 %v1317
        %v2136 = vpop.f32.mrf.mxu0
        %v2137 = vadd.f32 %v2096, %v2136
        %2138 = vmatmul.f32.gmra.mxu0 %v1320
        %v2139 = vpop.f32.mrf.mxu0
        %v2140 = vadd.f32 %v2099, %v2139
        %2141 = vmatmul.f32.gmra.mxu0 %v1323
        %v2142 = vpop.f32.mrf.mxu0
        %v2143 = vadd.f32 %v2102, %v2142
        %2144 = vmatmul.f32.gmra.mxu0 %v1326
        %v2145 = vpop.f32.mrf.mxu0
        %v2146 = vadd.f32 %v2105, %v2145
        %2147 = vdwg.mxu0
        %2148 = vmatpush.msra.mxu0 %v1481
        %2149 = vmatpush.msra.mxu0 %v1477
        %2150 = vmatpush.msra.mxu0 %v1473
        %2151 = vmatpush.msra.mxu0 %v1469
        %2152 = vmatpush.msra.mxu0 %v1465
        %2153 = vmatpush.msra.mxu0 %v1461
        %2154 = vmatpush.msra.mxu0 %v1457
        %2155 = vmatpush.msra.mxu0 %v1453
        %2156 = vmatpush.msra.mxu0 %v1449
        %2157 = vmatpush.msra.mxu0 %v1445
        %2158 = vmatpush.msra.mxu0 %v1441
        %2159 = vmatpush.msra.mxu0 %v1437
        %2160 = vmatpush.msra.mxu0 %v1433
        %2161 = vmatpush.msra.mxu0 %v1429
        %2162 = vmatpush.msra.mxu0 %v1425
        %2163 = vmatpush.msra.mxu0 %v1421
        %2164 = vmatmul.f32.gmra.mxu0 %v1264
        %v2165 = vpop.f32.mrf.mxu0
        %v2166 = vadd.f32 %v1901, %v2165
        %2167 = vmatmul.f32.gmra.mxu0 %v1267
        %v2168 = vpop.f32.mrf.mxu0
        %v2169 = vadd.f32 %v1901, %v2168
        %2170 = vmatmul.f32.gmra.mxu0 %v1270
        %v2171 = vpop.f32.mrf.mxu0
        %v2172 = vadd.f32 %v1901, %v2171
        %2173 = vmatmul.f32.gmra.mxu0 %v1273
        %v2174 = vpop.f32.mrf.mxu0
        %v2175 = vadd.f32 %v1901, %v2174
        %2176 = vmatmul.f32.gmra.mxu0 %v1276
        %v2177 = vpop.f32.mrf.mxu0
        %v2178 = vadd.f32 %v1901, %v2177
        %2179 = vmatmul.f32.gmra.mxu0 %v1279
        %v2180 = vpop.f32.mrf.mxu0
        %v2181 = vadd.f32 %v1901, %v2180
        %2182 = vmatmul.f32.gmra.mxu0 %v1282
        %v2183 = vpop.f32.mrf.mxu0
        %v2184 = vadd.f32 %v1901, %v2183
        %2185 = vmatmul.f32.gmra.mxu0 %v1285
        %v2186 = vpop.f32.mrf.mxu0
        %v2187 = vadd.f32 %v1901, %v2186
        %2188 = vdwg.mxu0
        %2189 = vmatpush.msra.mxu0 %v1545
        %2190 = vmatpush.msra.mxu0 %v1541
        %2191 = vmatpush.msra.mxu0 %v1537
        %2192 = vmatpush.msra.mxu0 %v1533
        %2193 = vmatpush.msra.mxu0 %v1529
        %2194 = vmatpush.msra.mxu0 %v1525
        %2195 = vmatpush.msra.mxu0 %v1521
        %2196 = vmatpush.msra.mxu0 %v1517
        %2197 = vmatpush.msra.mxu0 %v1513
        %2198 = vmatpush.msra.mxu0 %v1509
        %2199 = vmatpush.msra.mxu0 %v1505
        %2200 = vmatpush.msra.mxu0 %v1501
        %2201 = vmatpush.msra.mxu0 %v1497
        %2202 = vmatpush.msra.mxu0 %v1493
        %2203 = vmatpush.msra.mxu0 %v1489
        %2204 = vmatpush.msra.mxu0 %v1485
        %2205 = vmatmul.f32.gmra.mxu0 %v1305
        %v2206 = vpop.f32.mrf.mxu0
        %v2207 = vadd.f32 %v2166, %v2206
        %2208 = vmatmul.f32.gmra.mxu0 %v1308
        %v2209 = vpop.f32.mrf.mxu0
        %v2210 = vadd.f32 %v2169, %v2209
        %2211 = vmatmul.f32.gmra.mxu0 %v1311
        %v2212 = vpop.f32.mrf.mxu0
        %v2213 = vadd.f32 %v2172, %v2212
        %2214 = vmatmul.f32.gmra.mxu0 %v1314
        %v2215 = vpop.f32.mrf.mxu0
        %v2216 = vadd.f32 %v2175, %v2215
        %2217 = vmatmul.f32.gmra.mxu0 %v1317
        %v2218 = vpop.f32.mrf.mxu0
        %v2219 = vadd.f32 %v2178, %v2218
        %2220 = vmatmul.f32.gmra.mxu0 %v1320
        %v2221 = vpop.f32.mrf.mxu0
        %v2222 = vadd.f32 %v2181, %v2221
        %2223 = vmatmul.f32.gmra.mxu0 %v1323
        %v2224 = vpop.f32.mrf.mxu0
        %v2225 = vadd.f32 %v2184, %v2224
        %2226 = vmatmul.f32.gmra.mxu0 %v1326
        %v2227 = vpop.f32.mrf.mxu0
        %v2228 = vadd.f32 %v2187, %v2227
        %2229 = vdwg.mxu0
        %v2230 = vld [vmem:[%s7] sm:$0xf]
        %v2232 = vperm.slane %v2230, 0
        %v2233 = vperm.slane %v2230, 1
        %v2234 = vperm.slane %v2230, 2
        %v2235 = vperm.slane %v2230, 3
        %v2240 = vadd.f32 %v1961, %v2232
        %v2241 = vadd.f32 %v2043, %v2233
        %v2242 = vadd.f32 %v2125, %v2234
        %v2243 = vadd.f32 %v2207, %v2235
        %v2244 = vadd.f32 %v1964, %v2232
        %v2245 = vadd.f32 %v2046, %v2233
        %v2246 = vadd.f32 %v2128, %v2234
        %v2247 = vadd.f32 %v2210, %v2235
        %v2248 = vadd.f32 %v1967, %v2232
        %v2249 = vadd.f32 %v2049, %v2233
        %v2250 = vadd.f32 %v2131, %v2234
        %v2251 = vadd.f32 %v2213, %v2235
        %v2252 = vadd.f32 %v1970, %v2232
        %v2253 = vadd.f32 %v2052, %v2233
        %v2254 = vadd.f32 %v2134, %v2234
        %v2255 = vadd.f32 %v2216, %v2235
        %v2256 = vadd.f32 %v1973, %v2232
        %v2257 = vadd.f32 %v2055, %v2233
        %v2258 = vadd.f32 %v2137, %v2234
        %v2259 = vadd.f32 %v2219, %v2235
        %v2260 = vadd.f32 %v1976, %v2232
        %v2261 = vadd.f32 %v2058, %v2233
        %v2262 = vadd.f32 %v2140, %v2234
        %v2263 = vadd.f32 %v2222, %v2235
        %v2264 = vadd.f32 %v1979, %v2232
        %v2265 = vadd.f32 %v2061, %v2233
        %v2266 = vadd.f32 %v2143, %v2234
        %v2267 = vadd.f32 %v2225, %v2235
        %v2268 = vadd.f32 %v1982, %v2232
        %v2269 = vadd.f32 %v2064, %v2233
        %v2270 = vadd.f32 %v2146, %v2234
        %v2271 = vadd.f32 %v2228, %v2235
        %v2272 = vmax.f32 %v2240, 0.0
        %v2273 = vmax.f32 %v2241, 0.0
        %v2274 = vmax.f32 %v2242, 0.0
        %v2275 = vmax.f32 %v2243, 0.0
        %v2276 = vmax.f32 %v2244, 0.0
        %v2277 = vmax.f32 %v2245, 0.0
        %v2278 = vmax.f32 %v2246, 0.0
        %v2279 = vmax.f32 %v2247, 0.0
        %v2280 = vmax.f32 %v2248, 0.0
        %v2281 = vmax.f32 %v2249, 0.0
        %v2282 = vmax.f32 %v2250, 0.0
        %v2283 = vmax.f32 %v2251, 0.0
        %v2284 = vmax.f32 %v2252, 0.0
        %v2285 = vmax.f32 %v2253, 0.0
        %v2286 = vmax.f32 %v2254, 0.0
        %v2287 = vmax.f32 %v2255, 0.0
        %v2288 = vmax.f32 %v2256, 0.0
        %v2289 = vmax.f32 %v2257, 0.0
        %v2290 = vmax.f32 %v2258, 0.0
        %v2291 = vmax.f32 %v2259, 0.0
        %v2292 = vmax.f32 %v2260, 0.0
        %v2293 = vmax.f32 %v2261, 0.0
        %v2294 = vmax.f32 %v2262, 0.0
        %v2295 = vmax.f32 %v2263, 0.0
        %v2296 = vmax.f32 %v2264, 0.0
        %v2297 = vmax.f32 %v2265, 0.0
        %v2298 = vmax.f32 %v2266, 0.0
        %v2299 = vmax.f32 %v2267, 0.0
        %v2300 = vmax.f32 %v2268, 0.0
        %v2301 = vmax.f32 %v2269, 0.0
        %v2302 = vmax.f32 %v2270, 0.0
        %v2303 = vmax.f32 %v2271, 0.0
        %v2304 = vld [vmem:[#allocation6] sm:$0xf]
        %v2305 = vld [vmem:[#allocation6 + $0x4] sm:$0xf]
        %v2306 = vld [vmem:[#allocation6 + $0x8] sm:$0xf]
        %v2307 = vld [vmem:[#allocation6 + $0xc] sm:$0xf]
        %v2308 = vld [vmem:[#allocation6 + $0x10] sm:$0xf]
        %v2309 = vld [vmem:[#allocation6 + $0x14] sm:$0xf]
        %v2310 = vld [vmem:[#allocation6 + $0x18] sm:$0xf]
        %v2311 = vld [vmem:[#allocation6 + $0x1c] sm:$0xf]
        %v2312 = vld [vmem:[#allocation6 + $0x20] sm:$0xf]
        %v2313 = vld [vmem:[#allocation6 + $0x24] sm:$0xf]
        %v2314 = vld [vmem:[#allocation6 + $0x28] sm:$0xf]
        %v2315 = vld [vmem:[#allocation6 + $0x2c] sm:$0xf]
        %v2316 = vld [vmem:[#allocation6 + $0x30] sm:$0xf]
        %v2317 = vld [vmem:[#allocation6 + $0x34] sm:$0xf]
        %v2318 = vld [vmem:[#allocation6 + $0x38] sm:$0xf]
        %v2319 = vld [vmem:[#allocation6 + $0x3c] sm:$0xf]
        %v2320 = vld [vmem:[#allocation6 + $0x40] sm:$0xf]
        %v2321 = vld [vmem:[#allocation6 + $0x44] sm:$0xf]
        %v2322 = vld [vmem:[#allocation6 + $0x48] sm:$0xf]
        %v2323 = vld [vmem:[#allocation6 + $0x4c] sm:$0xf]
        %v2324 = vld [vmem:[#allocation6 + $0x50] sm:$0xf]
        %v2325 = vld [vmem:[#allocation6 + $0x54] sm:$0xf]
        %v2326 = vld [vmem:[#allocation6 + $0x58] sm:$0xf]
        %v2327 = vld [vmem:[#allocation6 + $0x5c] sm:$0xf]
        %v2328 = vld [vmem:[#allocation6 + $0x60] sm:$0xf]
        %v2329 = vld [vmem:[#allocation6 + $0x64] sm:$0xf]
        %v2330 = vld [vmem:[#allocation6 + $0x68] sm:$0xf]
        %v2331 = vld [vmem:[#allocation6 + $0x6c] sm:$0xf]
        %v2332 = vld [vmem:[#allocation6 + $0x70] sm:$0xf]
        %v2333 = vld [vmem:[#allocation6 + $0x74] sm:$0xf]
        %v2334 = vld [vmem:[#allocation6 + $0x78] sm:$0xf]
        %v2335 = vld [vmem:[#allocation6 + $0x7c] sm:$0xf]
        %v2336 = vld [vmem:[#allocation6 + $0x80] sm:$0xf]
        %v2337 = vld [vmem:[#allocation6 + $0x84] sm:$0xf]
        %v2338 = vld [vmem:[#allocation6 + $0x88] sm:$0xf]
        %v2339 = vld [vmem:[#allocation6 + $0x8c] sm:$0xf]
        %v2340 = vld [vmem:[#allocation6 + $0x90] sm:$0xf]
        %v2341 = vld [vmem:[#allocation6 + $0x94] sm:$0xf]
        %v2342 = vld [vmem:[#allocation6 + $0x98] sm:$0xf]
        %v2343 = vld [vmem:[#allocation6 + $0x9c] sm:$0xf]
        %v2344 = vld [vmem:[#allocation6 + $0xa0] sm:$0xf]
        %v2345 = vld [vmem:[#allocation6 + $0xa4] sm:$0xf]
        %v2346 = vld [vmem:[#allocation6 + $0xa8] sm:$0xf]
        %v2347 = vld [vmem:[#allocation6 + $0xac] sm:$0xf]
        %v2348 = vld [vmem:[#allocation6 + $0xb0] sm:$0xf]
        %v2349 = vld [vmem:[#allocation6 + $0xb4] sm:$0xf]
        %v2350 = vld [vmem:[#allocation6 + $0xb8] sm:$0xf]
        %v2351 = vld [vmem:[#allocation6 + $0xbc] sm:$0xf]
        %v2352 = vld [vmem:[#allocation6 + $0xc0] sm:$0xf]
        %v2353 = vld [vmem:[#allocation6 + $0xc4] sm:$0xf]
        %v2354 = vld [vmem:[#allocation6 + $0xc8] sm:$0xf]
        %v2355 = vld [vmem:[#allocation6 + $0xcc] sm:$0xf]
        %v2356 = vld [vmem:[#allocation6 + $0xd0] sm:$0xf]
        %v2357 = vld [vmem:[#allocation6 + $0xd4] sm:$0xf]
        %v2358 = vld [vmem:[#allocation6 + $0xd8] sm:$0xf]
        %v2359 = vld [vmem:[#allocation6 + $0xdc] sm:$0xf]
        %v2360 = vld [vmem:[#allocation6 + $0xe0] sm:$0xf]
        %v2361 = vld [vmem:[#allocation6 + $0xe4] sm:$0xf]
        %v2362 = vld [vmem:[#allocation6 + $0xe8] sm:$0xf]
        %v2363 = vld [vmem:[#allocation6 + $0xec] sm:$0xf]
        %v2364 = vld [vmem:[#allocation6 + $0xf0] sm:$0xf]
        %v2365 = vld [vmem:[#allocation6 + $0xf4] sm:$0xf]
        %v2366 = vld [vmem:[#allocation6 + $0xf8] sm:$0xf]
        %v2367 = vld [vmem:[#allocation6 + $0xfc] sm:$0xf]
        %v2368 = vunpack.c.l.bf16 %v2304
        %v2369 = vunpack.c.l.bf16 %v2305
        %v2370 = vunpack.c.l.bf16 %v2306
        %v2371 = vunpack.c.l.bf16 %v2307
        %v2372 = vunpack.c.l.bf16 %v2308
        %v2373 = vunpack.c.l.bf16 %v2309
        %v2374 = vunpack.c.l.bf16 %v2310
        %v2375 = vunpack.c.l.bf16 %v2311
        %v2376 = vunpack.c.l.bf16 %v2312
        %v2377 = vunpack.c.l.bf16 %v2313
        %v2378 = vunpack.c.l.bf16 %v2314
        %v2379 = vunpack.c.l.bf16 %v2315
        %v2380 = vunpack.c.l.bf16 %v2316
        %v2381 = vunpack.c.l.bf16 %v2317
        %v2382 = vunpack.c.l.bf16 %v2318
        %v2383 = vunpack.c.l.bf16 %v2319
        %v2384 = vunpack.c.l.bf16 %v2320
        %v2385 = vunpack.c.l.bf16 %v2321
        %v2386 = vunpack.c.l.bf16 %v2322
        %v2387 = vunpack.c.l.bf16 %v2323
        %v2388 = vunpack.c.l.bf16 %v2324
        %v2389 = vunpack.c.l.bf16 %v2325
        %v2390 = vunpack.c.l.bf16 %v2326
        %v2391 = vunpack.c.l.bf16 %v2327
        %v2392 = vunpack.c.l.bf16 %v2328
        %v2393 = vunpack.c.l.bf16 %v2329
        %v2394 = vunpack.c.l.bf16 %v2330
        %v2395 = vunpack.c.l.bf16 %v2331
        %v2396 = vunpack.c.l.bf16 %v2332
        %v2397 = vunpack.c.l.bf16 %v2333
        %v2398 = vunpack.c.l.bf16 %v2334
        %v2399 = vunpack.c.l.bf16 %v2335
        %v2400 = vunpack.c.l.bf16 %v2336
        %v2401 = vunpack.c.l.bf16 %v2337
        %v2402 = vunpack.c.l.bf16 %v2338
        %v2403 = vunpack.c.l.bf16 %v2339
        %v2404 = vunpack.c.l.bf16 %v2340
        %v2405 = vunpack.c.l.bf16 %v2341
        %v2406 = vunpack.c.l.bf16 %v2342
        %v2407 = vunpack.c.l.bf16 %v2343
        %v2408 = vunpack.c.l.bf16 %v2344
        %v2409 = vunpack.c.l.bf16 %v2345
        %v2410 = vunpack.c.l.bf16 %v2346
        %v2411 = vunpack.c.l.bf16 %v2347
        %v2412 = vunpack.c.l.bf16 %v2348
        %v2413 = vunpack.c.l.bf16 %v2349
        %v2414 = vunpack.c.l.bf16 %v2350
        %v2415 = vunpack.c.l.bf16 %v2351
        %v2416 = vunpack.c.l.bf16 %v2352
        %v2417 = vunpack.c.l.bf16 %v2353
        %v2418 = vunpack.c.l.bf16 %v2354
        %v2419 = vunpack.c.l.bf16 %v2355
        %v2420 = vunpack.c.l.bf16 %v2356
        %v2421 = vunpack.c.l.bf16 %v2357
        %v2422 = vunpack.c.l.bf16 %v2358
        %v2423 = vunpack.c.l.bf16 %v2359
        %v2424 = vunpack.c.l.bf16 %v2360
        %v2425 = vunpack.c.l.bf16 %v2361
        %v2426 = vunpack.c.l.bf16 %v2362
        %v2427 = vunpack.c.l.bf16 %v2363
        %v2428 = vunpack.c.l.bf16 %v2364
        %v2429 = vunpack.c.l.bf16 %v2365
        %v2430 = vunpack.c.l.bf16 %v2366
        %v2431 = vunpack.c.l.bf16 %v2367
        %v2432 = vld [vmem:[%s9] sm:$0x1]
        %v2434 = vperm.slane %v2432, 0
        %2436 = vmatpush.msra.mxu0 %v2383
        %2437 = vmatpush.msra.mxu0 %v2382
        %2438 = vmatpush.msra.mxu0 %v2381
        %2439 = vmatpush.msra.mxu0 %v2380
        %2440 = vmatpush.msra.mxu0 %v2379
        %2441 = vmatpush.msra.mxu0 %v2378
        %2442 = vmatpush.msra.mxu0 %v2377
        %2443 = vmatpush.msra.mxu0 %v2376
        %2444 = vmatpush.msra.mxu0 %v2375
        %2445 = vmatpush.msra.mxu0 %v2374
        %2446 = vmatpush.msra.mxu0 %v2373
        %2447 = vmatpush.msra.mxu0 %v2372
        %2448 = vmatpush.msra.mxu0 %v2371
        %2449 = vmatpush.msra.mxu0 %v2370
        %2450 = vmatpush.msra.mxu0 %v2369
        %2451 = vmatpush.msra.mxu0 %v2368
        %2452 = vmatmul.f32.gmra.mxu0 %v2272
        %v2453 = vpop.f32.mrf.mxu0
        %v2454 = vadd.f32 %v2434, %v2453
        %2455 = vmatmul.f32.gmra.mxu0 %v2276
        %v2456 = vpop.f32.mrf.mxu0
        %v2457 = vadd.f32 %v2434, %v2456
        %2458 = vmatmul.f32.gmra.mxu0 %v2280
        %v2459 = vpop.f32.mrf.mxu0
        %v2460 = vadd.f32 %v2434, %v2459
        %2461 = vmatmul.f32.gmra.mxu0 %v2284
        %v2462 = vpop.f32.mrf.mxu0
        %v2463 = vadd.f32 %v2434, %v2462
        %2464 = vmatmul.f32.gmra.mxu0 %v2288
        %v2465 = vpop.f32.mrf.mxu0
        %v2466 = vadd.f32 %v2434, %v2465
        %2467 = vmatmul.f32.gmra.mxu0 %v2292
        %v2468 = vpop.f32.mrf.mxu0
        %v2469 = vadd.f32 %v2434, %v2468
        %2470 = vmatmul.f32.gmra.mxu0 %v2296
        %v2471 = vpop.f32.mrf.mxu0
        %v2472 = vadd.f32 %v2434, %v2471
        %2473 = vmatmul.f32.gmra.mxu0 %v2300
        %v2474 = vpop.f32.mrf.mxu0
        %v2475 = vadd.f32 %v2434, %v2474
        %2476 = vdwg.mxu0
        %2477 = vmatpush.msra.mxu0 %v2399
        %2478 = vmatpush.msra.mxu0 %v2398
        %2479 = vmatpush.msra.mxu0 %v2397
        %2480 = vmatpush.msra.mxu0 %v2396
        %2481 = vmatpush.msra.mxu0 %v2395
        %2482 = vmatpush.msra.mxu0 %v2394
        %2483 = vmatpush.msra.mxu0 %v2393
        %2484 = vmatpush.msra.mxu0 %v2392
        %2485 = vmatpush.msra.mxu0 %v2391
        %2486 = vmatpush.msra.mxu0 %v2390
        %2487 = vmatpush.msra.mxu0 %v2389
        %2488 = vmatpush.msra.mxu0 %v2388
        %2489 = vmatpush.msra.mxu0 %v2387
        %2490 = vmatpush.msra.mxu0 %v2386
        %2491 = vmatpush.msra.mxu0 %v2385
        %2492 = vmatpush.msra.mxu0 %v2384
        %2493 = vmatmul.f32.gmra.mxu0 %v2273
        %v2494 = vpop.f32.mrf.mxu0
        %v2495 = vadd.f32 %v2454, %v2494
        %2496 = vmatmul.f32.gmra.mxu0 %v2277
        %v2497 = vpop.f32.mrf.mxu0
        %v2498 = vadd.f32 %v2457, %v2497
        %2499 = vmatmul.f32.gmra.mxu0 %v2281
        %v2500 = vpop.f32.mrf.mxu0
        %v2501 = vadd.f32 %v2460, %v2500
        %2502 = vmatmul.f32.gmra.mxu0 %v2285
        %v2503 = vpop.f32.mrf.mxu0
        %v2504 = vadd.f32 %v2463, %v2503
        %2505 = vmatmul.f32.gmra.mxu0 %v2289
        %v2506 = vpop.f32.mrf.mxu0
        %v2507 = vadd.f32 %v2466, %v2506
        %2508 = vmatmul.f32.gmra.mxu0 %v2293
        %v2509 = vpop.f32.mrf.mxu0
        %v2510 = vadd.f32 %v2469, %v2509
        %2511 = vmatmul.f32.gmra.mxu0 %v2297
        %v2512 = vpop.f32.mrf.mxu0
        %v2513 = vadd.f32 %v2472, %v2512
        %2514 = vmatmul.f32.gmra.mxu0 %v2301
        %v2515 = vpop.f32.mrf.mxu0
        %v2516 = vadd.f32 %v2475, %v2515
        %2517 = vdwg.mxu0
        %2518 = vmatpush.msra.mxu0 %v2415
        %2519 = vmatpush.msra.mxu0 %v2414
        %2520 = vmatpush.msra.mxu0 %v2413
        %2521 = vmatpush.msra.mxu0 %v2412
        %2522 = vmatpush.msra.mxu0 %v2411
        %2523 = vmatpush.msra.mxu0 %v2410
        %2524 = vmatpush.msra.mxu0 %v2409
        %2525 = vmatpush.msra.mxu0 %v2408
        %2526 = vmatpush.msra.mxu0 %v2407
        %2527 = vmatpush.msra.mxu0 %v2406
        %2528 = vmatpush.msra.mxu0 %v2405
        %2529 = vmatpush.msra.mxu0 %v2404
        %2530 = vmatpush.msra.mxu0 %v2403
        %2531 = vmatpush.msra.mxu0 %v2402
        %2532 = vmatpush.msra.mxu0 %v2401
        %2533 = vmatpush.msra.mxu0 %v2400
        %2534 = vmatmul.f32.gmra.mxu0 %v2274
        %v2535 = vpop.f32.mrf.mxu0
        %v2536 = vadd.f32 %v2495, %v2535
        %2537 = vmatmul.f32.gmra.mxu0 %v2278
        %v2538 = vpop.f32.mrf.mxu0
        %v2539 = vadd.f32 %v2498, %v2538
        %2540 = vmatmul.f32.gmra.mxu0 %v2282
        %v2541 = vpop.f32.mrf.mxu0
        %v2542 = vadd.f32 %v2501, %v2541
        %2543 = vmatmul.f32.gmra.mxu0 %v2286
        %v2544 = vpop.f32.mrf.mxu0
        %v2545 = vadd.f32 %v2504, %v2544
        %2546 = vmatmul.f32.gmra.mxu0 %v2290
        %v2547 = vpop.f32.mrf.mxu0
        %v2548 = vadd.f32 %v2507, %v2547
        %2549 = vmatmul.f32.gmra.mxu0 %v2294
        %v2550 = vpop.f32.mrf.mxu0
        %v2551 = vadd.f32 %v2510, %v2550
        %2552 = vmatmul.f32.gmra.mxu0 %v2298
        %v2553 = vpop.f32.mrf.mxu0
        %v2554 = vadd.f32 %v2513, %v2553
        %2555 = vmatmul.f32.gmra.mxu0 %v2302
        %v2556 = vpop.f32.mrf.mxu0
        %v2557 = vadd.f32 %v2516, %v2556
        %2558 = vdwg.mxu0
        %2559 = vmatpush.msra.mxu0 %v2431
        %2560 = vmatpush.msra.mxu0 %v2430
        %2561 = vmatpush.msra.mxu0 %v2429
        %2562 = vmatpush.msra.mxu0 %v2428
        %2563 = vmatpush.msra.mxu0 %v2427
        %2564 = vmatpush.msra.mxu0 %v2426
        %2565 = vmatpush.msra.mxu0 %v2425
        %2566 = vmatpush.msra.mxu0 %v2424
        %2567 = vmatpush.msra.mxu0 %v2423
        %2568 = vmatpush.msra.mxu0 %v2422
        %2569 = vmatpush.msra.mxu0 %v2421
        %2570 = vmatpush.msra.mxu0 %v2420
        %2571 = vmatpush.msra.mxu0 %v2419
        %2572 = vmatpush.msra.mxu0 %v2418
        %2573 = vmatpush.msra.mxu0 %v2417
        %2574 = vmatpush.msra.mxu0 %v2416
        %2575 = vmatmul.f32.gmra.mxu0 %v2275
        %v2576 = vpop.f32.mrf.mxu0
        %v2577 = vadd.f32 %v2536, %v2576
        %2578 = vmatmul.f32.gmra.mxu0 %v2279
        %v2579 = vpop.f32.mrf.mxu0
        %v2580 = vadd.f32 %v2539, %v2579
        %2581 = vmatmul.f32.gmra.mxu0 %v2283
        %v2582 = vpop.f32.mrf.mxu0
        %v2583 = vadd.f32 %v2542, %v2582
        %2584 = vmatmul.f32.gmra.mxu0 %v2287
        %v2585 = vpop.f32.mrf.mxu0
        %v2586 = vadd.f32 %v2545, %v2585
        %2587 = vmatmul.f32.gmra.mxu0 %v2291
        %v2588 = vpop.f32.mrf.mxu0
        %v2589 = vadd.f32 %v2548, %v2588
        %2590 = vmatmul.f32.gmra.mxu0 %v2295
        %v2591 = vpop.f32.mrf.mxu0
        %v2592 = vadd.f32 %v2551, %v2591
        %2593 = vmatmul.f32.gmra.mxu0 %v2299
        %v2594 = vpop.f32.mrf.mxu0
        %v2595 = vadd.f32 %v2554, %v2594
        %2596 = vmatmul.f32.gmra.mxu0 %v2303
        %v2597 = vpop.f32.mrf.mxu0
        %v2598 = vadd.f32 %v2557, %v2597
        %2599 = vdwg.mxu0
        %v2600 = vmax.f32 %v2577, %v2589
        %v2601 = vmax.f32 %v2580, %v2592
        %v2602 = vmax.f32 %v2583, %v2595
        %v2603 = vmax.f32 %v2586, %v2598
        %v2604 = vmax.f32 %v2600, %v2601
        %v2605 = vmax.f32 %v2602, %v2603
        %v2606 = vmax.f32 %v2604, %v2605
        %v2607 = vrot.slane %v2606, 4
        %v2608 = vmax.f32 %v2606, %v2607
        %v2609 = vrot.slane %v2608, 2
        %v2610 = vmax.f32 %v2608, %v2609
        %v2611 = vrot.slane %v2610, 1
        %v2612 = vmax.f32 %v2610, %v2611
        %v2613 = vld [vmem:[#allocation7] sm:$0xf]
        %v2614 = vld [vmem:[#allocation7 + $0x4] sm:$0xf]
        %v2615 = vld [vmem:[#allocation7 + $0x8] sm:$0xf]
        %v2616 = vld [vmem:[#allocation7 + $0xc] sm:$0xf]
        %v2617 = vld [vmem:[#allocation7 + $0x10] sm:$0xf]
        %v2618 = vld [vmem:[#allocation7 + $0x14] sm:$0xf]
        %v2619 = vld [vmem:[#allocation7 + $0x18] sm:$0xf]
        %v2620 = vld [vmem:[#allocation7 + $0x1c] sm:$0xf]
        %v2621 = vld [vmem:[#allocation7 + $0x20] sm:$0xf]
        %v2622 = vld [vmem:[#allocation7 + $0x24] sm:$0xf]
        %v2623 = vld [vmem:[#allocation7 + $0x28] sm:$0xf]
        %v2624 = vld [vmem:[#allocation7 + $0x2c] sm:$0xf]
        %v2625 = vld [vmem:[#allocation7 + $0x30] sm:$0xf]
        %v2626 = vld [vmem:[#allocation7 + $0x34] sm:$0xf]
        %v2627 = vld [vmem:[#allocation7 + $0x38] sm:$0xf]
        %v2628 = vld [vmem:[#allocation7 + $0x3c] sm:$0xf]
        %v2629 = vunpack.c.l.bf16 %v2613
        %v2630 = vunpack.c.l.bf16 %v2614
        %v2631 = vunpack.c.l.bf16 %v2615
        %v2632 = vunpack.c.l.bf16 %v2616
        %v2633 = vunpack.c.l.bf16 %v2617
        %v2634 = vunpack.c.l.bf16 %v2618
        %v2635 = vunpack.c.l.bf16 %v2619
        %v2636 = vunpack.c.l.bf16 %v2620
        %v2637 = vunpack.c.l.bf16 %v2621
        %v2638 = vunpack.c.l.bf16 %v2622
        %v2639 = vunpack.c.l.bf16 %v2623
        %v2640 = vunpack.c.l.bf16 %v2624
        %v2641 = vunpack.c.l.bf16 %v2625
        %v2642 = vunpack.c.l.bf16 %v2626
        %v2643 = vunpack.c.l.bf16 %v2627
        %v2644 = vunpack.c.l.bf16 %v2628
        %v2645 = vld [vmem:[%s11] sm:$0x1]
        %2646 = vmatpush.msra.mxu0 %v2644
        %2647 = vmatpush.msra.mxu0 %v2643
        %2648 = vmatpush.msra.mxu0 %v2642
        %2649 = vmatpush.msra.mxu0 %v2641
        %2650 = vmatpush.msra.mxu0 %v2640
        %2651 = vmatpush.msra.mxu0 %v2639
        %2652 = vmatpush.msra.mxu0 %v2638
        %2653 = vmatpush.msra.mxu0 %v2637
        %2654 = vmatpush.msra.mxu0 %v2636
        %2655 = vmatpush.msra.mxu0 %v2635
        %2656 = vmatpush.msra.mxu0 %v2634
        %2657 = vmatpush.msra.mxu0 %v2633
        %2658 = vmatpush.msra.mxu0 %v2632
        %2659 = vmatpush.msra.mxu0 %v2631
        %2660 = vmatpush.msra.mxu0 %v2630
        %2661 = vmatpush.msra.mxu0 %v2629
        %2662 = vmatmul.f32.gmra.mxu0 %v2612
        %v2663 = vpop.f32.mrf.mxu0
        %v2664 = vadd.f32 %v2645, %v2663
        %2665 = vdwg.mxu0
        %v2666 = vmax.f32 %v2664, 0.0
        %v2667 = vld [vmem:[#allocation9] sm:$0xf]
        %v2668 = vld [vmem:[#allocation9 + $0x4] sm:$0xf]
        %v2669 = vld [vmem:[#allocation9 + $0x8] sm:$0xf]
        %v2670 = vld [vmem:[#allocation9 + $0xc] sm:$0xf]
        %v2671 = vld [vmem:[#allocation9 + $0x10] sm:$0xf]
        %v2672 = vld [vmem:[#allocation9 + $0x14] sm:$0xf]
        %v2673 = vld [vmem:[#allocation9 + $0x18] sm:$0xf]
        %v2674 = vld [vmem:[#allocation9 + $0x1c] sm:$0xf]
        %v2675 = vld [vmem:[#allocation9 + $0x20] sm:$0xf]
        %v2676 = vld [vmem:[#allocation9 + $0x24] sm:$0xf]
        %v2677 = vld [vmem:[#allocation9 + $0x28] sm:$0xf]
        %v2678 = vld [vmem:[#allocation9 + $0x2c] sm:$0xf]
        %v2679 = vld [vmem:[#allocation9 + $0x30] sm:$0xf]
        %v2680 = vld [vmem:[#allocation9 + $0x34] sm:$0xf]
        %v2681 = vld [vmem:[#allocation9 + $0x38] sm:$0xf]
        %v2682 = vld [vmem:[#allocation9 + $0x3c] sm:$0xf]
        %v2683 = vunpack.c.l.bf16 %v2667
        %v2684 = vunpack.c.l.bf16 %v2668
        %v2685 = vunpack.c.l.bf16 %v2669
        %v2686 = vunpack.c.l.bf16 %v2670
        %v2687 = vunpack.c.l.bf16 %v2671
        %v2688 = vunpack.c.l.bf16 %v2672
        %v2689 = vunpack.c.l.bf16 %v2673
        %v2690 = vunpack.c.l.bf16 %v2674
        %v2691 = vunpack.c.l.bf16 %v2675
        %v2692 = vunpack.c.l.bf16 %v2676
        %v2693 = vunpack.c.l.bf16 %v2677
        %v2694 = vunpack.c.l.bf16 %v2678
        %v2695 = vunpack.c.l.bf16 %v2679
        %v2696 = vunpack.c.l.bf16 %v2680
        %v2697 = vunpack.c.l.bf16 %v2681
        %v2698 = vunpack.c.l.bf16 %v2682
        %v2699 = vld [vmem:[%s13] sm:$0x1]
        %2700 = vmatpush.msra.mxu0 %v2698
        %2701 = vmatpush.msra.mxu0 %v2697
        %2702 = vmatpush.msra.mxu0 %v2696
        %2703 = vmatpush.msra.mxu0 %v2695
        %2704 = vmatpush.msra.mxu0 %v2694
        %2705 = vmatpush.msra.mxu0 %v2693
        %2706 = vmatpush.msra.mxu0 %v2692
        %2707 = vmatpush.msra.mxu0 %v2691
        %2708 = vmatpush.msra.mxu0 %v2690
        %2709 = vmatpush.msra.mxu0 %v2689
        %2710 = vmatpush.msra.mxu0 %v2688
        %2711 = vmatpush.msra.mxu0 %v2687
        %2712 = vmatpush.msra.mxu0 %v2686
        %2713 = vmatpush.msra.mxu0 %v2685
        %2714 = vmatpush.msra.mxu0 %v2684
        %2715 = vmatpush.msra.mxu0 %v2683
        %2716 = vmatmul.f32.gmra.mxu0 %v2666
        %v2717 = vpop.f32.mrf.mxu0
        %v2718 = vadd.f32 %v2699, %v2717
        %2719 = vdwg.mxu0
        %v2720 = vmax.f32 %v2718, 0.0
        %v2721 = vld [vmem:[#allocation10] sm:$0xf]
        %v2722 = vld [vmem:[#allocation10 + $0x4] sm:$0xf]
        %v2723 = vld [vmem:[#allocation10 + $0x8] sm:$0xf]
        %v2724 = vld [vmem:[#allocation10 + $0xc] sm:$0xf]
        %v2725 = vld [vmem:[#allocation10 + $0x10] sm:$0xf]
        %v2726 = vld [vmem:[#allocation10 + $0x14] sm:$0xf]
        %v2727 = vld [vmem:[#allocation10 + $0x18] sm:$0xf]
        %v2728 = vld [vmem:[#allocation10 + $0x1c] sm:$0xf]
        %v2729 = vld [vmem:[#allocation10 + $0x20] sm:$0xf]
        %v2730 = vld [vmem:[#allocation10 + $0x24] sm:$0xf]
        %v2731 = vld [vmem:[#allocation10 + $0x28] sm:$0xf]
        %v2732 = vld [vmem:[#allocation10 + $0x2c] sm:$0xf]
        %v2733 = vld [vmem:[#allocation10 + $0x30] sm:$0xf]
        %v2734 = vld [vmem:[#allocation10 + $0x34] sm:$0xf]
        %v2735 = vld [vmem:[#allocation10 + $0x38] sm:$0xf]
        %v2736 = vld [vmem:[#allocation10 + $0x3c] sm:$0xf]
        %v2737 = vunpack.c.l.bf16 %v2721
        %v2738 = vunpack.c.l.bf16 %v2722
        %v2739 = vunpack.c.l.bf16 %v2723
        %v2740 = vunpack.c.l.bf16 %v2724
        %v2741 = vunpack.c.l.bf16 %v2725
        %v2742 = vunpack.c.l.bf16 %v2726
        %v2743 = vunpack.c.l.bf16 %v2727
        %v2744 = vunpack.c.l.bf16 %v2728
        %v2745 = vunpack.c.l.bf16 %v2729
        %v2746 = vunpack.c.l.bf16 %v2730
        %v2747 = vunpack.c.l.bf16 %v2731
        %v2748 = vunpack.c.l.bf16 %v2732
        %v2749 = vunpack.c.l.bf16 %v2733
        %v2750 = vunpack.c.l.bf16 %v2734
        %v2751 = vunpack.c.l.bf16 %v2735
        %v2752 = vunpack.c.l.bf16 %v2736
        %v2753 = vld [vmem:[%s15] sm:$0x1]
        %2754 = vmatpush.msra.mxu0 %v2752
        %2755 = vmatpush.msra.mxu0 %v2751
        %2756 = vmatpush.msra.mxu0 %v2750
        %2757 = vmatpush.msra.mxu0 %v2749
        %2758 = vmatpush.msra.mxu0 %v2748
        %2759 = vmatpush.msra.mxu0 %v2747
        %2760 = vmatpush.msra.mxu0 %v2746
        %2761 = vmatpush.msra.mxu0 %v2745
        %2762 = vmatpush.msra.mxu0 %v2744
        %2763 = vmatpush.msra.mxu0 %v2743
        %2764 = vmatpush.msra.mxu0 %v2742
        %2765 = vmatpush.msra.mxu0 %v2741
        %2766 = vmatpush.msra.mxu0 %v2740
        %2767 = vmatpush.msra.mxu0 %v2739
        %2768 = vmatpush.msra.mxu0 %v2738
        %2769 = vmatpush.msra.mxu0 %v2737
        %2770 = vmatmul.f32.gmra.mxu0 %v2720
        %v2771 = vpop.f32.mrf.mxu0
        %v2772 = vadd.f32 %v2753, %v2771
        %2773 = vdwg.mxu0
        %2774 = vst [vmem:[%s1010] sm:$0x1] %v2772
        %v2775 = vperm.slane %v2772, 0
        %v2776 = vld [vmem:[#allocation12] sm:$0xff]
        %v2777 = vld [vmem:[#allocation12 + $0x8] sm:$0xff]
        %v2778 = vld [vmem:[#allocation12 + $0x10] sm:$0xff]
        %v2779 = vld [vmem:[#allocation12 + $0x18] sm:$0xff]
        %v2780 = vld [vmem:[#allocation12 + $0x20] sm:$0xff]
        %v2781 = vld [vmem:[#allocation12 + $0x28] sm:$0xff]
        %v2782 = vld [vmem:[#allocation12 + $0x30] sm:$0xff]
        %v2783 = vld [vmem:[#allocation12 + $0x38] sm:$0xff]
        %v2784 = vmul.f32 %v2775, %v2776
        %v2785 = vmul.f32 %v2775, %v2777
        %v2786 = vmul.f32 %v2775, %v2778
        %v2787 = vmul.f32 %v2775, %v2779
        %v2788 = vmul.f32 %v2775, %v2780
        %v2789 = vmul.f32 %v2775, %v2781
        %v2790 = vmul.f32 %v2775, %v2782
        %v2791 = vmul.f32 %v2775, %v2783
        %v2792 = vld [vmem:[#allocation13] sm:$0xff]
        %v2793 = vld [vmem:[#allocation13 + $0x8] sm:$0xff]
        %v2794 = vld [vmem:[#allocation13 + $0x10] sm:$0xff]
        %v2795 = vld [vmem:[#allocation13 + $0x18] sm:$0xff]
        %v2796 = vld [vmem:[#allocation13 + $0x20] sm:$0xff]
        %v2797 = vld [vmem:[#allocation13 + $0x28] sm:$0xff]
        %v2798 = vld [vmem:[#allocation13 + $0x30] sm:$0xff]
        %v2799 = vld [vmem:[#allocation13 + $0x38] sm:$0xff]
        %v2800 = vld [vmem:[#allocation13 + $0x40] sm:$0xff]
        %v2801 = vld [vmem:[#allocation13 + $0x48] sm:$0xff]
        %v2802 = vld [vmem:[#allocation13 + $0x50] sm:$0xff]
        %v2803 = vld [vmem:[#allocation13 + $0x58] sm:$0xff]
        %v2804 = vld [vmem:[#allocation13 + $0x60] sm:$0xff]
        %v2805 = vld [vmem:[#allocation13 + $0x68] sm:$0xff]
        %v2806 = vld [vmem:[#allocation13 + $0x70] sm:$0xff]
        %v2807 = vld [vmem:[#allocation13 + $0x78] sm:$0xff]
        %v2808 = vunpack.c.l.bf16 %v2792
        %v2809 = vunpack.c.h.bf16 %v2792
        %v2810 = vunpack.c.l.bf16 %v2793
        %v2811 = vunpack.c.h.bf16 %v2793
        %v2812 = vunpack.c.l.bf16 %v2794
        %v2813 = vunpack.c.h.bf16 %v2794
        %v2814 = vunpack.c.l.bf16 %v2795
        %v2815 = vunpack.c.h.bf16 %v2795
        %v2816 = vunpack.c.l.bf16 %v2796
        %v2817 = vunpack.c.h.bf16 %v2796
        %v2818 = vunpack.c.l.bf16 %v2797
        %v2819 = vunpack.c.h.bf16 %v2797
        %v2820 = vunpack.c.l.bf16 %v2798
        %v2821 = vunpack.c.h.bf16 %v2798
        %v2822 = vunpack.c.l.bf16 %v2799
        %v2823 = vunpack.c.h.bf16 %v2799
        %v2824 = vunpack.c.l.bf16 %v2800
        %v2825 = vunpack.c.h.bf16 %v2800
        %v2826 = vunpack.c.l.bf16 %v2801
        %v2827 = vunpack.c.h.bf16 %v2801
        %v2828 = vunpack.c.l.bf16 %v2802
        %v2829 = vunpack.c.h.bf16 %v2802
        %v2830 = vunpack.c.l.bf16 %v2803
        %v2831 = vunpack.c.h.bf16 %v2803
        %v2832 = vunpack.c.l.bf16 %v2804
        %v2833 = vunpack.c.h.bf16 %v2804
        %v2834 = vunpack.c.l.bf16 %v2805
        %v2835 = vunpack.c.h.bf16 %v2805
        %v2836 = vunpack.c.l.bf16 %v2806
        %v2837 = vunpack.c.h.bf16 %v2806
        %v2838 = vunpack.c.l.bf16 %v2807
        %v2839 = vunpack.c.h.bf16 %v2807
        %v2840 = vld [vmem:[#allocation15] sm:$0xff]
        %v2841 = vld [vmem:[#allocation15 + $0x8] sm:$0xff]
        %v2842 = vld [vmem:[#allocation15 + $0x10] sm:$0xff]
        %v2843 = vld [vmem:[#allocation15 + $0x18] sm:$0xff]
        %v2844 = vld [vmem:[#allocation15 + $0x20] sm:$0xff]
        %v2845 = vld [vmem:[#allocation15 + $0x28] sm:$0xff]
        %v2846 = vld [vmem:[#allocation15 + $0x30] sm:$0xff]
        %v2847 = vld [vmem:[#allocation15 + $0x38] sm:$0xff]
        %v2848 = vld [vmem:[#allocation15 + $0x40] sm:$0xff]
        %v2849 = vld [vmem:[#allocation15 + $0x48] sm:$0xff]
        %v2850 = vld [vmem:[#allocation15 + $0x50] sm:$0xff]
        %v2851 = vld [vmem:[#allocation15 + $0x58] sm:$0xff]
        %v2852 = vld [vmem:[#allocation15 + $0x60] sm:$0xff]
        %v2853 = vld [vmem:[#allocation15 + $0x68] sm:$0xff]
        %v2854 = vld [vmem:[#allocation15 + $0x70] sm:$0xff]
        %v2855 = vld [vmem:[#allocation15 + $0x78] sm:$0xff]
        %v2856 = vunpack.c.l.bf16 %v2840
        %v2857 = vunpack.c.h.bf16 %v2840
        %v2858 = vunpack.c.l.bf16 %v2841
        %v2859 = vunpack.c.h.bf16 %v2841
        %v2860 = vunpack.c.l.bf16 %v2842
        %v2861 = vunpack.c.h.bf16 %v2842
        %v2862 = vunpack.c.l.bf16 %v2843
        %v2863 = vunpack.c.h.bf16 %v2843
        %v2864 = vunpack.c.l.bf16 %v2844
        %v2865 = vunpack.c.h.bf16 %v2844
        %v2866 = vunpack.c.l.bf16 %v2845
        %v2867 = vunpack.c.h.bf16 %v2845
        %v2868 = vunpack.c.l.bf16 %v2846
        %v2869 = vunpack.c.h.bf16 %v2846
        %v2870 = vunpack.c.l.bf16 %v2847
        %v2871 = vunpack.c.h.bf16 %v2847
        %v2872 = vunpack.c.l.bf16 %v2848
        %v2873 = vunpack.c.h.bf16 %v2848
        %v2874 = vunpack.c.l.bf16 %v2849
        %v2875 = vunpack.c.h.bf16 %v2849
        %v2876 = vunpack.c.l.bf16 %v2850
        %v2877 = vunpack.c.h.bf16 %v2850
        %v2878 = vunpack.c.l.bf16 %v2851
        %v2879 = vunpack.c.h.bf16 %v2851
        %v2880 = vunpack.c.l.bf16 %v2852
        %v2881 = vunpack.c.h.bf16 %v2852
        %v2882 = vunpack.c.l.bf16 %v2853
        %v2883 = vunpack.c.h.bf16 %v2853
        %v2884 = vunpack.c.l.bf16 %v2854
        %v2885 = vunpack.c.h.bf16 %v2854
        %v2886 = vunpack.c.l.bf16 %v2855
        %v2887 = vunpack.c.h.bf16 %v2855
        %2888 = vmatpush.msra.mxu0 %v2886
        %2889 = vmatpush.msra.mxu0 %v2884
        %2890 = vmatpush.msra.mxu0 %v2882
        %2891 = vmatpush.msra.mxu0 %v2880
        %2892 = vmatpush.msra.mxu0 %v2878
        %2893 = vmatpush.msra.mxu0 %v2876
        %2894 = vmatpush.msra.mxu0 %v2874
        %2895 = vmatpush.msra.mxu0 %v2872
        %2896 = vmatpush.msra.mxu0 %v2870
        %2897 = vmatpush.msra.mxu0 %v2868
        %2898 = vmatpush.msra.mxu0 %v2866
        %2899 = vmatpush.msra.mxu0 %v2864
        %2900 = vmatpush.msra.mxu0 %v2862
        %2901 = vmatpush.msra.mxu0 %v2860
        %2902 = vmatpush.msra.mxu0 %v2858
        %2903 = vmatpush.msra.mxu0 %v2856
        %2904 = vmatmul.f32.gmra.mxu0 %v2612
        %v2905 = vpop.f32.mrf.mxu0
        %v2906 = vadd.f32 0.0, %v2905
        %2907 = vdwg.mxu0
        %2908 = vmatpush.msra.mxu0 %v2887
        %2909 = vmatpush.msra.mxu0 %v2885
        %2910 = vmatpush.msra.mxu0 %v2883
        %2911 = vmatpush.msra.mxu0 %v2881
        %2912 = vmatpush.msra.mxu0 %v2879
        %2913 = vmatpush.msra.mxu0 %v2877
        %2914 = vmatpush.msra.mxu0 %v2875
        %2915 = vmatpush.msra.mxu0 %v2873
        %2916 = vmatpush.msra.mxu0 %v2871
        %2917 = vmatpush.msra.mxu0 %v2869
        %2918 = vmatpush.msra.mxu0 %v2867
        %2919 = vmatpush.msra.mxu0 %v2865
        %2920 = vmatpush.msra.mxu0 %v2863
        %2921 = vmatpush.msra.mxu0 %v2861
        %2922 = vmatpush.msra.mxu0 %v2859
        %2923 = vmatpush.msra.mxu0 %v2857
        %2924 = vmatmul.f32.gmra.mxu0 %v2612
        %v2925 = vpop.f32.mrf.mxu0
        %v2926 = vadd.f32 0.0, %v2925
        %2927 = vdwg.mxu0
        %v2928 = vperm.slane %v2906, 0
        %v2929 = vperm.slane %v2926, 0
        %2930 = vmatpush.msra.mxu0 %v2838
        %2931 = vmatpush.msra.mxu0 %v2836
        %2932 = vmatpush.msra.mxu0 %v2834
        %2933 = vmatpush.msra.mxu0 %v2832
        %2934 = vmatpush.msra.mxu0 %v2830
        %2935 = vmatpush.msra.mxu0 %v2828
        %2936 = vmatpush.msra.mxu0 %v2826
        %2937 = vmatpush.msra.mxu0 %v2824
        %2938 = vmatpush.msra.mxu0 %v2822
        %2939 = vmatpush.msra.mxu0 %v2820
        %2940 = vmatpush.msra.mxu0 %v2818
        %2941 = vmatpush.msra.mxu0 %v2816
        %2942 = vmatpush.msra.mxu0 %v2814
        %2943 = vmatpush.msra.mxu0 %v2812
        %2944 = vmatpush.msra.mxu0 %v2810
        %2945 = vmatpush.msra.mxu0 %v2808
        %2946 = vmatmul.f32.gmra.mxu0 %v2784
        %v2947 = vpop.f32.mrf.mxu0
        %v2948 = vadd.f32 %v2928, %v2947
        %2949 = vmatmul.f32.gmra.mxu0 %v2785
        %v2950 = vpop.f32.mrf.mxu0
        %v2951 = vadd.f32 %v2928, %v2950
        %2952 = vmatmul.f32.gmra.mxu0 %v2786
        %v2953 = vpop.f32.mrf.mxu0
        %v2954 = vadd.f32 %v2928, %v2953
        %2955 = vmatmul.f32.gmra.mxu0 %v2787
        %v2956 = vpop.f32.mrf.mxu0
        %v2957 = vadd.f32 %v2928, %v2956
        %2958 = vmatmul.f32.gmra.mxu0 %v2788
        %v2959 = vpop.f32.mrf.mxu0
        %v2960 = vadd.f32 %v2928, %v2959
        %2961 = vmatmul.f32.gmra.mxu0 %v2789
        %v2962 = vpop.f32.mrf.mxu0
        %v2963 = vadd.f32 %v2928, %v2962
        %2964 = vmatmul.f32.gmra.mxu0 %v2790
        %v2965 = vpop.f32.mrf.mxu0
        %v2966 = vadd.f32 %v2928, %v2965
        %2967 = vmatmul.f32.gmra.mxu0 %v2791
        %v2968 = vpop.f32.mrf.mxu0
        %v2969 = vadd.f32 %v2928, %v2968
        %2970 = vdwg.mxu0
        %2971 = vmatpush.msra.mxu0 %v2839
        %2972 = vmatpush.msra.mxu0 %v2837
        %2973 = vmatpush.msra.mxu0 %v2835
        %2974 = vmatpush.msra.mxu0 %v2833
        %2975 = vmatpush.msra.mxu0 %v2831
        %2976 = vmatpush.msra.mxu0 %v2829
        %2977 = vmatpush.msra.mxu0 %v2827
        %2978 = vmatpush.msra.mxu0 %v2825
        %2979 = vmatpush.msra.mxu0 %v2823
        %2980 = vmatpush.msra.mxu0 %v2821
        %2981 = vmatpush.msra.mxu0 %v2819
        %2982 = vmatpush.msra.mxu0 %v2817
        %2983 = vmatpush.msra.mxu0 %v2815
        %2984 = vmatpush.msra.mxu0 %v2813
        %2985 = vmatpush.msra.mxu0 %v2811
        %2986 = vmatpush.msra.mxu0 %v2809
        %2987 = vmatmul.f32.gmra.mxu0 %v2784
        %v2988 = vpop.f32.mrf.mxu0
        %v2989 = vadd.f32 %v2929, %v2988
        %2990 = vmatmul.f32.gmra.mxu0 %v2785
        %v2991 = vpop.f32.mrf.mxu0
        %v2992 = vadd.f32 %v2929, %v2991
        %2993 = vmatmul.f32.gmra.mxu0 %v2786
        %v2994 = vpop.f32.mrf.mxu0
        %v2995 = vadd.f32 %v2929, %v2994
        %2996 = vmatmul.f32.gmra.mxu0 %v2787
        %v2997 = vpop.f32.mrf.mxu0
        %v2998 = vadd.f32 %v2929, %v2997
        %2999 = vmatmul.f32.gmra.mxu0 %v2788
        %v3000 = vpop.f32.mrf.mxu0
        %v3001 = vadd.f32 %v2929, %v3000
        %3002 = vmatmul.f32.gmra.mxu0 %v2789
        %v3003 = vpop.f32.mrf.mxu0
        %v3004 = vadd.f32 %v2929, %v3003
        %3005 = vmatmul.f32.gmra.mxu0 %v2790
        %v3006 = vpop.f32.mrf.mxu0
        %v3007 = vadd.f32 %v2929, %v3006
        %3008 = vmatmul.f32.gmra.mxu0 %v2791
        %v3009 = vpop.f32.mrf.mxu0
        %v3010 = vadd.f32 %v2929, %v3009
        %3011 = vdwg.mxu0
        %v3012 = vld [vmem:[#allocation16] sm:$0xff]
        %v3013 = vld [vmem:[#allocation16 + $0x8] sm:$0xff]
        %v3014 = vld [vmem:[#allocation16 + $0x10] sm:$0xff]
        %v3015 = vld [vmem:[#allocation16 + $0x18] sm:$0xff]
        %v3016 = vld [vmem:[#allocation16 + $0x20] sm:$0xff]
        %v3017 = vld [vmem:[#allocation16 + $0x28] sm:$0xff]
        %v3018 = vld [vmem:[#allocation16 + $0x30] sm:$0xff]
        %v3019 = vld [vmem:[#allocation16 + $0x38] sm:$0xff]
        %v3020 = vld [vmem:[#allocation16 + $0x40] sm:$0xff]
        %v3021 = vld [vmem:[#allocation16 + $0x48] sm:$0xff]
        %v3022 = vld [vmem:[#allocation16 + $0x50] sm:$0xff]
        %v3023 = vld [vmem:[#allocation16 + $0x58] sm:$0xff]
        %v3024 = vld [vmem:[#allocation16 + $0x60] sm:$0xff]
        %v3025 = vld [vmem:[#allocation16 + $0x68] sm:$0xff]
        %v3026 = vld [vmem:[#allocation16 + $0x70] sm:$0xff]
        %v3027 = vld [vmem:[#allocation16 + $0x78] sm:$0xff]
        %v3028 = vadd.f32 %v2948, %v3012
        %v3029 = vadd.f32 %v2989, %v3013
        %v3030 = vadd.f32 %v2951, %v3014
        %v3031 = vadd.f32 %v2992, %v3015
        %v3032 = vadd.f32 %v2954, %v3016
        %v3033 = vadd.f32 %v2995, %v3017
        %v3034 = vadd.f32 %v2957, %v3018
        %v3035 = vadd.f32 %v2998, %v3019
        %v3036 = vadd.f32 %v2960, %v3020
        %v3037 = vadd.f32 %v3001, %v3021
        %v3038 = vadd.f32 %v2963, %v3022
        %v3039 = vadd.f32 %v3004, %v3023
        %v3040 = vadd.f32 %v2966, %v3024
        %v3041 = vadd.f32 %v3007, %v3025
        %v3042 = vadd.f32 %v2969, %v3026
        %v3043 = vadd.f32 %v3010, %v3027
        %v3044 = vmax.f32 %v3028, 0.0
        %v3045 = vmax.f32 %v3029, 0.0
        %v3046 = vmax.f32 %v3030, 0.0
        %v3047 = vmax.f32 %v3031, 0.0
        %v3048 = vmax.f32 %v3032, 0.0
        %v3049 = vmax.f32 %v3033, 0.0
        %v3050 = vmax.f32 %v3034, 0.0
        %v3051 = vmax.f32 %v3035, 0.0
        %v3052 = vmax.f32 %v3036, 0.0
        %v3053 = vmax.f32 %v3037, 0.0
        %v3054 = vmax.f32 %v3038, 0.0
        %v3055 = vmax.f32 %v3039, 0.0
        %v3056 = vmax.f32 %v3040, 0.0
        %v3057 = vmax.f32 %v3041, 0.0
        %v3058 = vmax.f32 %v3042, 0.0
        %v3059 = vmax.f32 %v3043, 0.0
        %v3060 = vld [vmem:[#allocation18] sm:$0xff]
        %v3061 = vld [vmem:[#allocation18 + $0x8] sm:$0xff]
        %v3062 = vld [vmem:[#allocation18 + $0x10] sm:$0xff]
        %v3063 = vld [vmem:[#allocation18 + $0x18] sm:$0xff]
        %v3064 = vld [vmem:[#allocation18 + $0x20] sm:$0xff]
        %v3065 = vld [vmem:[#allocation18 + $0x28] sm:$0xff]
        %v3066 = vld [vmem:[#allocation18 + $0x30] sm:$0xff]
        %v3067 = vld [vmem:[#allocation18 + $0x38] sm:$0xff]
        %v3068 = vld [vmem:[#allocation18 + $0x40] sm:$0xff]
        %v3069 = vld [vmem:[#allocation18 + $0x48] sm:$0xff]
        %v3070 = vld [vmem:[#allocation18 + $0x50] sm:$0xff]
        %v3071 = vld [vmem:[#allocation18 + $0x58] sm:$0xff]
        %v3072 = vld [vmem:[#allocation18 + $0x60] sm:$0xff]
        %v3073 = vld [vmem:[#allocation18 + $0x68] sm:$0xff]
        %v3074 = vld [vmem:[#allocation18 + $0x70] sm:$0xff]
        %v3075 = vld [vmem:[#allocation18 + $0x78] sm:$0xff]
        %v3076 = vld [vmem:[#allocation18 + $0x80] sm:$0xff]
        %v3077 = vld [vmem:[#allocation18 + $0x88] sm:$0xff]
        %v3078 = vld [vmem:[#allocation18 + $0x90] sm:$0xff]
        %v3079 = vld [vmem:[#allocation18 + $0x98] sm:$0xff]
        %v3080 = vld [vmem:[#allocation18 + $0xa0] sm:$0xff]
        %v3081 = vld [vmem:[#allocation18 + $0xa8] sm:$0xff]
        %v3082 = vld [vmem:[#allocation18 + $0xb0] sm:$0xff]
        %v3083 = vld [vmem:[#allocation18 + $0xb8] sm:$0xff]
        %v3084 = vld [vmem:[#allocation18 + $0xc0] sm:$0xff]
        %v3085 = vld [vmem:[#allocation18 + $0xc8] sm:$0xff]
        %v3086 = vld [vmem:[#allocation18 + $0xd0] sm:$0xff]
        %v3087 = vld [vmem:[#allocation18 + $0xd8] sm:$0xff]
        %v3088 = vld [vmem:[#allocation18 + $0xe0] sm:$0xff]
        %v3089 = vld [vmem:[#allocation18 + $0xe8] sm:$0xff]
        %v3090 = vld [vmem:[#allocation18 + $0xf0] sm:$0xff]
        %v3091 = vld [vmem:[#allocation18 + $0xf8] sm:$0xff]
        %v3092 = vunpack.c.l.bf16 %v3060
        %v3093 = vunpack.c.h.bf16 %v3060
        %v3094 = vunpack.c.l.bf16 %v3061
        %v3095 = vunpack.c.h.bf16 %v3061
        %v3096 = vunpack.c.l.bf16 %v3062
        %v3097 = vunpack.c.h.bf16 %v3062
        %v3098 = vunpack.c.l.bf16 %v3063
        %v3099 = vunpack.c.h.bf16 %v3063
        %v3100 = vunpack.c.l.bf16 %v3064
        %v3101 = vunpack.c.h.bf16 %v3064
        %v3102 = vunpack.c.l.bf16 %v3065
        %v3103 = vunpack.c.h.bf16 %v3065
        %v3104 = vunpack.c.l.bf16 %v3066
        %v3105 = vunpack.c.h.bf16 %v3066
        %v3106 = vunpack.c.l.bf16 %v3067
        %v3107 = vunpack.c.h.bf16 %v3067
        %v3108 = vunpack.c.l.bf16 %v3068
        %v3109 = vunpack.c.h.bf16 %v3068
        %v3110 = vunpack.c.l.bf16 %v3069
        %v3111 = vunpack.c.h.bf16 %v3069
        %v3112 = vunpack.c.l.bf16 %v3070
        %v3113 = vunpack.c.h.bf16 %v3070
        %v3114 = vunpack.c.l.bf16 %v3071
        %v3115 = vunpack.c.h.bf16 %v3071
        %v3116 = vunpack.c.l.bf16 %v3072
        %v3117 = vunpack.c.h.bf16 %v3072
        %v3118 = vunpack.c.l.bf16 %v3073
        %v3119 = vunpack.c.h.bf16 %v3073
        %v3120 = vunpack.c.l.bf16 %v3074
        %v3121 = vunpack.c.h.bf16 %v3074
        %v3122 = vunpack.c.l.bf16 %v3075
        %v3123 = vunpack.c.h.bf16 %v3075
        %v3124 = vunpack.c.l.bf16 %v3076
        %v3125 = vunpack.c.h.bf16 %v3076
        %v3126 = vunpack.c.l.bf16 %v3077
        %v3127 = vunpack.c.h.bf16 %v3077
        %v3128 = vunpack.c.l.bf16 %v3078
        %v3129 = vunpack.c.h.bf16 %v3078
        %v3130 = vunpack.c.l.bf16 %v3079
        %v3131 = vunpack.c.h.bf16 %v3079
        %v3132 = vunpack.c.l.bf16 %v3080
        %v3133 = vunpack.c.h.bf16 %v3080
        %v3134 = vunpack.c.l.bf16 %v3081
        %v3135 = vunpack.c.h.bf16 %v3081
        %v3136 = vunpack.c.l.bf16 %v3082
        %v3137 = vunpack.c.h.bf16 %v3082
        %v3138 = vunpack.c.l.bf16 %v3083
        %v3139 = vunpack.c.h.bf16 %v3083
        %v3140 = vunpack.c.l.bf16 %v3084
        %v3141 = vunpack.c.h.bf16 %v3084
        %v3142 = vunpack.c.l.bf16 %v3085
        %v3143 = vunpack.c.h.bf16 %v3085
        %v3144 = vunpack.c.l.bf16 %v3086
        %v3145 = vunpack.c.h.bf16 %v3086
        %v3146 = vunpack.c.l.bf16 %v3087
        %v3147 = vunpack.c.h.bf16 %v3087
        %v3148 = vunpack.c.l.bf16 %v3088
        %v3149 = vunpack.c.h.bf16 %v3088
        %v3150 = vunpack.c.l.bf16 %v3089
        %v3151 = vunpack.c.h.bf16 %v3089
        %v3152 = vunpack.c.l.bf16 %v3090
        %v3153 = vunpack.c.h.bf16 %v3090
        %v3154 = vunpack.c.l.bf16 %v3091
        %v3155 = vunpack.c.h.bf16 %v3091
        %v3156 = vld [vmem:[%s21] sm:$0x3]
        %v3158 = vperm.slane %v3156, 0
        %v3159 = vperm.slane %v3156, 1
        %3162 = vmatpush.msra.mxu0 %v3122
        %3163 = vmatpush.msra.mxu0 %v3120
        %3164 = vmatpush.msra.mxu0 %v3118
        %3165 = vmatpush.msra.mxu0 %v3116
        %3166 = vmatpush.msra.mxu0 %v3114
        %3167 = vmatpush.msra.mxu0 %v3112
        %3168 = vmatpush.msra.mxu0 %v3110
        %3169 = vmatpush.msra.mxu0 %v3108
        %3170 = vmatpush.msra.mxu0 %v3106
        %3171 = vmatpush.msra.mxu0 %v3104
        %3172 = vmatpush.msra.mxu0 %v3102
        %3173 = vmatpush.msra.mxu0 %v3100
        %3174 = vmatpush.msra.mxu0 %v3098
        %3175 = vmatpush.msra.mxu0 %v3096
        %3176 = vmatpush.msra.mxu0 %v3094
        %3177 = vmatpush.msra.mxu0 %v3092
        %3178 = vmatmul.f32.gmra.mxu0 %v3044
        %v3179 = vpop.f32.mrf.mxu0
        %v3180 = vadd.f32 %v3158, %v3179
        %3181 = vmatmul.f32.gmra.mxu0 %v3046
        %v3182 = vpop.f32.mrf.mxu0
        %v3183 = vadd.f32 %v3158, %v3182
        %3184 = vmatmul.f32.gmra.mxu0 %v3048
        %v3185 = vpop.f32.mrf.mxu0
        %v3186 = vadd.f32 %v3158, %v3185
        %3187 = vmatmul.f32.gmra.mxu0 %v3050
        %v3188 = vpop.f32.mrf.mxu0
        %v3189 = vadd.f32 %v3158, %v3188
        %3190 = vmatmul.f32.gmra.mxu0 %v3052
        %v3191 = vpop.f32.mrf.mxu0
        %v3192 = vadd.f32 %v3158, %v3191
        %3193 = vmatmul.f32.gmra.mxu0 %v3054
        %v3194 = vpop.f32.mrf.mxu0
        %v3195 = vadd.f32 %v3158, %v3194
        %3196 = vmatmul.f32.gmra.mxu0 %v3056
        %v3197 = vpop.f32.mrf.mxu0
        %v3198 = vadd.f32 %v3158, %v3197
        %3199 = vmatmul.f32.gmra.mxu0 %v3058
        %v3200 = vpop.f32.mrf.mxu0
        %v3201 = vadd.f32 %v3158, %v3200
        %3202 = vdwg.mxu0
        %3203 = vmatpush.msra.mxu0 %v3154
        %3204 = vmatpush.msra.mxu0 %v3152
        %3205 = vmatpush.msra.mxu0 %v3150
        %3206 = vmatpush.msra.mxu0 %v3148
        %3207 = vmatpush.msra.mxu0 %v3146
        %3208 = vmatpush.msra.mxu0 %v3144
        %3209 = vmatpush.msra.mxu0 %v3142
        %3210 = vmatpush.msra.mxu0 %v3140
        %3211 = vmatpush.msra.mxu0 %v3138
        %3212 = vmatpush.msra.mxu0 %v3136
        %3213 = vmatpush.msra.mxu0 %v3134
        %3214 = vmatpush.msra.mxu0 %v3132
        %3215 = vmatpush.msra.mxu0 %v3130
        %3216 = vmatpush.msra.mxu0 %v3128
        %3217 = vmatpush.msra.mxu0 %v3126
        %3218 = vmatpush.msra.mxu0 %v3124
        %3219 = vmatmul.f32.gmra.mxu0 %v3045
        %v3220 = vpop.f32.mrf.mxu0
        %v3221 = vadd.f32 %v3180, %v3220
        %3222 = vmatmul.f32.gmra.mxu0 %v3047
        %v3223 = vpop.f32.mrf.mxu0
        %v3224 = vadd.f32 %v3183, %v3223
        %3225 = vmatmul.f32.gmra.mxu0 %v3049
        %v3226 = vpop.f32.mrf.mxu0
        %v3227 = vadd.f32 %v3186, %v3226
        %3228 = vmatmul.f32.gmra.mxu0 %v3051
        %v3229 = vpop.f32.mrf.mxu0
        %v3230 = vadd.f32 %v3189, %v3229
        %3231 = vmatmul.f32.gmra.mxu0 %v3053
        %v3232 = vpop.f32.mrf.mxu0
        %v3233 = vadd.f32 %v3192, %v3232
        %3234 = vmatmul.f32.gmra.mxu0 %v3055
        %v3235 = vpop.f32.mrf.mxu0
        %v3236 = vadd.f32 %v3195, %v3235
        %3237 = vmatmul.f32.gmra.mxu0 %v3057
        %v3238 = vpop.f32.mrf.mxu0
        %v3239 = vadd.f32 %v3198, %v3238
        %3240 = vmatmul.f32.gmra.mxu0 %v3059
        %v3241 = vpop.f32.mrf.mxu0
        %v3242 = vadd.f32 %v3201, %v3241
        %3243 = vdwg.mxu0
        %3244 = vmatpush.msra.mxu0 %v3123
        %3245 = vmatpush.msra.mxu0 %v3121
        %3246 = vmatpush.msra.mxu0 %v3119
        %3247 = vmatpush.msra.mxu0 %v3117
        %3248 = vmatpush.msra.mxu0 %v3115
        %3249 = vmatpush.msra.mxu0 %v3113
        %3250 = vmatpush.msra.mxu0 %v3111
        %3251 = vmatpush.msra.mxu0 %v3109
        %3252 = vmatpush.msra.mxu0 %v3107
        %3253 = vmatpush.msra.mxu0 %v3105
        %3254 = vmatpush.msra.mxu0 %v3103
        %3255 = vmatpush.msra.mxu0 %v3101
        %3256 = vmatpush.msra.mxu0 %v3099
        %3257 = vmatpush.msra.mxu0 %v3097
        %3258 = vmatpush.msra.mxu0 %v3095
        %3259 = vmatpush.msra.mxu0 %v3093
        %3260 = vmatmul.f32.gmra.mxu0 %v3044
        %v3261 = vpop.f32.mrf.mxu0
        %v3262 = vadd.f32 %v3159, %v3261
        %3263 = vmatmul.f32.gmra.mxu0 %v3046
        %v3264 = vpop.f32.mrf.mxu0
        %v3265 = vadd.f32 %v3159, %v3264
        %3266 = vmatmul.f32.gmra.mxu0 %v3048
        %v3267 = vpop.f32.mrf.mxu0
        %v3268 = vadd.f32 %v3159, %v3267
        %3269 = vmatmul.f32.gmra.mxu0 %v3050
        %v3270 = vpop.f32.mrf.mxu0
        %v3271 = vadd.f32 %v3159, %v3270
        %3272 = vmatmul.f32.gmra.mxu0 %v3052
        %v3273 = vpop.f32.mrf.mxu0
        %v3274 = vadd.f32 %v3159, %v3273
        %3275 = vmatmul.f32.gmra.mxu0 %v3054
        %v3276 = vpop.f32.mrf.mxu0
        %v3277 = vadd.f32 %v3159, %v3276
        %3278 = vmatmul.f32.gmra.mxu0 %v3056
        %v3279 = vpop.f32.mrf.mxu0
        %v3280 = vadd.f32 %v3159, %v3279
        %3281 = vmatmul.f32.gmra.mxu0 %v3058
        %v3282 = vpop.f32.mrf.mxu0
        %v3283 = vadd.f32 %v3159, %v3282
        %3284 = vdwg.mxu0
        %3285 = vmatpush.msra.mxu0 %v3155
        %3286 = vmatpush.msra.mxu0 %v3153
        %3287 = vmatpush.msra.mxu0 %v3151
        %3288 = vmatpush.msra.mxu0 %v3149
        %3289 = vmatpush.msra.mxu0 %v3147
        %3290 = vmatpush.msra.mxu0 %v3145
        %3291 = vmatpush.msra.mxu0 %v3143
        %3292 = vmatpush.msra.mxu0 %v3141
        %3293 = vmatpush.msra.mxu0 %v3139
        %3294 = vmatpush.msra.mxu0 %v3137
        %3295 = vmatpush.msra.mxu0 %v3135
        %3296 = vmatpush.msra.mxu0 %v3133
        %3297 = vmatpush.msra.mxu0 %v3131
        %3298 = vmatpush.msra.mxu0 %v3129
        %3299 = vmatpush.msra.mxu0 %v3127
        %3300 = vmatpush.msra.mxu0 %v3125
        %3301 = vmatmul.f32.gmra.mxu0 %v3045
        %v3302 = vpop.f32.mrf.mxu0
        %v3303 = vadd.f32 %v3262, %v3302
        %3304 = vmatmul.f32.gmra.mxu0 %v3047
        %v3305 = vpop.f32.mrf.mxu0
        %v3306 = vadd.f32 %v3265, %v3305
        %3307 = vmatmul.f32.gmra.mxu0 %v3049
        %v3308 = vpop.f32.mrf.mxu0
        %v3309 = vadd.f32 %v3268, %v3308
        %3310 = vmatmul.f32.gmra.mxu0 %v3051
        %v3311 = vpop.f32.mrf.mxu0
        %v3312 = vadd.f32 %v3271, %v3311
        %3313 = vmatmul.f32.gmra.mxu0 %v3053
        %v3314 = vpop.f32.mrf.mxu0
        %v3315 = vadd.f32 %v3274, %v3314
        %3316 = vmatmul.f32.gmra.mxu0 %v3055
        %v3317 = vpop.f32.mrf.mxu0
        %v3318 = vadd.f32 %v3277, %v3317
        %3319 = vmatmul.f32.gmra.mxu0 %v3057
        %v3320 = vpop.f32.mrf.mxu0
        %v3321 = vadd.f32 %v3280, %v3320
        %3322 = vmatmul.f32.gmra.mxu0 %v3059
        %v3323 = vpop.f32.mrf.mxu0
        %v3324 = vadd.f32 %v3283, %v3323
        %3325 = vdwg.mxu0
        %v3326 = vmax.f32 %v3221, 0.0
        %v3327 = vmax.f32 %v3303, 0.0
        %v3328 = vmax.f32 %v3224, 0.0
        %v3329 = vmax.f32 %v3306, 0.0
        %v3330 = vmax.f32 %v3227, 0.0
        %v3331 = vmax.f32 %v3309, 0.0
        %v3332 = vmax.f32 %v3230, 0.0
        %v3333 = vmax.f32 %v3312, 0.0
        %v3334 = vmax.f32 %v3233, 0.0
        %v3335 = vmax.f32 %v3315, 0.0
        %v3336 = vmax.f32 %v3236, 0.0
        %v3337 = vmax.f32 %v3318, 0.0
        %v3338 = vmax.f32 %v3239, 0.0
        %v3339 = vmax.f32 %v3321, 0.0
        %v3340 = vmax.f32 %v3242, 0.0
        %v3341 = vmax.f32 %v3324, 0.0
        %v3342 = vld [vmem:[#allocation19] sm:$0xf]
        %v3343 = vld [vmem:[#allocation19 + $0x4] sm:$0xf]
        %v3344 = vld [vmem:[#allocation19 + $0x8] sm:$0xf]
        %v3345 = vld [vmem:[#allocation19 + $0xc] sm:$0xf]
        %v3346 = vld [vmem:[#allocation19 + $0x10] sm:$0xf]
        %v3347 = vld [vmem:[#allocation19 + $0x14] sm:$0xf]
        %v3348 = vld [vmem:[#allocation19 + $0x18] sm:$0xf]
        %v3349 = vld [vmem:[#allocation19 + $0x1c] sm:$0xf]
        %v3350 = vld [vmem:[#allocation19 + $0x20] sm:$0xf]
        %v3351 = vld [vmem:[#allocation19 + $0x24] sm:$0xf]
        %v3352 = vld [vmem:[#allocation19 + $0x28] sm:$0xf]
        %v3353 = vld [vmem:[#allocation19 + $0x2c] sm:$0xf]
        %v3354 = vld [vmem:[#allocation19 + $0x30] sm:$0xf]
        %v3355 = vld [vmem:[#allocation19 + $0x34] sm:$0xf]
        %v3356 = vld [vmem:[#allocation19 + $0x38] sm:$0xf]
        %v3357 = vld [vmem:[#allocation19 + $0x3c] sm:$0xf]
        %v3358 = vld [vmem:[#allocation19 + $0x40] sm:$0xf]
        %v3359 = vld [vmem:[#allocation19 + $0x44] sm:$0xf]
        %v3360 = vld [vmem:[#allocation19 + $0x48] sm:$0xf]
        %v3361 = vld [vmem:[#allocation19 + $0x4c] sm:$0xf]
        %v3362 = vld [vmem:[#allocation19 + $0x50] sm:$0xf]
        %v3363 = vld [vmem:[#allocation19 + $0x54] sm:$0xf]
        %v3364 = vld [vmem:[#allocation19 + $0x58] sm:$0xf]
        %v3365 = vld [vmem:[#allocation19 + $0x5c] sm:$0xf]
        %v3366 = vld [vmem:[#allocation19 + $0x60] sm:$0xf]
        %v3367 = vld [vmem:[#allocation19 + $0x64] sm:$0xf]
        %v3368 = vld [vmem:[#allocation19 + $0x68] sm:$0xf]
        %v3369 = vld [vmem:[#allocation19 + $0x6c] sm:$0xf]
        %v3370 = vld [vmem:[#allocation19 + $0x70] sm:$0xf]
        %v3371 = vld [vmem:[#allocation19 + $0x74] sm:$0xf]
        %v3372 = vld [vmem:[#allocation19 + $0x78] sm:$0xf]
        %v3373 = vld [vmem:[#allocation19 + $0x7c] sm:$0xf]
        %v3374 = vunpack.c.l.bf16 %v3342
        %v3375 = vunpack.c.l.bf16 %v3343
        %v3376 = vunpack.c.l.bf16 %v3344
        %v3377 = vunpack.c.l.bf16 %v3345
        %v3378 = vunpack.c.l.bf16 %v3346
        %v3379 = vunpack.c.l.bf16 %v3347
        %v3380 = vunpack.c.l.bf16 %v3348
        %v3381 = vunpack.c.l.bf16 %v3349
        %v3382 = vunpack.c.l.bf16 %v3350
        %v3383 = vunpack.c.l.bf16 %v3351
        %v3384 = vunpack.c.l.bf16 %v3352
        %v3385 = vunpack.c.l.bf16 %v3353
        %v3386 = vunpack.c.l.bf16 %v3354
        %v3387 = vunpack.c.l.bf16 %v3355
        %v3388 = vunpack.c.l.bf16 %v3356
        %v3389 = vunpack.c.l.bf16 %v3357
        %v3390 = vunpack.c.l.bf16 %v3358
        %v3391 = vunpack.c.l.bf16 %v3359
        %v3392 = vunpack.c.l.bf16 %v3360
        %v3393 = vunpack.c.l.bf16 %v3361
        %v3394 = vunpack.c.l.bf16 %v3362
        %v3395 = vunpack.c.l.bf16 %v3363
        %v3396 = vunpack.c.l.bf16 %v3364
        %v3397 = vunpack.c.l.bf16 %v3365
        %v3398 = vunpack.c.l.bf16 %v3366
        %v3399 = vunpack.c.l.bf16 %v3367
        %v3400 = vunpack.c.l.bf16 %v3368
        %v3401 = vunpack.c.l.bf16 %v3369
        %v3402 = vunpack.c.l.bf16 %v3370
        %v3403 = vunpack.c.l.bf16 %v3371
        %v3404 = vunpack.c.l.bf16 %v3372
        %v3405 = vunpack.c.l.bf16 %v3373
        %v3406 = vld [vmem:[%s23] sm:$0x1]
        %v3408 = vperm.slane %v3406, 0
        %3410 = vmatpush.msra.mxu0 %v3389
        %3411 = vmatpush.msra.mxu0 %v3388
        %3412 = vmatpush.msra.mxu0 %v3387
        %3413 = vmatpush.msra.mxu0 %v3386
        %3414 = vmatpush.msra.mxu0 %v3385
        %3415 = vmatpush.msra.mxu0 %v3384
        %3416 = vmatpush.msra.mxu0 %v3383
        %3417 = vmatpush.msra.mxu0 %v3382
        %3418 = vmatpush.msra.mxu0 %v3381
        %3419 = vmatpush.msra.mxu0 %v3380
        %3420 = vmatpush.msra.mxu0 %v3379
        %3421 = vmatpush.msra.mxu0 %v3378
        %3422 = vmatpush.msra.mxu0 %v3377
        %3423 = vmatpush.msra.mxu0 %v3376
        %3424 = vmatpush.msra.mxu0 %v3375
        %3425 = vmatpush.msra.mxu0 %v3374
        %3426 = vmatmul.f32.gmra.mxu0 %v3326
        %v3427 = vpop.f32.mrf.mxu0
        %v3428 = vadd.f32 %v3408, %v3427
        %3429 = vmatmul.f32.gmra.mxu0 %v3328
        %v3430 = vpop.f32.mrf.mxu0
        %v3431 = vadd.f32 %v3408, %v3430
        %3432 = vmatmul.f32.gmra.mxu0 %v3330
        %v3433 = vpop.f32.mrf.mxu0
        %v3434 = vadd.f32 %v3408, %v3433
        %3435 = vmatmul.f32.gmra.mxu0 %v3332
        %v3436 = vpop.f32.mrf.mxu0
        %v3437 = vadd.f32 %v3408, %v3436
        %3438 = vmatmul.f32.gmra.mxu0 %v3334
        %v3439 = vpop.f32.mrf.mxu0
        %v3440 = vadd.f32 %v3408, %v3439
        %3441 = vmatmul.f32.gmra.mxu0 %v3336
        %v3442 = vpop.f32.mrf.mxu0
        %v3443 = vadd.f32 %v3408, %v3442
        %3444 = vmatmul.f32.gmra.mxu0 %v3338
        %v3445 = vpop.f32.mrf.mxu0
        %v3446 = vadd.f32 %v3408, %v3445
        %3447 = vmatmul.f32.gmra.mxu0 %v3340
        %v3448 = vpop.f32.mrf.mxu0
        %v3449 = vadd.f32 %v3408, %v3448
        %3450 = vdwg.mxu0
        %3451 = vmatpush.msra.mxu0 %v3405
        %3452 = vmatpush.msra.mxu0 %v3404
        %3453 = vmatpush.msra.mxu0 %v3403
        %3454 = vmatpush.msra.mxu0 %v3402
        %3455 = vmatpush.msra.mxu0 %v3401
        %3456 = vmatpush.msra.mxu0 %v3400
        %3457 = vmatpush.msra.mxu0 %v3399
        %3458 = vmatpush.msra.mxu0 %v3398
        %3459 = vmatpush.msra.mxu0 %v3397
        %3460 = vmatpush.msra.mxu0 %v3396
        %3461 = vmatpush.msra.mxu0 %v3395
        %3462 = vmatpush.msra.mxu0 %v3394
        %3463 = vmatpush.msra.mxu0 %v3393
        %3464 = vmatpush.msra.mxu0 %v3392
        %3465 = vmatpush.msra.mxu0 %v3391
        %3466 = vmatpush.msra.mxu0 %v3390
        %3467 = vmatmul.f32.gmra.mxu0 %v3327
        %v3468 = vpop.f32.mrf.mxu0
        %v3469 = vadd.f32 %v3428, %v3468
        %3470 = vmatmul.f32.gmra.mxu0 %v3329
        %v3471 = vpop.f32.mrf.mxu0
        %v3472 = vadd.f32 %v3431, %v3471
        %3473 = vmatmul.f32.gmra.mxu0 %v3331
        %v3474 = vpop.f32.mrf.mxu0
        %v3475 = vadd.f32 %v3434, %v3474
        %3476 = vmatmul.f32.gmra.mxu0 %v3333
        %v3477 = vpop.f32.mrf.mxu0
        %v3478 = vadd.f32 %v3437, %v3477
        %3479 = vmatmul.f32.gmra.mxu0 %v3335
        %v3480 = vpop.f32.mrf.mxu0
        %v3481 = vadd.f32 %v3440, %v3480
        %3482 = vmatmul.f32.gmra.mxu0 %v3337
        %v3483 = vpop.f32.mrf.mxu0
        %v3484 = vadd.f32 %v3443, %v3483
        %3485 = vmatmul.f32.gmra.mxu0 %v3339
        %v3486 = vpop.f32.mrf.mxu0
        %v3487 = vadd.f32 %v3446, %v3486
        %3488 = vmatmul.f32.gmra.mxu0 %v3341
        %v3489 = vpop.f32.mrf.mxu0
        %v3490 = vadd.f32 %v3449, %v3489
        %3491 = vdwg.mxu0
        %v3492 = vld [vmem:[#allocation21] sm:$0xff]
        %v3493 = vld [vmem:[#allocation21 + $0x8] sm:$0xff]
        %v3494 = vld [vmem:[#allocation21 + $0x10] sm:$0xff]
        %v3495 = vld [vmem:[#allocation21 + $0x18] sm:$0xff]
        %v3496 = vld [vmem:[#allocation21 + $0x20] sm:$0xff]
        %v3497 = vld [vmem:[#allocation21 + $0x28] sm:$0xff]
        %v3498 = vld [vmem:[#allocation21 + $0x30] sm:$0xff]
        %v3499 = vld [vmem:[#allocation21 + $0x38] sm:$0xff]
        %v3500 = vld [vmem:[#allocation21 + $0x40] sm:$0xff]
        %v3501 = vld [vmem:[#allocation21 + $0x48] sm:$0xff]
        %v3502 = vld [vmem:[#allocation21 + $0x50] sm:$0xff]
        %v3503 = vld [vmem:[#allocation21 + $0x58] sm:$0xff]
        %v3504 = vld [vmem:[#allocation21 + $0x60] sm:$0xff]
        %v3505 = vld [vmem:[#allocation21 + $0x68] sm:$0xff]
        %v3506 = vld [vmem:[#allocation21 + $0x70] sm:$0xff]
        %v3507 = vld [vmem:[#allocation21 + $0x78] sm:$0xff]
        %3508 = vmatpush.msra.mxu0 %v3507
        %3509 = vmatpush.msra.mxu0 %v3506
        %3510 = vmatpush.msra.mxu0 %v3505
        %3511 = vmatpush.msra.mxu0 %v3504
        %3512 = vmatpush.msra.mxu0 %v3503
        %3513 = vmatpush.msra.mxu0 %v3502
        %3514 = vmatpush.msra.mxu0 %v3501
        %3515 = vmatpush.msra.mxu0 %v3500
        %3516 = vmatpush.msra.mxu0 %v3499
        %3517 = vmatpush.msra.mxu0 %v3498
        %3518 = vmatpush.msra.mxu0 %v3497
        %3519 = vmatpush.msra.mxu0 %v3496
        %3520 = vmatpush.msra.mxu0 %v3495
        %3521 = vmatpush.msra.mxu0 %v3494
        %3522 = vmatpush.msra.mxu0 %v3493
        %3523 = vmatpush.msra.mxu0 %v3492
        %3524 = vmatmul.f32.gmra.mxu0 %v2784
        %v3525 = vpop.f32.mrf.mxu0
        %v3526 = vadd.f32 0.0, %v3525
        %3527 = vmatmul.f32.gmra.mxu0 %v2785
        %v3528 = vpop.f32.mrf.mxu0
        %v3529 = vadd.f32 0.0, %v3528
        %3530 = vmatmul.f32.gmra.mxu0 %v2786
        %v3531 = vpop.f32.mrf.mxu0
        %v3532 = vadd.f32 0.0, %v3531
        %3533 = vmatmul.f32.gmra.mxu0 %v2787
        %v3534 = vpop.f32.mrf.mxu0
        %v3535 = vadd.f32 0.0, %v3534
        %3536 = vmatmul.f32.gmra.mxu0 %v2788
        %v3537 = vpop.f32.mrf.mxu0
        %v3538 = vadd.f32 0.0, %v3537
        %3539 = vmatmul.f32.gmra.mxu0 %v2789
        %v3540 = vpop.f32.mrf.mxu0
        %v3541 = vadd.f32 0.0, %v3540
        %3542 = vmatmul.f32.gmra.mxu0 %v2790
        %v3543 = vpop.f32.mrf.mxu0
        %v3544 = vadd.f32 0.0, %v3543
        %3545 = vmatmul.f32.gmra.mxu0 %v2791
        %v3546 = vpop.f32.mrf.mxu0
        %v3547 = vadd.f32 0.0, %v3546
        %3548 = vdwg.mxu0
        %v3549 = vadd.f32 %v3469, %v3526
        %v3550 = vadd.f32 %v3472, %v3529
        %v3551 = vadd.f32 %v3475, %v3532
        %v3552 = vadd.f32 %v3478, %v3535
        %v3553 = vadd.f32 %v3481, %v3538
        %v3554 = vadd.f32 %v3484, %v3541
        %v3555 = vadd.f32 %v3487, %v3544
        %v3556 = vadd.f32 %v3490, %v3547
        %3557 = vst [vmem:[%s1015] sm:$0xff] %v3549
        %3558 = vst [vmem:[%s1015 + $0x8] sm:$0xff] %v3550
        %3559 = vst [vmem:[%s1015 + $0x10] sm:$0xff] %v3551
        %3560 = vst [vmem:[%s1015 + $0x18] sm:$0xff] %v3552
        %3561 = vst [vmem:[%s1015 + $0x20] sm:$0xff] %v3553
        %3562 = vst [vmem:[%s1015 + $0x28] sm:$0xff] %v3554
        %3563 = vst [vmem:[%s1015 + $0x30] sm:$0xff] %v3555
        %3564 = vst [vmem:[%s1015 + $0x38] sm:$0xff] %v3556
        %p3565 = scmp.lt.s32.totalorder %s45, 1
        %s3566 = scalar_select %p3565, %s45, 1
        %s3567 = scalar_lea.vmem %s25, %s3566
        %p3568 = scmp.lt.s32.totalorder %s45, 1
        %s3569 = scalar_select %p3568, %s45, 1
        %s3570 = smul.addr %s3569, 8
        %s3571 = smul.addr %s3570, 8
        %s3572 = scalar_lea.vmem %s26, %s3571
        // Predicated region
        $region173: #{pcn_forward_pallas.1} parent=119 // pred_check
          %p3573 = pneg %p593
        $region174: #{pcn_forward_pallas.1} parent=119 // pred_check_branch
          %3575 = sbr.rel (%p3573) target = $region176
        $region175: #{pcn_forward_pallas.1} parent=119 // pred_region
          _
        $region176: #{pcn_forward_pallas.1} parent=119 // pred_fallthru
          _
        // Predicated region
        $region177: #{pcn_forward_pallas.1} parent=119 // pred_check
          %p3576 = pneg %p619
        $region178: #{pcn_forward_pallas.1} parent=119 // pred_check_branch
          %3578 = sbr.rel (%p3576) target = $region180
        $region179: #{pcn_forward_pallas.1} parent=119 // pred_region
          _
        $region180: #{pcn_forward_pallas.1} parent=119 // pred_fallthru
          _
      $region120: #{pcn_forward_pallas.1} parent=5 // pred_fallthru
        _
      %p3579 = scmp.le.s32.totalorder 2, %s40
      // Predicated region
      $region181: #{pcn_forward_pallas.1} parent=5 // pred_check
        %p3580 = pneg %p3579
      $region182: #{pcn_forward_pallas.1} parent=5 // pred_check_branch
        %3582 = sbr.rel (%p3580) target = $region184
      $region183: #{pcn_forward_pallas.1} parent=5 // pred_region
        %s3583 = ssub.s32 %s40, 2
        // Predicated region
        $region185: #{pcn_forward_pallas.1} parent=183 // pred_check
          %p3584 = pneg %p599
        $region186: #{pcn_forward_pallas.1} parent=183 // pred_check_branch
          %3586 = sbr.rel (%p3584) target = $region188
        $region187: #{pcn_forward_pallas.1} parent=183 // pred_region
          %p3587 = scmp.lt.s32.totalorder %s46, 1
          %s3588 = scalar_select %p3587, %s46, 1
          %s3589 = scalar_lea.vmem %s25, %s3588
        $region188: #{pcn_forward_pallas.1} parent=183 // pred_fallthru
          _
        // Predicated region
        $region189: #{pcn_forward_pallas.1} parent=183 // pred_check
          %p3590 = pneg %p625
        $region190: #{pcn_forward_pallas.1} parent=183 // pred_check_branch
          %3592 = sbr.rel (%p3590) target = $region192
        $region191: #{pcn_forward_pallas.1} parent=183 // pred_region
          %p3593 = scmp.lt.s32.totalorder %s46, 1
          %s3594 = scalar_select %p3593, %s46, 1
          %s3595 = smul.addr %s3594, 8
          %s3596 = smul.addr %s3595, 8
          %s3597 = scalar_lea.vmem %s26, %s3596
        $region192: #{pcn_forward_pallas.1} parent=183 // pred_fallthru
          _
      $region184: #{pcn_forward_pallas.1} parent=5 // pred_fallthru
        _
    $region6: #{pcn_forward_pallas.1} parent=1 // loop_footer
      %s44 = sadd.s32 1, %s40
    $region7: #{pcn_forward_pallas.1} parent=1 // loop_footer_branch
      %39 = sbr.rel target = $region3
    $region8: #{pcn_forward_pallas.1} parent=1 // loop_exit
      _
    %3598 = vsyncpa [#allocation3], 1
    %s3599 = scalar_lea.sflag [#allocation3], 1
    %3600 = vsyncpa %s3599, 1
    %3601 = vsyncpa [#allocation5], 1
    %3602 = vsyncpa [#allocation8], 1
    %3603 = vsyncpa [#allocation11], 1
    %3604 = vsyncpa [#allocation14], 1
    %3605 = vsyncpa [#allocation17], 1
    %3606 = vsyncpa [#allocation20], 1

</llo_original>
